<compile_context>
chip_gen: v6e
topology: v6e:2x2x1
jax: 0.10.0
libtpu: 0.0.40
codegen_flags: <defaults>
</compile_context>

<pallas_src>
import functools

import numpy as np
import jax
import jax.numpy as jnp
from jax import lax
from jax.experimental import pallas as pl
from jax.experimental.pallas import tpu as pltpu


SQRT_HALF = 0.7071067811865476
NEG_BIG = -1e9


# ----------------------------- in-kernel helpers ----------------------------

def _ln(x, g, b, eps=1e-12):
    mean = jnp.mean(x, axis=-1, keepdims=True)
    var = jnp.mean(jnp.square(x - mean), axis=-1, keepdims=True)
    return (x - mean) * lax.rsqrt(var + eps) * g + b


def _gelu(x):  # exact (erf) GELU as in BERT
    return 0.5 * x * (1.0 + lax.erf(x * SQRT_HALF))


# ------------------------ kernel 1: embeddings + LN --------------------------

def _embed_ln_kernel(we_ref, pe_ref, te_ref, g_ref, b_ref, o_ref):
    x = (we_ref[...].astype(jnp.float32)
         + pe_ref[...].astype(jnp.float32)
         + te_ref[...].astype(jnp.float32))
    o_ref[...] = _ln(x, g_ref[...], b_ref[...]).astype(o_ref.dtype)


def embed_layernorm(word_rows, pos_emb, type_row, gamma, beta, batch, seq):
    H = word_rows.shape[1]
    return pl.pallas_call(
        _embed_ln_kernel,
        out_shape=jax.ShapeDtypeStruct((batch * seq, H), jnp.float32),
        grid=(batch,),
        in_specs=[
            pl.BlockSpec((seq, H), lambda b: (b, 0)),
            pl.BlockSpec((seq, H), lambda b: (0, 0)),
            pl.BlockSpec((1, H), lambda b: (0, 0)),
            pl.BlockSpec((1, H), lambda b: (0, 0)),
            pl.BlockSpec((1, H), lambda b: (0, 0)),
        ],
        out_specs=pl.BlockSpec((seq, H), lambda b: (b, 0)),
        compiler_params=pltpu.CompilerParams(dimension_semantics=("parallel",)),
    )(word_rows, pos_emb, type_row, gamma.reshape(1, H), beta.reshape(1, H))


# -------------------- kernel 2: fused BERT encoder layer ---------------------

def _encoder_layer_kernel(h_ref, kb_ref, wqkvh_ref, bqkvh_ref, woh_ref, bo_ref,
                          ln1g_ref, ln1b_ref, w1_ref, b1_ref, w2_ref, b2_ref,
                          ln2g_ref, ln2b_ref, o_ref, *, num_heads, head_dim, scale):
    h = h_ref[...].astype(jnp.float32)            # (S, H) — this batch's sequence
    kb = kb_ref[0]                                # (1, S) additive key-mask bias

    woh = None  # per-head output-proj slabs are read lazily below
    attn = jnp.zeros(h.shape, jnp.float32)
    for hh in range(num_heads):                   # static unroll; in-kernel head split
        q = jnp.dot(h, wqkvh_ref[hh], preferred_element_type=jnp.float32) + bqkvh_ref[hh]
        k = jnp.dot(h, wqkvh_ref[num_heads + hh],
                    preferred_element_type=jnp.float32) + bqkvh_ref[num_heads + hh]
        v = jnp.dot(h, wqkvh_ref[2 * num_heads + hh],
                    preferred_element_type=jnp.float32) + bqkvh_ref[2 * num_heads + hh]
        # scores: (S, S) = q @ k^T  (contraction over head_dim)
        s = lax.dot_general(q, k, (((1,), (1,)), ((), ())),
                            preferred_element_type=jnp.float32) * scale
        s = s + kb                                # mask broadcast in-register
        m = jnp.max(s, axis=-1, keepdims=True)
        p = jnp.exp(s - m)
        p = p * pl.reciprocal(jnp.sum(p, axis=-1, keepdims=True), approx=True)
        ctx = jnp.dot(p, v, preferred_element_type=jnp.float32)       # (S, dH)
        attn = attn + jnp.dot(ctx, woh_ref[hh],
                              preferred_element_type=jnp.float32)     # merge heads
    attn = attn + bo_ref[...]

    # residual + LayerNorm fused
    h1 = _ln(h + attn, ln1g_ref[...], ln1b_ref[...])
    inter = _gelu(jnp.dot(h1, w1_ref[...], preferred_element_type=jnp.float32)
                  + b1_ref[...])
    ffn = jnp.dot(inter, w2_ref[...], preferred_element_type=jnp.float32) + b2_ref[...]
    o_ref[...] = _ln(h1 + ffn, ln2g_ref[...], ln2b_ref[...]).astype(o_ref.dtype)


def encoder_layer(h, kbias3, lyr, batch, seq, num_heads, head_dim):
    BS, H = h.shape
    I = lyr["w1"].shape[1]
    kern = functools.partial(_encoder_layer_kernel, num_heads=num_heads,
                             head_dim=head_dim, scale=1.0 / float(np.sqrt(head_dim)))
    return pl.pallas_call(
        kern,
        out_shape=jax.ShapeDtypeStruct((BS, H), jnp.float32),
        grid=(batch,),
        in_specs=[
            pl.BlockSpec((seq, H), lambda b: (b, 0)),                       # h (this batch)
            pl.BlockSpec((1, 1, seq), lambda b: (b, 0, 0)),                 # key bias
            pl.BlockSpec((3 * num_heads, H, head_dim), lambda b: (0, 0, 0)),  # fused QKV weights (per head)
            pl.BlockSpec((3 * num_heads, 1, head_dim), lambda b: (0, 0, 0)),  # fused QKV biases
            pl.BlockSpec((num_heads, head_dim, H), lambda b: (0, 0, 0)),    # output proj (per head)
            pl.BlockSpec((1, H), lambda b: (0, 0)),                         # bo
            pl.BlockSpec((1, H), lambda b: (0, 0)),                         # ln1 gamma
            pl.BlockSpec((1, H), lambda b: (0, 0)),                         # ln1 beta
            pl.BlockSpec((H, I), lambda b: (0, 0)),                         # w1
            pl.BlockSpec((1, I), lambda b: (0, 0)),                         # b1
            pl.BlockSpec((I, H), lambda b: (0, 0)),                         # w2
            pl.BlockSpec((1, H), lambda b: (0, 0)),                         # b2
            pl.BlockSpec((1, H), lambda b: (0, 0)),                         # ln2 gamma
            pl.BlockSpec((1, H), lambda b: (0, 0)),                         # ln2 beta
        ],
        out_specs=pl.BlockSpec((seq, H), lambda b: (b, 0)),
        compiler_params=pltpu.CompilerParams(dimension_semantics=("parallel",)),
    )(h, kbias3,
      lyr["w_qkvh"], lyr["b_qkvh"], lyr["wo_h"], lyr["bo"].reshape(1, H),
      lyr["ln1_g"].reshape(1, H), lyr["ln1_b"].reshape(1, H),
      lyr["w1"], lyr["b1"].reshape(1, I),
      lyr["w2"], lyr["b2"].reshape(1, H),
      lyr["ln2_g"].reshape(1, H), lyr["ln2_b"].reshape(1, H))


# --------- kernel 3: pooler(tanh) + classifier + weighted CE loss ------------

def _head_loss_kernel(cls_ref, pw_ref, pb_ref, cw_ref, cb_ref, cew_ref, labels_ref,
                      logits_ref, loss_ref, *, batch, num_labels_pad):
    x = cls_ref[...].astype(jnp.float32)                                   # (B, H)
    pooled = jnp.tanh(jnp.dot(x, pw_ref[...],
                              preferred_element_type=jnp.float32) + pb_ref[...])
    # self.dropout(pooled_output) is identity in eval mode.
    logits = jnp.dot(pooled, cw_ref[...],
                     preferred_element_type=jnp.float32) + cb_ref[...]     # (B, Lpad)
    logits_ref[...] = logits.astype(logits_ref.dtype)

    m = jnp.max(logits, axis=-1, keepdims=True)
    lse = jnp.log(jnp.sum(jnp.exp(logits - m), axis=-1, keepdims=True)) + m  # (B, 1)

    colv = lax.broadcasted_iota(jnp.int32, (1, num_labels_pad), 1)
    cew = cew_ref[...]                                                     # (1, Lpad), zero-padded
    numer = jnp.zeros((1, 1), jnp.float32)
    denom = jnp.zeros((1, 1), jnp.float32)
    for b in range(batch):                                                 # static unroll
        onehot = (colv == labels_ref[b]).astype(jnp.float32)               # (1, Lpad)
        picked = jnp.sum(onehot * logits[b:b + 1, :], axis=-1, keepdims=True)
        wb = jnp.sum(onehot * cew, axis=-1, keepdims=True)                 # weight[y_b]
        numer = numer + wb * (lse[b:b + 1, :] - picked)
        denom = denom + wb
    loss_ref[...] = numer / denom


def pooled_classifier_wce(cls_tokens, pool_w, pool_b, cls_w, cls_b, ce_weight,
                          labels, num_labels):
    B, H = cls_tokens.shape
    L = num_labels
    Lpad = 128  # lane-dense classifier / loss
    cw = jnp.pad(cls_w, ((0, 0), (0, Lpad - L)))
    cb = jnp.pad(cls_b, (0, Lpad - L), constant_values=NEG_BIG)  # padded classes never win
    cew = jnp.pad(ce_weight, (0, Lpad - L)).reshape(1, Lpad)

    logits_pad, loss = pl.pallas_call(
        functools.partial(_head_loss_kernel, batch=B, num_labels_pad=Lpad),
        out_shape=(jax.ShapeDtypeStruct((B, Lpad), jnp.float32),
                   jax.ShapeDtypeStruct((1, 1), jnp.float32)),
        in_specs=[
            pl.BlockSpec((B, H), lambda: (0, 0)),
            pl.BlockSpec((H, H), lambda: (0, 0)),
            pl.BlockSpec((1, H), lambda: (0, 0)),
            pl.BlockSpec((H, Lpad), lambda: (0, 0)),
            pl.BlockSpec((1, Lpad), lambda: (0, 0)),
            pl.BlockSpec((1, Lpad), lambda: (0, 0)),
            pl.BlockSpec(memory_space=pltpu.MemorySpace.SMEM),
        ],
        out_specs=(pl.BlockSpec((B, Lpad), lambda: (0, 0)),
                   pl.BlockSpec((1, 1), lambda: (0, 0))),
    )(cls_tokens, pool_w, pool_b.reshape(1, H), cw, cb.reshape(1, Lpad), cew,
      labels.astype(jnp.int32))
    return logits_pad[:, :L], loss[0, 0]


# ------------------------------- parameters ---------------------------------

CFG = dict(
    vocab=100, hidden=32, heads=2, layers=2, intermediate=64,
    max_pos=16, type_vocab=2, num_labels=13,
)


def init_params(key, cfg):
    H, I, nH = cfg["hidden"], cfg["intermediate"], cfg["heads"]
    dH = H // nH

    def nrm(k, shape, scale=0.02):
        return scale * jax.random.normal(k, shape, dtype=jnp.float32)

    keys = iter(jax.random.split(key, 64))
    params = {
        "word_emb": nrm(next(keys), (cfg["vocab"], H)),
        "pos_emb": nrm(next(keys), (cfg["max_pos"], H)),
        "type_emb": nrm(next(keys), (cfg["type_vocab"], H)),
        "emb_ln_g": jnp.ones((H,), jnp.float32),
        "emb_ln_b": jnp.zeros((H,), jnp.float32),
        "pool_w": nrm(next(keys), (H, H)),
        "pool_b": jnp.zeros((H,), jnp.float32),
        "cls_w": nrm(next(keys), (H, cfg["num_labels"])),
        "cls_b": jnp.zeros((cfg["num_labels"],), jnp.float32),
        "layers": [],
    }

    def per_head(w):  # (H, H) -> (nH, H, dH), matching reshape(B,S,nH,dH) head split
        return jnp.transpose(w.reshape(H, nH, dH), (1, 0, 2))

    for _ in range(cfg["layers"]):
        wq, wk, wv = nrm(next(keys), (H, H)), nrm(next(keys), (H, H)), nrm(next(keys), (H, H))
        wo = nrm(next(keys), (H, H))
        params["layers"].append({
            # fused QKV weights, arranged per-head on a leading dim: [q0..qh, k0..kh, v0..vh]
            "w_qkvh": jnp.concatenate([per_head(wq), per_head(wk), per_head(wv)], axis=0),
            "b_qkvh": jnp.zeros((3 * nH, 1, dH), jnp.float32),
            "wo_h": wo.reshape(nH, dH, H),
            "bo": jnp.zeros((H,), jnp.float32),
            "ln1_g": jnp.ones((H,), jnp.float32), "ln1_b": jnp.zeros((H,), jnp.float32),
            "w1": nrm(next(keys), (H, I)), "b1": jnp.zeros((I,), jnp.float32),
            "w2": nrm(next(keys), (I, H)), "b2": jnp.zeros((H,), jnp.float32),
            "ln2_g": jnp.ones((H,), jnp.float32), "ln2_b": jnp.zeros((H,), jnp.float32),
        })

    # class weights exactly as in the PyTorch module
    class_weight = np.array(
        [35, 402, 392, 57, 71, 1840, 164, 114, 199, 337, 217, 124, 44],
        dtype=np.float64) / 3996.0
    inverse_weight = (1.0 - class_weight) / (cfg["num_labels"] - 1)
    params["ce_weight"] = jnp.asarray(inverse_weight, dtype=jnp.float32)
    return params


# --------------------------------- forward ----------------------------------

def bert_with_weight_ce_forward(params, input_ids, attention_mask, labels, cfg=CFG):
    B, S = input_ids.shape
    H, nH = cfg["hidden"], cfg["heads"]
    dH = H // nH

    # Embedding-table gather is XLA glue; sum + LayerNorm are fused in a kernel.
    word_rows = params["word_emb"][input_ids].reshape(B * S, H)
    h = embed_layernorm(word_rows, params["pos_emb"][:S], params["type_emb"][0:1],
                        params["emb_ln_g"], params["emb_ln_b"], B, S)

    # Additive key-mask bias [B, 1, S]; head/query broadcast happens in-kernel.
    kbias3 = ((1.0 - attention_mask.astype(jnp.float32)) * NEG_BIG).reshape(B, 1, S)

    for lyr in params["layers"]:
        h = encoder_layer(h, kbias3, lyr, B, S, nH, dH)

    cls_tokens = h.reshape(B, S, H)[:, 0, :]          # CLS hidden state per sequence
    logits, loss = pooled_classifier_wce(
        cls_tokens, params["pool_w"], params["pool_b"],
        params["cls_w"], params["cls_b"], params["ce_weight"],
        labels.reshape(-1), cfg["num_labels"])
    return loss, logits


# ----------------------------------- main ------------------------------------

if __name__ == "__main__":
    B, S = 2, 8
    key = jax.random.PRNGKey(0)
    k_par, k_ids, k_lab = jax.random.split(key, 3)

    params = init_params(k_par, CFG)
    input_ids = jax.random.randint(k_ids, (B, S), 0, CFG["vocab"], dtype=jnp.int32)
    attention_mask = jnp.ones((B, S), dtype=jnp.int32)
    labels = jax.random.randint(k_lab, (B,), 0, CFG["num_labels"], dtype=jnp.int32)

    fwd = jax.jit(functools.partial(bert_with_weight_ce_forward, cfg=CFG))
    loss, logits = fwd(params, input_ids, attention_mask, labels)
    jax.block_until_ready((loss, logits))
    assert logits.shape == (B, CFG["num_labels"])
    assert bool(jnp.isfinite(loss))
    print("KERNEL_OK")
</pallas_src>

<mosaic_0001>
module attributes {stable_mosaic.version = 11 : i64} {
  func.func @_embed_ln_kernel(%arg0: i32, %arg1: memref<8x32xf32, #tpu.memory_space<vmem>>, %arg2: memref<8x32xf32, #tpu.memory_space<vmem>>, %arg3: memref<1x32xf32, #tpu.memory_space<vmem>>, %arg4: memref<1x32xf32, #tpu.memory_space<vmem>>, %arg5: memref<1x32xf32, #tpu.memory_space<vmem>>, %arg6: memref<8x32xf32, #tpu.memory_space<vmem>>) attributes {dimension_semantics = [#tpu.dimension_semantics<parallel>], iteration_bounds = array<i64: 2>, scalar_prefetch = 0 : i64, scratch_operands = 0 : i64, tpu.core_type = #tpu.core_type<tc>, window_params = [{transform_indices = @transform_0, window_bounds = array<i64: 8, 32>}, {pipeline_mode = #tpu.pipeline_mode<synchronous>, transform_indices = @transform_1, window_bounds = array<i64: 8, 32>}, {pipeline_mode = #tpu.pipeline_mode<synchronous>, transform_indices = @transform_2, window_bounds = array<i64: 1, 32>}, {pipeline_mode = #tpu.pipeline_mode<synchronous>, transform_indices = @transform_3, window_bounds = array<i64: 1, 32>}, {pipeline_mode = #tpu.pipeline_mode<synchronous>, transform_indices = @transform_4, window_bounds = array<i64: 1, 32>}, {transform_indices = @transform_5, window_bounds = array<i64: 8, 32>}]} {
    %c0 = arith.constant 0 : index
    %c0_0 = arith.constant 0 : index
    %0 = vector.load %arg1[%c0, %c0_0] : memref<8x32xf32, #tpu.memory_space<vmem>>, vector<8x32xf32>
    %c0_1 = arith.constant 0 : index
    %c0_2 = arith.constant 0 : index
    %1 = vector.load %arg2[%c0_1, %c0_2] : memref<8x32xf32, #tpu.memory_space<vmem>>, vector<8x32xf32>
    %2 = arith.addf %0, %1 : vector<8x32xf32>
    %c0_3 = arith.constant 0 : index
    %c0_4 = arith.constant 0 : index
    %3 = vector.load %arg3[%c0_3, %c0_4] : memref<1x32xf32, #tpu.memory_space<vmem>>, vector<1x32xf32>
    %4 = vector.broadcast %3 : vector<1x32xf32> to vector<8x32xf32>
    %5 = arith.addf %2, %4 : vector<8x32xf32>
    %c0_5 = arith.constant 0 : index
    %c0_6 = arith.constant 0 : index
    %6 = vector.load %arg4[%c0_5, %c0_6] : memref<1x32xf32, #tpu.memory_space<vmem>>, vector<1x32xf32>
    %c0_7 = arith.constant 0 : index
    %c0_8 = arith.constant 0 : index
    %7 = vector.load %arg5[%c0_7, %c0_8] : memref<1x32xf32, #tpu.memory_space<vmem>>, vector<1x32xf32>
    %cst = arith.constant dense<0.000000e+00> : vector<8xf32>
    %8 = vector.multi_reduction <add>, %5, %cst [1] : vector<8x32xf32> to vector<8xf32>
    %9 = vector.shape_cast %8 : vector<8xf32> to vector<8x1xf32>
    %cst_9 = arith.constant 3.200000e+01 : f32
    %10 = vector.broadcast %cst_9 : f32 to vector<8x1xf32>
    %11 = arith.divf %9, %10 : vector<8x1xf32>
    %12 = vector.broadcast %11 : vector<8x1xf32> to vector<8x32xf32>
    %13 = arith.subf %5, %12 : vector<8x32xf32>
    %14 = arith.mulf %13, %13 : vector<8x32xf32>
    %cst_10 = arith.constant dense<0.000000e+00> : vector<8xf32>
    %15 = vector.multi_reduction <add>, %14, %cst_10 [1] : vector<8x32xf32> to vector<8xf32>
    %16 = vector.shape_cast %15 : vector<8xf32> to vector<8x1xf32>
    %cst_11 = arith.constant 3.200000e+01 : f32
    %17 = vector.broadcast %cst_11 : f32 to vector<8x1xf32>
    %18 = arith.divf %16, %17 : vector<8x1xf32>
    %19 = vector.broadcast %11 : vector<8x1xf32> to vector<8x32xf32>
    %20 = arith.subf %5, %19 : vector<8x32xf32>
    %cst_12 = arith.constant 9.99999996E-13 : f32
    %21 = vector.broadcast %cst_12 : f32 to vector<8x1xf32>
    %22 = arith.addf %18, %21 : vector<8x1xf32>
    %23 = math.rsqrt %22 : vector<8x1xf32>
    %24 = vector.broadcast %23 : vector<8x1xf32> to vector<8x32xf32>
    %25 = arith.mulf %20, %24 : vector<8x32xf32>
    %26 = vector.broadcast %6 : vector<1x32xf32> to vector<8x32xf32>
    %27 = arith.mulf %25, %26 : vector<8x32xf32>
    %28 = vector.broadcast %7 : vector<1x32xf32> to vector<8x32xf32>
    %29 = arith.addf %27, %28 : vector<8x32xf32>
    %c0_13 = arith.constant 0 : index
    %c0_14 = arith.constant 0 : index
    %30 = vector.load %arg6[%c0_13, %c0_14] : memref<8x32xf32, #tpu.memory_space<vmem>>, vector<8x32xf32>
    tpu.vector_store %arg6[%c0_13, %c0_14], %29 {strides = array<i32>} : memref<8x32xf32, #tpu.memory_space<vmem>>, vector<8x32xf32>,
    return
  }
  func.func @transform_0(%arg0: i32) -> (i32, i32) {
    %c0_i32 = arith.constant 0 : i32
    %c0_i32_0 = arith.constant 0 : i32
    return %arg0, %c0_i32 : i32, i32
  }
  func.func @transform_1(%arg0: i32) -> (i32, i32) {
    %c0_i32 = arith.constant 0 : i32
    %c0_i32_0 = arith.constant 0 : i32
    %c0_i32_1 = arith.constant 0 : i32
    return %c0_i32, %c0_i32_0 : i32, i32
  }
  func.func @transform_2(%arg0: i32) -> (i32, i32) {
    %c0_i32 = arith.constant 0 : i32
    %c0_i32_0 = arith.constant 0 : i32
    %c0_i32_1 = arith.constant 0 : i32
    return %c0_i32, %c0_i32_0 : i32, i32
  }
  func.func @transform_3(%arg0: i32) -> (i32, i32) {
    %c0_i32 = arith.constant 0 : i32
    %c0_i32_0 = arith.constant 0 : i32
    %c0_i32_1 = arith.constant 0 : i32
    return %c0_i32, %c0_i32_0 : i32, i32
  }
  func.func @transform_4(%arg0: i32) -> (i32, i32) {
    %c0_i32 = arith.constant 0 : i32
    %c0_i32_0 = arith.constant 0 : i32
    %c0_i32_1 = arith.constant 0 : i32
    return %c0_i32, %c0_i32_0 : i32, i32
  }
  func.func @transform_5(%arg0: i32) -> (i32, i32) {
    %c0_i32 = arith.constant 0 : i32
    %c0_i32_0 = arith.constant 0 : i32
    return %arg0, %c0_i32 : i32, i32
  }
}

module attributes {stable_mosaic.version = 11 : i64} {
  func.func @_head_loss_kernel(%arg0: memref<2x32xf32, #tpu.memory_space<vmem>>, %arg1: memref<32x32xf32, #tpu.memory_space<vmem>>, %arg2: memref<1x32xf32, #tpu.memory_space<vmem>>, %arg3: memref<32x128xf32, #tpu.memory_space<vmem>>, %arg4: memref<1x128xf32, #tpu.memory_space<vmem>>, %arg5: memref<1x128xf32, #tpu.memory_space<vmem>>, %arg6: memref<2xi32, #tpu.memory_space<smem>>, %arg7: memref<2x128xf32, #tpu.memory_space<vmem>>, %arg8: memref<1x1xf32, #tpu.memory_space<vmem>>) attributes {dimension_semantics = [], scalar_prefetch = 0 : i64, scratch_operands = 0 : i64, tpu.core_type = #tpu.core_type<tc>} {
    %c0 = arith.constant 0 : index
    %c0_0 = arith.constant 0 : index
    %0 = vector.load %arg0[%c0, %c0_0] : memref<2x32xf32, #tpu.memory_space<vmem>>, vector<2x32xf32>
    %c0_1 = arith.constant 0 : index
    %c0_2 = arith.constant 0 : index
    %1 = vector.load %arg1[%c0_1, %c0_2] : memref<32x32xf32, #tpu.memory_space<vmem>>, vector<32x32xf32>
    %cst = arith.constant dense<0.000000e+00> : vector<2x32xf32>
    %2 = tpu.matmul %0, %1, %cst {dimension_numbers = #tpu.dot_dimension_numbers<[1], [0], [0], [1], [0, 0, 1, 1], [], []>} : vector<2x32xf32>, vector<32x32xf32>, vector<2x32xf32> -> vector<2x32xf32>
    %c0_3 = arith.constant 0 : index
    %c0_4 = arith.constant 0 : index
    %3 = vector.load %arg2[%c0_3, %c0_4] : memref<1x32xf32, #tpu.memory_space<vmem>>, vector<1x32xf32>
    %4 = vector.broadcast %3 : vector<1x32xf32> to vector<2x32xf32>
    %5 = arith.addf %2, %4 : vector<2x32xf32>
    %6 = math.tanh %5 : vector<2x32xf32>
    %c0_5 = arith.constant 0 : index
    %c0_6 = arith.constant 0 : index
    %7 = vector.load %arg3[%c0_5, %c0_6] : memref<32x128xf32, #tpu.memory_space<vmem>>, vector<32x128xf32>
    %cst_7 = arith.constant dense<0.000000e+00> : vector<2x128xf32>
    %8 = tpu.matmul %6, %7, %cst_7 {dimension_numbers = #tpu.dot_dimension_numbers<[1], [0], [0], [1], [0, 0, 1, 1], [], []>} : vector<2x32xf32>, vector<32x128xf32>, vector<2x128xf32> -> vector<2x128xf32>
    %c0_8 = arith.constant 0 : index
    %c0_9 = arith.constant 0 : index
    %9 = vector.load %arg4[%c0_8, %c0_9] : memref<1x128xf32, #tpu.memory_space<vmem>>, vector<1x128xf32>
    %10 = vector.broadcast %9 : vector<1x128xf32> to vector<2x128xf32>
    %11 = arith.addf %8, %10 : vector<2x128xf32>
    %c0_10 = arith.constant 0 : index
    %c0_11 = arith.constant 0 : index
    %12 = vector.load %arg7[%c0_10, %c0_11] : memref<2x128xf32, #tpu.memory_space<vmem>>, vector<2x128xf32>
    tpu.vector_store %arg7[%c0_10, %c0_11], %11 {strides = array<i32>} : memref<2x128xf32, #tpu.memory_space<vmem>>, vector<2x128xf32>,
    %cst_12 = arith.constant dense<0xFF800000> : vector<2xf32>
    %13 = vector.multi_reduction <maximumf>, %11, %cst_12 [1] : vector<2x128xf32> to vector<2xf32>
    %14 = vector.shape_cast %13 : vector<2xf32> to vector<2x1xf32>
    %15 = vector.broadcast %14 : vector<2x1xf32> to vector<2x128xf32>
    %16 = arith.subf %11, %15 : vector<2x128xf32>
    %17 = math.exp %16 : vector<2x128xf32>
    %cst_13 = arith.constant dense<0.000000e+00> : vector<2xf32>
    %18 = vector.multi_reduction <add>, %17, %cst_13 [1] : vector<2x128xf32> to vector<2xf32>
    %19 = vector.shape_cast %18 : vector<2xf32> to vector<2x1xf32>
    %20 = math.log %19 : vector<2x1xf32>
    %21 = arith.addf %20, %14 : vector<2x1xf32>
    %22 = tpu.iota {dimensions = array<i32: 1>} : vector<1x128xi32>
    %c0_14 = arith.constant 0 : index
    %c0_15 = arith.constant 0 : index
    %23 = vector.load %arg5[%c0_14, %c0_15] : memref<1x128xf32, #tpu.memory_space<vmem>>, vector<1x128xf32>
    %cst_16 = arith.constant 0.000000e+00 : f32
    %24 = vector.broadcast %cst_16 : f32 to vector<1x1xf32>
    %cst_17 = arith.constant 0.000000e+00 : f32
    %25 = vector.broadcast %cst_17 : f32 to vector<1x1xf32>
    %c0_18 = arith.constant 0 : index
    %26 = memref.load %arg6[%c0_18] : memref<2xi32, #tpu.memory_space<smem>>
    %27 = vector.broadcast %26 : i32 to vector<1x128xi32>
    %28 = arith.cmpi eq, %22, %27 : vector<1x128xi32>
    %29 = arith.extui %28 : vector<1x128xi1> to vector<1x128xi32>
    %30 = arith.sitofp %29 : vector<1x128xi32> to vector<1x128xf32>
    %31 = vector.extract_strided_slice %11 {offsets = [0, 0], sizes = [1, 128], strides = [1, 1]} : vector<2x128xf32> to vector<1x128xf32>
    %32 = arith.mulf %30, %31 : vector<1x128xf32>
    %cst_19 = arith.constant dense<0.000000e+00> : vector<1xf32>
    %33 = vector.multi_reduction <add>, %32, %cst_19 [1] : vector<1x128xf32> to vector<1xf32>
    %34 = vector.shape_cast %33 : vector<1xf32> to vector<1x1xf32>
    %35 = arith.mulf %30, %23 : vector<1x128xf32>
    %cst_20 = arith.constant dense<0.000000e+00> : vector<1xf32>
    %36 = vector.multi_reduction <add>, %35, %cst_20 [1] : vector<1x128xf32> to vector<1xf32>
    %37 = vector.shape_cast %36 : vector<1xf32> to vector<1x1xf32>
    %38 = vector.extract_strided_slice %21 {offsets = [0, 0], sizes = [1, 1], strides = [1, 1]} : vector<2x1xf32> to vector<1x1xf32>
    %39 = arith.subf %38, %34 : vector<1x1xf32>
    %40 = arith.mulf %37, %39 : vector<1x1xf32>
    %41 = arith.addf %24, %40 : vector<1x1xf32>
    %42 = arith.addf %25, %37 : vector<1x1xf32>
    %c1 = arith.constant 1 : index
    %43 = memref.load %arg6[%c1] : memref<2xi32, #tpu.memory_space<smem>>
    %44 = vector.broadcast %43 : i32 to vector<1x128xi32>
    %45 = arith.cmpi eq, %22, %44 : vector<1x128xi32>
    %46 = arith.extui %45 : vector<1x128xi1> to vector<1x128xi32>
    %47 = arith.sitofp %46 : vector<1x128xi32> to vector<1x128xf32>
    %48 = vector.extract_strided_slice %11 {offsets = [1, 0], sizes = [1, 128], strides = [1, 1]} : vector<2x128xf32> to vector<1x128xf32>
    %49 = arith.mulf %47, %48 : vector<1x128xf32>
    %cst_21 = arith.constant dense<0.000000e+00> : vector<1xf32>
    %50 = vector.multi_reduction <add>, %49, %cst_21 [1] : vector<1x128xf32> to vector<1xf32>
    %51 = vector.shape_cast %50 : vector<1xf32> to vector<1x1xf32>
    %52 = arith.mulf %47, %23 : vector<1x128xf32>
    %cst_22 = arith.constant dense<0.000000e+00> : vector<1xf32>
    %53 = vector.multi_reduction <add>, %52, %cst_22 [1] : vector<1x128xf32> to vector<1xf32>
    %54 = vector.shape_cast %53 : vector<1xf32> to vector<1x1xf32>
    %55 = vector.extract_strided_slice %21 {offsets = [1, 0], sizes = [1, 1], strides = [1, 1]} : vector<2x1xf32> to vector<1x1xf32>
    %56 = arith.subf %55, %51 : vector<1x1xf32>
    %57 = arith.mulf %54, %56 : vector<1x1xf32>
    %58 = arith.addf %41, %57 : vector<1x1xf32>
    %59 = arith.addf %42, %54 : vector<1x1xf32>
    %60 = arith.divf %58, %59 : vector<1x1xf32>
    %c0_23 = arith.constant 0 : index
    %c0_24 = arith.constant 0 : index
    %61 = vector.load %arg8[%c0_23, %c0_24] : memref<1x1xf32, #tpu.memory_space<vmem>>, vector<1x1xf32>
    tpu.vector_store %arg8[%c0_23, %c0_24], %60 {strides = array<i32>} : memref<1x1xf32, #tpu.memory_space<vmem>>, vector<1x1xf32>,
    return
  }
}

module attributes {stable_mosaic.version = 11 : i64} {
  func.func @_encoder_layer_kernel(%arg0: i32, %arg1: memref<8x32xf32, #tpu.memory_space<vmem>>, %arg2: memref<1x1x8xf32, #tpu.memory_space<vmem>>, %arg3: memref<6x32x16xf32, #tpu.memory_space<vmem>>, %arg4: memref<6x1x16xf32, #tpu.memory_space<vmem>>, %arg5: memref<2x16x32xf32, #tpu.memory_space<vmem>>, %arg6: memref<1x32xf32, #tpu.memory_space<vmem>>, %arg7: memref<1x32xf32, #tpu.memory_space<vmem>>, %arg8: memref<1x32xf32, #tpu.memory_space<vmem>>, %arg9: memref<32x64xf32, #tpu.memory_space<vmem>>, %arg10: memref<1x64xf32, #tpu.memory_space<vmem>>, %arg11: memref<64x32xf32, #tpu.memory_space<vmem>>, %arg12: memref<1x32xf32, #tpu.memory_space<vmem>>, %arg13: memref<1x32xf32, #tpu.memory_space<vmem>>, %arg14: memref<1x32xf32, #tpu.memory_space<vmem>>, %arg15: memref<8x32xf32, #tpu.memory_space<vmem>>) attributes {dimension_semantics = [#tpu.dimension_semantics<parallel>], iteration_bounds = array<i64: 2>, scalar_prefetch = 0 : i64, scratch_operands = 0 : i64, tpu.core_type = #tpu.core_type<tc>, window_params = [{transform_indices = @transform_0, window_bounds = array<i64: 8, 32>}, {transform_indices = @transform_1, window_bounds = array<i64: 1, 1, 8>}, {pipeline_mode = #tpu.pipeline_mode<synchronous>, transform_indices = @transform_2, window_bounds = array<i64: 6, 32, 16>}, {pipeline_mode = #tpu.pipeline_mode<synchronous>, transform_indices = @transform_3, window_bounds = array<i64: 6, 1, 16>}, {pipeline_mode = #tpu.pipeline_mode<synchronous>, transform_indices = @transform_4, window_bounds = array<i64: 2, 16, 32>}, {pipeline_mode = #tpu.pipeline_mode<synchronous>, transform_indices = @transform_5, window_bounds = array<i64: 1, 32>}, {pipeline_mode = #tpu.pipeline_mode<synchronous>, transform_indices = @transform_6, window_bounds = array<i64: 1, 32>}, {pipeline_mode = #tpu.pipeline_mode<synchronous>, transform_indices = @transform_7, window_bounds = array<i64: 1, 32>}, {pipeline_mode = #tpu.pipeline_mode<synchronous>, transform_indices = @transform_8, window_bounds = array<i64: 32, 64>}, {pipeline_mode = #tpu.pipeline_mode<synchronous>, transform_indices = @transform_9, window_bounds = array<i64: 1, 64>}, {pipeline_mode = #tpu.pipeline_mode<synchronous>, transform_indices = @transform_10, window_bounds = array<i64: 64, 32>}, {pipeline_mode = #tpu.pipeline_mode<synchronous>, transform_indices = @transform_11, window_bounds = array<i64: 1, 32>}, {pipeline_mode = #tpu.pipeline_mode<synchronous>, transform_indices = @transform_12, window_bounds = array<i64: 1, 32>}, {pipeline_mode = #tpu.pipeline_mode<synchronous>, transform_indices = @transform_13, window_bounds = array<i64: 1, 32>}, {transform_indices = @transform_14, window_bounds = array<i64: 8, 32>}]} {
    %c0 = arith.constant 0 : index
    %c0_0 = arith.constant 0 : index
    %0 = vector.load %arg1[%c0, %c0_0] : memref<8x32xf32, #tpu.memory_space<vmem>>, vector<8x32xf32>
    %c0_1 = arith.constant 0 : index
    %c0_2 = arith.constant 0 : index
    %c0_3 = arith.constant 0 : index
    %1 = vector.load %arg2[%c0_1, %c0_2, %c0_3] : memref<1x1x8xf32, #tpu.memory_space<vmem>>, vector<1x1x8xf32>
    %2 = vector.shape_cast %1 : vector<1x1x8xf32> to vector<1x8xf32>
    %cst = arith.constant 0.000000e+00 : f32
    %3 = vector.broadcast %cst : f32 to vector<8x32xf32>
    %c0_4 = arith.constant 0 : index
    %c0_5 = arith.constant 0 : index
    %c0_6 = arith.constant 0 : index
    %4 = vector.load %arg3[%c0_4, %c0_5, %c0_6] : memref<6x32x16xf32, #tpu.memory_space<vmem>>, vector<1x32x16xf32>
    %5 = vector.shape_cast %4 : vector<1x32x16xf32> to vector<32x16xf32>
    %cst_7 = arith.constant dense<0.000000e+00> : vector<8x16xf32>
    %6 = tpu.matmul %0, %5, %cst_7 {dimension_numbers = #tpu.dot_dimension_numbers<[1], [0], [0], [1], [0, 0, 1, 1], [], []>} : vector<8x32xf32>, vector<32x16xf32>, vector<8x16xf32> -> vector<8x16xf32>
    %c0_8 = arith.constant 0 : index
    %c0_9 = arith.constant 0 : index
    %c0_10 = arith.constant 0 : index
    %7 = vector.load %arg4[%c0_8, %c0_9, %c0_10] : memref<6x1x16xf32, #tpu.memory_space<vmem>>, vector<1x1x16xf32>
    %8 = vector.shape_cast %7 : vector<1x1x16xf32> to vector<1x16xf32>
    %9 = vector.broadcast %8 : vector<1x16xf32> to vector<8x16xf32>
    %10 = arith.addf %6, %9 : vector<8x16xf32>
    %c2 = arith.constant 2 : index
    %c0_11 = arith.constant 0 : index
    %c0_12 = arith.constant 0 : index
    %11 = vector.load %arg3[%c2, %c0_11, %c0_12] : memref<6x32x16xf32, #tpu.memory_space<vmem>>, vector<1x32x16xf32>
    %12 = vector.shape_cast %11 : vector<1x32x16xf32> to vector<32x16xf32>
    %cst_13 = arith.constant dense<0.000000e+00> : vector<8x16xf32>
    %13 = tpu.matmul %0, %12, %cst_13 {dimension_numbers = #tpu.dot_dimension_numbers<[1], [0], [0], [1], [0, 0, 1, 1], [], []>} : vector<8x32xf32>, vector<32x16xf32>, vector<8x16xf32> -> vector<8x16xf32>
    %c2_14 = arith.constant 2 : index
    %c0_15 = arith.constant 0 : index
    %c0_16 = arith.constant 0 : index
    %14 = vector.load %arg4[%c2_14, %c0_15, %c0_16] : memref<6x1x16xf32, #tpu.memory_space<vmem>>, vector<1x1x16xf32>
    %15 = vector.shape_cast %14 : vector<1x1x16xf32> to vector<1x16xf32>
    %16 = vector.broadcast %15 : vector<1x16xf32> to vector<8x16xf32>
    %17 = arith.addf %13, %16 : vector<8x16xf32>
    %c4 = arith.constant 4 : index
    %c0_17 = arith.constant 0 : index
    %c0_18 = arith.constant 0 : index
    %18 = vector.load %arg3[%c4, %c0_17, %c0_18] : memref<6x32x16xf32, #tpu.memory_space<vmem>>, vector<1x32x16xf32>
    %19 = vector.shape_cast %18 : vector<1x32x16xf32> to vector<32x16xf32>
    %cst_19 = arith.constant dense<0.000000e+00> : vector<8x16xf32>
    %20 = tpu.matmul %0, %19, %cst_19 {dimension_numbers = #tpu.dot_dimension_numbers<[1], [0], [0], [1], [0, 0, 1, 1], [], []>} : vector<8x32xf32>, vector<32x16xf32>, vector<8x16xf32> -> vector<8x16xf32>
    %c4_20 = arith.constant 4 : index
    %c0_21 = arith.constant 0 : index
    %c0_22 = arith.constant 0 : index
    %21 = vector.load %arg4[%c4_20, %c0_21, %c0_22] : memref<6x1x16xf32, #tpu.memory_space<vmem>>, vector<1x1x16xf32>
    %22 = vector.shape_cast %21 : vector<1x1x16xf32> to vector<1x16xf32>
    %23 = vector.broadcast %22 : vector<1x16xf32> to vector<8x16xf32>
    %24 = arith.addf %20, %23 : vector<8x16xf32>
    %cst_23 = arith.constant dense<0.000000e+00> : vector<8x8xf32>
    %25 = tpu.matmul %10, %17, %cst_23 {dimension_numbers = #tpu.dot_dimension_numbers<[1], [1], [0], [0], [0, 0, 1, 0], [], []>} : vector<8x16xf32>, vector<8x16xf32>, vector<8x8xf32> -> vector<8x8xf32>
    %cst_24 = arith.constant 2.500000e-01 : f32
    %26 = vector.broadcast %cst_24 : f32 to vector<8x8xf32>
    %27 = arith.mulf %25, %26 : vector<8x8xf32>
    %28 = vector.broadcast %2 : vector<1x8xf32> to vector<8x8xf32>
    %29 = arith.addf %27, %28 : vector<8x8xf32>
    %cst_25 = arith.constant dense<0xFF800000> : vector<8xf32>
    %30 = vector.multi_reduction <maximumf>, %29, %cst_25 [1] : vector<8x8xf32> to vector<8xf32>
    %31 = vector.shape_cast %30 : vector<8xf32> to vector<8x1xf32>
    %32 = vector.broadcast %31 : vector<8x1xf32> to vector<8x8xf32>
    %33 = arith.subf %29, %32 : vector<8x8xf32>
    %34 = math.exp %33 : vector<8x8xf32>
    %cst_26 = arith.constant dense<0.000000e+00> : vector<8xf32>
    %35 = vector.multi_reduction <add>, %34, %cst_26 [1] : vector<8x8xf32> to vector<8xf32>
    %36 = vector.shape_cast %35 : vector<8xf32> to vector<8x1xf32>
    %37 = tpu.reciprocal %36 {approx = true} : vector<8x1xf32> -> vector<8x1xf32>
    %38 = vector.broadcast %37 : vector<8x1xf32> to vector<8x8xf32>
    %39 = arith.mulf %34, %38 : vector<8x8xf32>
    %cst_27 = arith.constant dense<0.000000e+00> : vector<8x16xf32>
    %40 = tpu.matmul %39, %24, %cst_27 {dimension_numbers = #tpu.dot_dimension_numbers<[1], [0], [0], [1], [0, 0, 1, 1], [], []>} : vector<8x8xf32>, vector<8x16xf32>, vector<8x16xf32> -> vector<8x16xf32>
    %c0_28 = arith.constant 0 : index
    %c0_29 = arith.constant 0 : index
    %c0_30 = arith.constant 0 : index
    %41 = vector.load %arg5[%c0_28, %c0_29, %c0_30] : memref<2x16x32xf32, #tpu.memory_space<vmem>>, vector<1x16x32xf32>
    %42 = vector.shape_cast %41 : vector<1x16x32xf32> to vector<16x32xf32>
    %cst_31 = arith.constant dense<0.000000e+00> : vector<8x32xf32>
    %43 = tpu.matmul %40, %42, %cst_31 {dimension_numbers = #tpu.dot_dimension_numbers<[1], [0], [0], [1], [0, 0, 1, 1], [], []>} : vector<8x16xf32>, vector<16x32xf32>, vector<8x32xf32> -> vector<8x32xf32>
    %44 = arith.addf %3, %43 : vector<8x32xf32>
    %c1 = arith.constant 1 : index
    %c0_32 = arith.constant 0 : index
    %c0_33 = arith.constant 0 : index
    %45 = vector.load %arg3[%c1, %c0_32, %c0_33] : memref<6x32x16xf32, #tpu.memory_space<vmem>>, vector<1x32x16xf32>
    %46 = vector.shape_cast %45 : vector<1x32x16xf32> to vector<32x16xf32>
    %cst_34 = arith.constant dense<0.000000e+00> : vector<8x16xf32>
    %47 = tpu.matmul %0, %46, %cst_34 {dimension_numbers = #tpu.dot_dimension_numbers<[1], [0], [0], [1], [0, 0, 1, 1], [], []>} : vector<8x32xf32>, vector<32x16xf32>, vector<8x16xf32> -> vector<8x16xf32>
    %c1_35 = arith.constant 1 : index
    %c0_36 = arith.constant 0 : index
    %c0_37 = arith.constant 0 : index
    %48 = vector.load %arg4[%c1_35, %c0_36, %c0_37] : memref<6x1x16xf32, #tpu.memory_space<vmem>>, vector<1x1x16xf32>
    %49 = vector.shape_cast %48 : vector<1x1x16xf32> to vector<1x16xf32>
    %50 = vector.broadcast %49 : vector<1x16xf32> to vector<8x16xf32>
    %51 = arith.addf %47, %50 : vector<8x16xf32>
    %c3 = arith.constant 3 : index
    %c0_38 = arith.constant 0 : index
    %c0_39 = arith.constant 0 : index
    %52 = vector.load %arg3[%c3, %c0_38, %c0_39] : memref<6x32x16xf32, #tpu.memory_space<vmem>>, vector<1x32x16xf32>
    %53 = vector.shape_cast %52 : vector<1x32x16xf32> to vector<32x16xf32>
    %cst_40 = arith.constant dense<0.000000e+00> : vector<8x16xf32>
    %54 = tpu.matmul %0, %53, %cst_40 {dimension_numbers = #tpu.dot_dimension_numbers<[1], [0], [0], [1], [0, 0, 1, 1], [], []>} : vector<8x32xf32>, vector<32x16xf32>, vector<8x16xf32> -> vector<8x16xf32>
    %c3_41 = arith.constant 3 : index
    %c0_42 = arith.constant 0 : index
    %c0_43 = arith.constant 0 : index
    %55 = vector.load %arg4[%c3_41, %c0_42, %c0_43] : memref<6x1x16xf32, #tpu.memory_space<vmem>>, vector<1x1x16xf32>
    %56 = vector.shape_cast %55 : vector<1x1x16xf32> to vector<1x16xf32>
    %57 = vector.broadcast %56 : vector<1x16xf32> to vector<8x16xf32>
    %58 = arith.addf %54, %57 : vector<8x16xf32>
    %c5 = arith.constant 5 : index
    %c0_44 = arith.constant 0 : index
    %c0_45 = arith.constant 0 : index
    %59 = vector.load %arg3[%c5, %c0_44, %c0_45] : memref<6x32x16xf32, #tpu.memory_space<vmem>>, vector<1x32x16xf32>
    %60 = vector.shape_cast %59 : vector<1x32x16xf32> to vector<32x16xf32>
    %cst_46 = arith.constant dense<0.000000e+00> : vector<8x16xf32>
    %61 = tpu.matmul %0, %60, %cst_46 {dimension_numbers = #tpu.dot_dimension_numbers<[1], [0], [0], [1], [0, 0, 1, 1], [], []>} : vector<8x32xf32>, vector<32x16xf32>, vector<8x16xf32> -> vector<8x16xf32>
    %c5_47 = arith.constant 5 : index
    %c0_48 = arith.constant 0 : index
    %c0_49 = arith.constant 0 : index
    %62 = vector.load %arg4[%c5_47, %c0_48, %c0_49] : memref<6x1x16xf32, #tpu.memory_space<vmem>>, vector<1x1x16xf32>
    %63 = vector.shape_cast %62 : vector<1x1x16xf32> to vector<1x16xf32>
    %64 = vector.broadcast %63 : vector<1x16xf32> to vector<8x16xf32>
    %65 = arith.addf %61, %64 : vector<8x16xf32>
    %cst_50 = arith.constant dense<0.000000e+00> : vector<8x8xf32>
    %66 = tpu.matmul %51, %58, %cst_50 {dimension_numbers = #tpu.dot_dimension_numbers<[1], [1], [0], [0], [0, 0, 1, 0], [], []>} : vector<8x16xf32>, vector<8x16xf32>, vector<8x8xf32> -> vector<8x8xf32>
    %cst_51 = arith.constant 2.500000e-01 : f32
    %67 = vector.broadcast %cst_51 : f32 to vector<8x8xf32>
    %68 = arith.mulf %66, %67 : vector<8x8xf32>
    %69 = vector.broadcast %2 : vector<1x8xf32> to vector<8x8xf32>
    %70 = arith.addf %68, %69 : vector<8x8xf32>
    %cst_52 = arith.constant dense<0xFF800000> : vector<8xf32>
    %71 = vector.multi_reduction <maximumf>, %70, %cst_52 [1] : vector<8x8xf32> to vector<8xf32>
    %72 = vector.shape_cast %71 : vector<8xf32> to vector<8x1xf32>
    %73 = vector.broadcast %72 : vector<8x1xf32> to vector<8x8xf32>
    %74 = arith.subf %70, %73 : vector<8x8xf32>
    %75 = math.exp %74 : vector<8x8xf32>
    %cst_53 = arith.constant dense<0.000000e+00> : vector<8xf32>
    %76 = vector.multi_reduction <add>, %75, %cst_53 [1] : vector<8x8xf32> to vector<8xf32>
    %77 = vector.shape_cast %76 : vector<8xf32> to vector<8x1xf32>
    %78 = tpu.reciprocal %77 {approx = true} : vector<8x1xf32> -> vector<8x1xf32>
    %79 = vector.broadcast %78 : vector<8x1xf32> to vector<8x8xf32>
    %80 = arith.mulf %75, %79 : vector<8x8xf32>
    %cst_54 = arith.constant dense<0.000000e+00> : vector<8x16xf32>
    %81 = tpu.matmul %80, %65, %cst_54 {dimension_numbers = #tpu.dot_dimension_numbers<[1], [0], [0], [1], [0, 0, 1, 1], [], []>} : vector<8x8xf32>, vector<8x16xf32>, vector<8x16xf32> -> vector<8x16xf32>
    %c1_55 = arith.constant 1 : index
    %c0_56 = arith.constant 0 : index
    %c0_57 = arith.constant 0 : index
    %82 = vector.load %arg5[%c1_55, %c0_56, %c0_57] : memref<2x16x32xf32, #tpu.memory_space<vmem>>, vector<1x16x32xf32>
    %83 = vector.shape_cast %82 : vector<1x16x32xf32> to vector<16x32xf32>
    %cst_58 = arith.constant dense<0.000000e+00> : vector<8x32xf32>
    %84 = tpu.matmul %81, %83, %cst_58 {dimension_numbers = #tpu.dot_dimension_numbers<[1], [0], [0], [1], [0, 0, 1, 1], [], []>} : vector<8x16xf32>, vector<16x32xf32>, vector<8x32xf32> -> vector<8x32xf32>
    %85 = arith.addf %44, %84 : vector<8x32xf32>
    %c0_59 = arith.constant 0 : index
    %c0_60 = arith.constant 0 : index
    %86 = vector.load %arg6[%c0_59, %c0_60] : memref<1x32xf32, #tpu.memory_space<vmem>>, vector<1x32xf32>
    %87 = vector.broadcast %86 : vector<1x32xf32> to vector<8x32xf32>
    %88 = arith.addf %85, %87 : vector<8x32xf32>
    %89 = arith.addf %0, %88 : vector<8x32xf32>
    %c0_61 = arith.constant 0 : index
    %c0_62 = arith.constant 0 : index
    %90 = vector.load %arg7[%c0_61, %c0_62] : memref<1x32xf32, #tpu.memory_space<vmem>>, vector<1x32xf32>
    %c0_63 = arith.constant 0 : index
    %c0_64 = arith.constant 0 : index
    %91 = vector.load %arg8[%c0_63, %c0_64] : memref<1x32xf32, #tpu.memory_space<vmem>>, vector<1x32xf32>
    %cst_65 = arith.constant dense<0.000000e+00> : vector<8xf32>
    %92 = vector.multi_reduction <add>, %89, %cst_65 [1] : vector<8x32xf32> to vector<8xf32>
    %93 = vector.shape_cast %92 : vector<8xf32> to vector<8x1xf32>
    %cst_66 = arith.constant 3.200000e+01 : f32
    %94 = vector.broadcast %cst_66 : f32 to vector<8x1xf32>
    %95 = arith.divf %93, %94 : vector<8x1xf32>
    %96 = vector.broadcast %95 : vector<8x1xf32> to vector<8x32xf32>
    %97 = arith.subf %89, %96 : vector<8x32xf32>
    %98 = arith.mulf %97, %97 : vector<8x32xf32>
    %cst_67 = arith.constant dense<0.000000e+00> : vector<8xf32>
    %99 = vector.multi_reduction <add>, %98, %cst_67 [1] : vector<8x32xf32> to vector<8xf32>
    %100 = vector.shape_cast %99 : vector<8xf32> to vector<8x1xf32>
    %cst_68 = arith.constant 3.200000e+01 : f32
    %101 = vector.broadcast %cst_68 : f32 to vector<8x1xf32>
    %102 = arith.divf %100, %101 : vector<8x1xf32>
    %103 = vector.broadcast %95 : vector<8x1xf32> to vector<8x32xf32>
    %104 = arith.subf %89, %103 : vector<8x32xf32>
    %cst_69 = arith.constant 9.99999996E-13 : f32
    %105 = vector.broadcast %cst_69 : f32 to vector<8x1xf32>
    %106 = arith.addf %102, %105 : vector<8x1xf32>
    %107 = math.rsqrt %106 : vector<8x1xf32>
    %108 = vector.broadcast %107 : vector<8x1xf32> to vector<8x32xf32>
    %109 = arith.mulf %104, %108 : vector<8x32xf32>
    %110 = vector.broadcast %90 : vector<1x32xf32> to vector<8x32xf32>
    %111 = arith.mulf %109, %110 : vector<8x32xf32>
    %112 = vector.broadcast %91 : vector<1x32xf32> to vector<8x32xf32>
    %113 = arith.addf %111, %112 : vector<8x32xf32>
    %c0_70 = arith.constant 0 : index
    %c0_71 = arith.constant 0 : index
    %114 = vector.load %arg9[%c0_70, %c0_71] : memref<32x64xf32, #tpu.memory_space<vmem>>, vector<32x64xf32>
    %cst_72 = arith.constant dense<0.000000e+00> : vector<8x64xf32>
    %115 = tpu.matmul %113, %114, %cst_72 {dimension_numbers = #tpu.dot_dimension_numbers<[1], [0], [0], [1], [0, 0, 1, 1], [], []>} : vector<8x32xf32>, vector<32x64xf32>, vector<8x64xf32> -> vector<8x64xf32>
    %c0_73 = arith.constant 0 : index
    %c0_74 = arith.constant 0 : index
    %116 = vector.load %arg10[%c0_73, %c0_74] : memref<1x64xf32, #tpu.memory_space<vmem>>, vector<1x64xf32>
    %117 = vector.broadcast %116 : vector<1x64xf32> to vector<8x64xf32>
    %118 = arith.addf %115, %117 : vector<8x64xf32>
    %cst_75 = arith.constant 5.000000e-01 : f32
    %119 = vector.broadcast %cst_75 : f32 to vector<8x64xf32>
    %120 = arith.mulf %119, %118 : vector<8x64xf32>
    %cst_76 = arith.constant 0.707106769 : f32
    %121 = vector.broadcast %cst_76 : f32 to vector<8x64xf32>
    %122 = arith.mulf %118, %121 : vector<8x64xf32>
    %123 = math.erf %122 : vector<8x64xf32>
    %cst_77 = arith.constant 1.000000e+00 : f32
    %124 = vector.broadcast %cst_77 : f32 to vector<8x64xf32>
    %125 = arith.addf %124, %123 : vector<8x64xf32>
    %126 = arith.mulf %120, %125 : vector<8x64xf32>
    %c0_78 = arith.constant 0 : index
    %c0_79 = arith.constant 0 : index
    %127 = vector.load %arg11[%c0_78, %c0_79] : memref<64x32xf32, #tpu.memory_space<vmem>>, vector<64x32xf32>
    %cst_80 = arith.constant dense<0.000000e+00> : vector<8x32xf32>
    %128 = tpu.matmul %126, %127, %cst_80 {dimension_numbers = #tpu.dot_dimension_numbers<[1], [0], [0], [1], [0, 0, 1, 1], [], []>} : vector<8x64xf32>, vector<64x32xf32>, vector<8x32xf32> -> vector<8x32xf32>
    %c0_81 = arith.constant 0 : index
    %c0_82 = arith.constant 0 : index
    %129 = vector.load %arg12[%c0_81, %c0_82] : memref<1x32xf32, #tpu.memory_space<vmem>>, vector<1x32xf32>
    %130 = vector.broadcast %129 : vector<1x32xf32> to vector<8x32xf32>
    %131 = arith.addf %128, %130 : vector<8x32xf32>
    %132 = arith.addf %113, %131 : vector<8x32xf32>
    %c0_83 = arith.constant 0 : index
    %c0_84 = arith.constant 0 : index
    %133 = vector.load %arg13[%c0_83, %c0_84] : memref<1x32xf32, #tpu.memory_space<vmem>>, vector<1x32xf32>
    %c0_85 = arith.constant 0 : index
    %c0_86 = arith.constant 0 : index
    %134 = vector.load %arg14[%c0_85, %c0_86] : memref<1x32xf32, #tpu.memory_space<vmem>>, vector<1x32xf32>
    %cst_87 = arith.constant dense<0.000000e+00> : vector<8xf32>
    %135 = vector.multi_reduction <add>, %132, %cst_87 [1] : vector<8x32xf32> to vector<8xf32>
    %136 = vector.shape_cast %135 : vector<8xf32> to vector<8x1xf32>
    %cst_88 = arith.constant 3.200000e+01 : f32
    %137 = vector.broadcast %cst_88 : f32 to vector<8x1xf32>
    %138 = arith.divf %136, %137 : vector<8x1xf32>
    %139 = vector.broadcast %138 : vector<8x1xf32> to vector<8x32xf32>
    %140 = arith.subf %132, %139 : vector<8x32xf32>
    %141 = arith.mulf %140, %140 : vector<8x32xf32>
    %cst_89 = arith.constant dense<0.000000e+00> : vector<8xf32>
    %142 = vector.multi_reduction <add>, %141, %cst_89 [1] : vector<8x32xf32> to vector<8xf32>
    %143 = vector.shape_cast %142 : vector<8xf32> to vector<8x1xf32>
    %cst_90 = arith.constant 3.200000e+01 : f32
    %144 = vector.broadcast %cst_90 : f32 to vector<8x1xf32>
    %145 = arith.divf %143, %144 : vector<8x1xf32>
    %146 = vector.broadcast %138 : vector<8x1xf32> to vector<8x32xf32>
    %147 = arith.subf %132, %146 : vector<8x32xf32>
    %cst_91 = arith.constant 9.99999996E-13 : f32
    %148 = vector.broadcast %cst_91 : f32 to vector<8x1xf32>
    %149 = arith.addf %145, %148 : vector<8x1xf32>
    %150 = math.rsqrt %149 : vector<8x1xf32>
    %151 = vector.broadcast %150 : vector<8x1xf32> to vector<8x32xf32>
    %152 = arith.mulf %147, %151 : vector<8x32xf32>
    %153 = vector.broadcast %133 : vector<1x32xf32> to vector<8x32xf32>
    %154 = arith.mulf %152, %153 : vector<8x32xf32>
    %155 = vector.broadcast %134 : vector<1x32xf32> to vector<8x32xf32>
    %156 = arith.addf %154, %155 : vector<8x32xf32>
    %c0_92 = arith.constant 0 : index
    %c0_93 = arith.constant 0 : index
    %157 = vector.load %arg15[%c0_92, %c0_93] : memref<8x32xf32, #tpu.memory_space<vmem>>, vector<8x32xf32>
    tpu.vector_store %arg15[%c0_92, %c0_93], %156 {strides = array<i32>} : memref<8x32xf32, #tpu.memory_space<vmem>>, vector<8x32xf32>,
    return
  }
  func.func @transform_0(%arg0: i32) -> (i32, i32) {
    %c0_i32 = arith.constant 0 : i32
    %c0_i32_0 = arith.constant 0 : i32
    return %arg0, %c0_i32 : i32, i32
  }
  func.func @transform_1(%arg0: i32) -> (i32, i32, i32) {
    %c0_i32 = arith.constant 0 : i32
    %c0_i32_0 = arith.constant 0 : i32
    %c0_i32_1 = arith.constant 0 : i32
    return %arg0, %c0_i32, %c0_i32_0 : i32, i32, i32
  }
  func.func @transform_2(%arg0: i32) -> (i32, i32, i32) {
    %c0_i32 = arith.constant 0 : i32
    %c0_i32_0 = arith.constant 0 : i32
    %c0_i32_1 = arith.constant 0 : i32
    %c0_i32_2 = arith.constant 0 : i32
    return %c0_i32, %c0_i32_0, %c0_i32_1 : i32, i32, i32
  }
  func.func @transform_3(%arg0: i32) -> (i32, i32, i32) {
    %c0_i32 = arith.constant 0 : i32
    %c0_i32_0 = arith.constant 0 : i32
    %c0_i32_1 = arith.constant 0 : i32
    %c0_i32_2 = arith.constant 0 : i32
    return %c0_i32, %c0_i32_0, %c0_i32_1 : i32, i32, i32
  }
  func.func @transform_4(%arg0: i32) -> (i32, i32, i32) {
    %c0_i32 = arith.constant 0 : i32
    %c0_i32_0 = arith.constant 0 : i32
    %c0_i32_1 = arith.constant 0 : i32
    %c0_i32_2 = arith.constant 0 : i32
    return %c0_i32, %c0_i32_0, %c0_i32_1 : i32, i32, i32
  }
  func.func @transform_5(%arg0: i32) -> (i32, i32) {
    %c0_i32 = arith.constant 0 : i32
    %c0_i32_0 = arith.constant 0 : i32
    %c0_i32_1 = arith.constant 0 : i32
    return %c0_i32, %c0_i32_0 : i32, i32
  }
  func.func @transform_6(%arg0: i32) -> (i32, i32) {
    %c0_i32 = arith.constant 0 : i32
    %c0_i32_0 = arith.constant 0 : i32
    %c0_i32_1 = arith.constant 0 : i32
    return %c0_i32, %c0_i32_0 : i32, i32
  }
  func.func @transform_7(%arg0: i32) -> (i32, i32) {
    %c0_i32 = arith.constant 0 : i32
    %c0_i32_0 = arith.constant 0 : i32
    %c0_i32_1 = arith.constant 0 : i32
    return %c0_i32, %c0_i32_0 : i32, i32
  }
  func.func @transform_8(%arg0: i32) -> (i32, i32) {
    %c0_i32 = arith.constant 0 : i32
    %c0_i32_0 = arith.constant 0 : i32
    %c0_i32_1 = arith.constant 0 : i32
    return %c0_i32, %c0_i32_0 : i32, i32
  }
  func.func @transform_9(%arg0: i32) -> (i32, i32) {
    %c0_i32 = arith.constant 0 : i32
    %c0_i32_0 = arith.constant 0 : i32
    %c0_i32_1 = arith.constant 0 : i32
    return %c0_i32, %c0_i32_0 : i32, i32
  }
  func.func @transform_10(%arg0: i32) -> (i32, i32) {
    %c0_i32 = arith.constant 0 : i32
    %c0_i32_0 = arith.constant 0 : i32
    %c0_i32_1 = arith.constant 0 : i32
    return %c0_i32, %c0_i32_0 : i32, i32
  }
  func.func @transform_11(%arg0: i32) -> (i32, i32) {
    %c0_i32 = arith.constant 0 : i32
    %c0_i32_0 = arith.constant 0 : i32
    %c0_i32_1 = arith.constant 0 : i32
    return %c0_i32, %c0_i32_0 : i32, i32
  }
  func.func @transform_12(%arg0: i32) -> (i32, i32) {
    %c0_i32 = arith.constant 0 : i32
    %c0_i32_0 = arith.constant 0 : i32
    %c0_i32_1 = arith.constant 0 : i32
    return %c0_i32, %c0_i32_0 : i32, i32
  }
  func.func @transform_13(%arg0: i32) -> (i32, i32) {
    %c0_i32 = arith.constant 0 : i32
    %c0_i32_0 = arith.constant 0 : i32
    %c0_i32_1 = arith.constant 0 : i32
    return %c0_i32, %c0_i32_0 : i32, i32
  }
  func.func @transform_14(%arg0: i32) -> (i32, i32) {
    %c0_i32 = arith.constant 0 : i32
    %c0_i32_0 = arith.constant 0 : i32
    return %arg0, %c0_i32 : i32, i32
  }
}

</mosaic_0001>

<llo_original>
// kernel: bert_with_weight_ce_forward.4
$region0: #{bert_with_weight_ce_forward.4}
  #allocation0 [shape = 'u32[]', space=smem, size = 0x4, offset = 0x4, fixed_abs, tag = 'smem constant byte address 0x4 - core index']
  #allocation1 [shape = 'u32[144,128]{1,0:T(1,128)}', space=vmem, size = 0x12000, scoped, tag = 'internal scratch']
  %s0 = inlined_call_operand.vmem [shape: f32[16,32], index: 0, kind: input, shape index: {}]
  %s1 = inlined_call_operand.vmem [shape: f32[8,32], index: 1, kind: input, shape index: {}]
  %s2 = inlined_call_operand.vmem [shape: f32[1,32], index: 2, kind: input, shape index: {}]
  %s3 = inlined_call_operand.vmem [shape: f32[1,32], index: 3, kind: input, shape index: {}]
  %s4 = inlined_call_operand.vmem [shape: f32[1,32], index: 4, kind: input, shape index: {}]
  %s5 = inlined_call_operand.vmem [shape: f32[16,32], index: 5, kind: output, shape index: {}]
  %s6 = sld [smem:[#allocation0]]
  $region53: #{bert_with_weight_ce_forward.4} parent=0
    _
  %s8 = ssub.s32 1, %s6
  %s9 = scalar_select 0, %s8, %s6
  loop: start=0, step=1, limit=4
  $region2: #{bert_with_weight_ce_forward.4} parent=0 // loop_pre_header
    _
  $region3: #{bert_with_weight_ce_forward.4} parent=0 // loop_header
    %s11 = sphi 0, %s15
    %p12 = scmp.ge.s32.totalorder %s11, 4
    %s21 = sphi 0, %s23
    %s24 = sphi 0, %s21
    %s25 = sphi 0, %s24
    %s41 = sphi 0, %s25
    %s45 = sphi 0, %s45
    %s47 = sphi 0, %s45
    %s48 = sphi 0, %s47
    %s62 = sphi 0, %s48
    %s66 = sphi 0, %s66
    %s68 = sphi 0, %s66
    %s69 = sphi 0, %s68
    %s83 = sphi 0, %s69
    %s87 = sphi 0, %s87
    %s89 = sphi 0, %s87
    %s90 = sphi 0, %s89
    %s104 = sphi 0, %s90
    %s108 = sphi 0, %s108
    %s110 = sphi 0, %s108
    %s111 = sphi 0, %s110
    %s125 = sphi 0, %s111
    %s131 = sphi 0, %s133
    %s134 = sphi 0, %s131
    %s135 = sphi 0, %s134
    %s151 = sphi 0, %s135
  $region4: #{bert_with_weight_ce_forward.4} parent=0 // loop_header_branch
    %14 = sbr.rel (%p12) target = $region8
  $region5: #{bert_with_weight_ce_forward.4} parent=0 // loop_body
    %s16 = ssub.s32 %s11, 1
    %s17 = ssub.s32 %s11, 2
    %s18 = sadd.s32 %s11, 1
    %s19 = ssub.s32 %s11, %s18
    %p20 = scmp.eq.s32.totalorder %s19, 0
    %s22 = sadd.s32 %s21, 1
    %s23 = scalar_select %p20, %s21, %s22
    %p26 = pneg %p20
    %p27 = scmp.eq.s32.totalorder %s11, 1
    %p28 = por %p26, %p27
    %p29 = scmp.ne.s32.totalorder %s21, %s24
    %p30 = scmp.eq.s32.totalorder %s11, 0
    %p31 = por %p29, %p30
    %p32 = scmp.ne.s32.totalorder %s21, %s24
    %p33 = scmp.eq.s32.totalorder %s16, 1
    %p34 = por %p32, %p33
    %p35 = scmp.ne.s32.totalorder %s24, %s25
    %p36 = scmp.eq.s32.totalorder %s16, 0
    %p37 = por %p35, %p36
    %p38 = scmp.ne.s32.totalorder %s24, %s25
    %p39 = scmp.eq.s32.totalorder %s17, 1
    %p40 = por %p38, %p39
    %p42 = scmp.ne.s32.totalorder %s25, %s41
    %p43 = scmp.eq.s32.totalorder %s17, 0
    %p44 = por %p42, %p43
    %s46 = sadd.s32 %s45, 1
    %p49 = scmp.eq.s32.totalorder %s11, 1
    %p50 = scmp.ne.s32.totalorder %s45, %s47
    %p51 = scmp.eq.s32.totalorder %s11, 0
    %p52 = por %p50, %p51
    %p53 = scmp.ne.s32.totalorder %s45, %s47
    %p54 = scmp.eq.s32.totalorder %s16, 1
    %p55 = por %p53, %p54
    %p56 = scmp.ne.s32.totalorder %s47, %s48
    %p57 = scmp.eq.s32.totalorder %s16, 0
    %p58 = por %p56, %p57
    %p59 = scmp.ne.s32.totalorder %s47, %s48
    %p60 = scmp.eq.s32.totalorder %s17, 1
    %p61 = por %p59, %p60
    %p63 = scmp.ne.s32.totalorder %s48, %s62
    %p64 = scmp.eq.s32.totalorder %s17, 0
    %p65 = por %p63, %p64
    %s67 = sadd.s32 %s66, 1
    %p70 = scmp.eq.s32.totalorder %s11, 1
    %p71 = scmp.ne.s32.totalorder %s66, %s68
    %p72 = scmp.eq.s32.totalorder %s11, 0
    %p73 = por %p71, %p72
    %p74 = scmp.ne.s32.totalorder %s66, %s68
    %p75 = scmp.eq.s32.totalorder %s16, 1
    %p76 = por %p74, %p75
    %p77 = scmp.ne.s32.totalorder %s68, %s69
    %p78 = scmp.eq.s32.totalorder %s16, 0
    %p79 = por %p77, %p78
    %p80 = scmp.ne.s32.totalorder %s68, %s69
    %p81 = scmp.eq.s32.totalorder %s17, 1
    %p82 = por %p80, %p81
    %p84 = scmp.ne.s32.totalorder %s69, %s83
    %p85 = scmp.eq.s32.totalorder %s17, 0
    %p86 = por %p84, %p85
    %s88 = sadd.s32 %s87, 1
    %p91 = scmp.eq.s32.totalorder %s11, 1
    %p92 = scmp.ne.s32.totalorder %s87, %s89
    %p93 = scmp.eq.s32.totalorder %s11, 0
    %p94 = por %p92, %p93
    %p95 = scmp.ne.s32.totalorder %s87, %s89
    %p96 = scmp.eq.s32.totalorder %s16, 1
    %p97 = por %p95, %p96
    %p98 = scmp.ne.s32.totalorder %s89, %s90
    %p99 = scmp.eq.s32.totalorder %s16, 0
    %p100 = por %p98, %p99
    %p101 = scmp.ne.s32.totalorder %s89, %s90
    %p102 = scmp.eq.s32.totalorder %s17, 1
    %p103 = por %p101, %p102
    %p105 = scmp.ne.s32.totalorder %s90, %s104
    %p106 = scmp.eq.s32.totalorder %s17, 0
    %p107 = por %p105, %p106
    %s109 = sadd.s32 %s108, 1
    %p112 = scmp.eq.s32.totalorder %s11, 1
    %p113 = scmp.ne.s32.totalorder %s108, %s110
    %p114 = scmp.eq.s32.totalorder %s11, 0
    %p115 = por %p113, %p114
    %p116 = scmp.ne.s32.totalorder %s108, %s110
    %p117 = scmp.eq.s32.totalorder %s16, 1
    %p118 = por %p116, %p117
    %p119 = scmp.ne.s32.totalorder %s110, %s111
    %p120 = scmp.eq.s32.totalorder %s16, 0
    %p121 = por %p119, %p120
    %p122 = scmp.ne.s32.totalorder %s110, %s111
    %p123 = scmp.eq.s32.totalorder %s17, 1
    %p124 = por %p122, %p123
    %p126 = scmp.ne.s32.totalorder %s111, %s125
    %p127 = scmp.eq.s32.totalorder %s17, 0
    %p128 = por %p126, %p127
    %s129 = ssub.s32 %s11, %s18
    %p130 = scmp.eq.s32.totalorder %s129, 0
    %s132 = sadd.s32 %s131, 1
    %s133 = scalar_select %p130, %s131, %s132
    %p136 = pneg %p130
    %p137 = scmp.eq.s32.totalorder %s11, 1
    %p138 = por %p136, %p137
    %p139 = scmp.ne.s32.totalorder %s131, %s134
    %p140 = scmp.eq.s32.totalorder %s11, 0
    %p141 = por %p139, %p140
    %p142 = scmp.ne.s32.totalorder %s131, %s134
    %p143 = scmp.eq.s32.totalorder %s16, 1
    %p144 = por %p142, %p143
    %p145 = scmp.ne.s32.totalorder %s134, %s135
    %p146 = scmp.eq.s32.totalorder %s16, 0
    %p147 = por %p145, %p146
    %p148 = scmp.ne.s32.totalorder %s134, %s135
    %p149 = scmp.eq.s32.totalorder %s17, 1
    %p150 = por %p148, %p149
    %p152 = scmp.ne.s32.totalorder %s135, %s151
    %p153 = scmp.eq.s32.totalorder %s17, 0
    %p154 = por %p152, %p153
    %p155 = scmp.le.s32.totalorder 1, %s11
    %p156 = scmp.lt.s32.totalorder %s11, 3
    %p157 = pnand %p155, %p156
    %p158 = pneg %p157
    // Predicated region
    $region9: #{bert_with_weight_ce_forward.4} parent=5 // pred_check
      _
    $region10: #{bert_with_weight_ce_forward.4} parent=5 // pred_check_branch
      %160 = sbr.rel (%p157) target = $region12
    $region11: #{bert_with_weight_ce_forward.4} parent=5 // pred_region
      %s161 = ssub.s32 %s11, 1
      // Predicated region
      $region13: #{bert_with_weight_ce_forward.4} parent=11 // pred_check
        %p162 = pneg %p58
      $region14: #{bert_with_weight_ce_forward.4} parent=11 // pred_check_branch
        %164 = sbr.rel (%p162) target = $region16
      $region15: #{bert_with_weight_ce_forward.4} parent=11 // pred_region
        _
      $region16: #{bert_with_weight_ce_forward.4} parent=11 // pred_fallthru
        _
      // Predicated region
      $region17: #{bert_with_weight_ce_forward.4} parent=11 // pred_check
        %p165 = pneg %p79
      $region18: #{bert_with_weight_ce_forward.4} parent=11 // pred_check_branch
        %167 = sbr.rel (%p165) target = $region20
      $region19: #{bert_with_weight_ce_forward.4} parent=11 // pred_region
        _
      $region20: #{bert_with_weight_ce_forward.4} parent=11 // pred_fallthru
        _
      // Predicated region
      $region21: #{bert_with_weight_ce_forward.4} parent=11 // pred_check
        %p168 = pneg %p100
      $region22: #{bert_with_weight_ce_forward.4} parent=11 // pred_check_branch
        %170 = sbr.rel (%p168) target = $region24
      $region23: #{bert_with_weight_ce_forward.4} parent=11 // pred_region
        _
      $region24: #{bert_with_weight_ce_forward.4} parent=11 // pred_fallthru
        _
      // Predicated region
      $region25: #{bert_with_weight_ce_forward.4} parent=11 // pred_check
        %p171 = pneg %p121
      $region26: #{bert_with_weight_ce_forward.4} parent=11 // pred_check_branch
        %173 = sbr.rel (%p171) target = $region28
      $region27: #{bert_with_weight_ce_forward.4} parent=11 // pred_region
        _
      $region28: #{bert_with_weight_ce_forward.4} parent=11 // pred_fallthru
        _
    $region12: #{bert_with_weight_ce_forward.4} parent=5 // pred_fallthru
      _
    %p174 = scmp.lt.s32.totalorder %s11, 2
    // Predicated region
    $region29: #{bert_with_weight_ce_forward.4} parent=5 // pred_check
      %p175 = pneg %p174
    $region30: #{bert_with_weight_ce_forward.4} parent=5 // pred_check_branch
      %177 = sbr.rel (%p175) target = $region32
    $region31: #{bert_with_weight_ce_forward.4} parent=5 // pred_region
      // Predicated region
      $region33: #{bert_with_weight_ce_forward.4} parent=31 // pred_check
        %p178 = pneg %p31
      $region34: #{bert_with_weight_ce_forward.4} parent=31 // pred_check_branch
        %180 = sbr.rel (%p178) target = $region36
      $region35: #{bert_with_weight_ce_forward.4} parent=31 // pred_region
        %p181 = scmp.lt.s32.totalorder %s11, 1
        %s182 = scalar_select %p181, %s11, 1
        %s183 = smul.addr %s182, 8
        %s184 = scalar_lea.vmem %s0, %s183
      $region36: #{bert_with_weight_ce_forward.4} parent=31 // pred_fallthru
        _
    $region32: #{bert_with_weight_ce_forward.4} parent=5 // pred_fallthru
      _
    %p185 = scmp.le.s32.totalorder 1, %s11
    %p186 = scmp.lt.s32.totalorder %s11, 3
    %p187 = pnand %p185, %p186
    %p188 = pneg %p187
    // Predicated region
    $region37: #{bert_with_weight_ce_forward.4} parent=5 // pred_check
      _
    $region38: #{bert_with_weight_ce_forward.4} parent=5 // pred_check_branch
      %190 = sbr.rel (%p187) target = $region40
    $region39: #{bert_with_weight_ce_forward.4} parent=5 // pred_region
      %s191 = ssub.s32 %s11, 1
      %p192 = scmp.lt.s32.totalorder %s16, 1
      %s193 = scalar_select %p192, %s16, 1
      %s194 = smul.addr %s193, 8
      %s195 = scalar_lea.vmem %s0, %s194
      %p196 = pneg %p37
      %p197 = pneg %p34
      %p198 = pneg %p58
      %p199 = pneg %p55
      %p200 = pneg %p79
      %p201 = pneg %p76
      %p202 = pneg %p100
      %p203 = pneg %p97
      %p204 = pneg %p121
      %p205 = pneg %p118
      %p206 = pneg %p147
      %p207 = pneg %p144
      %p208 = scmp.lt.s32.totalorder %s16, 1
      %s209 = scalar_select %p208, %s16, 1
      %s210 = smul.addr %s209, 8
      %s211 = scalar_lea.vmem %s5, %s210
      %p212 = scmp.lt.s32.totalorder %s16, 1
      %s213 = scalar_select %p212, %s16, 1
      %s214 = smul.addr %s213, 8
      %s215 = scalar_lea.vmem %s0, %s214
      %p216 = scmp.lt.s32.totalorder %s16, 1
      %s217 = scalar_select %p216, %s16, 1
      %s218 = smul.addr %s217, 8
      %s219 = scalar_lea.vmem %s5, %s218
      %v220 = vld [vmem:[%s215] sm:$0xff]
      %v221 = vld [vmem:[%s1] sm:$0xff]
      %v222 = vadd.f32 %v220, %v221
      %v223 = vld [vmem:[%s2] sm:$0x1]
      %v225 = vlaneseq
      %v226 = vshrl.u32 %v225, 7
      %v227 = vsub.s32 0, %v226
      %v228 = vrot.slane %v223, %v227
      %v230 = vadd.f32 %v222, %v228
      %v231 = vld [vmem:[%s3] sm:$0x1]
      %v232 = vld [vmem:[%s4] sm:$0x1]
      %vm233 = vcmask 261120
      %v234 = vsel %vm233, %v230, 0.0
      %235 = vadd.xlane.f32.xlu0 %v234
      %v236 = vpop.xlane.xlu0 %235
      %v237 = vrcp.pop 32.0
      %v238 = vmul.f32 %v236, %v237
      %v239 = vsub.f32 %v230, %v238
      %v240 = vmul.f32 %v239, %v239
      %v241 = vsel %vm233, %v240, 0.0
      %242 = vadd.xlane.f32.xlu0 %v241
      %v243 = vpop.xlane.xlu0 %242
      %v244 = vmul.f32 %v243, %v237
      %v245 = vadd.f32 %v244, 1e-12
      %v246 = vrsqrt.pop %v245
      %v247 = vmul.f32 %v239, %v246
      %v249 = vlaneseq
      %v250 = vshrl.u32 %v249, 7
      %v251 = vsub.s32 0, %v250
      %v252 = vrot.slane %v231, %v251
      %v254 = vmul.f32 %v247, %v252
      %v256 = vlaneseq
      %v257 = vshrl.u32 %v256, 7
      %v258 = vsub.s32 0, %v257
      %v259 = vrot.slane %v232, %v258
      %v261 = vadd.f32 %v254, %v259
      %262 = vst.msk [vmem:[%s219] sm:$0xff] %vm233, %v261
      %p263 = scmp.lt.s32.totalorder %s16, 1
      %s264 = scalar_select %p263, %s16, 1
      %s265 = smul.addr %s264, 8
      %s266 = scalar_lea.vmem %s5, %s265
      // Predicated region
      $region41: #{bert_with_weight_ce_forward.4} parent=39 // pred_check
        %p267 = pneg %p144
      $region42: #{bert_with_weight_ce_forward.4} parent=39 // pred_check_branch
        %269 = sbr.rel (%p267) target = $region44
      $region43: #{bert_with_weight_ce_forward.4} parent=39 // pred_region
        _
      $region44: #{bert_with_weight_ce_forward.4} parent=39 // pred_fallthru
        _
    $region40: #{bert_with_weight_ce_forward.4} parent=5 // pred_fallthru
      _
    %p270 = scmp.le.s32.totalorder 2, %s11
    // Predicated region
    $region45: #{bert_with_weight_ce_forward.4} parent=5 // pred_check
      %p271 = pneg %p270
    $region46: #{bert_with_weight_ce_forward.4} parent=5 // pred_check_branch
      %273 = sbr.rel (%p271) target = $region48
    $region47: #{bert_with_weight_ce_forward.4} parent=5 // pred_region
      %s274 = ssub.s32 %s11, 2
      // Predicated region
      $region49: #{bert_with_weight_ce_forward.4} parent=47 // pred_check
        %p275 = pneg %p150
      $region50: #{bert_with_weight_ce_forward.4} parent=47 // pred_check_branch
        %277 = sbr.rel (%p275) target = $region52
      $region51: #{bert_with_weight_ce_forward.4} parent=47 // pred_region
        %p278 = scmp.lt.s32.totalorder %s17, 1
        %s279 = scalar_select %p278, %s17, 1
        %s280 = smul.addr %s279, 8
        %s281 = scalar_lea.vmem %s5, %s280
      $region52: #{bert_with_weight_ce_forward.4} parent=47 // pred_fallthru
        _
    $region48: #{bert_with_weight_ce_forward.4} parent=5 // pred_fallthru
      _
  $region6: #{bert_with_weight_ce_forward.4} parent=0 // loop_footer
    %s15 = sadd.s32 1, %s11
  $region7: #{bert_with_weight_ce_forward.4} parent=0 // loop_footer_branch
    %10 = sbr.rel target = $region3
  $region8: #{bert_with_weight_ce_forward.4} parent=0 // loop_exit
    _

// kernel: bert_with_weight_ce_forward.7
$region0: #{bert_with_weight_ce_forward.7}
  #allocation0 [shape = 'u32[]', space=smem, size = 0x4, offset = 0x4, fixed_abs, tag = 'smem constant byte address 0x4 - core index']
  #allocation1 [shape = 'u32[144,128]{1,0:T(1,128)}', space=vmem, size = 0x12000, scoped, tag = 'internal scratch']
  %s0 = inlined_call_operand.vmem [shape: f32[2,32], index: 0, kind: input, shape index: {}]
  %s1 = inlined_call_operand.vmem [shape: f32[32,32], index: 1, kind: input, shape index: {}]
  %s2 = inlined_call_operand.vmem [shape: f32[1,32], index: 2, kind: input, shape index: {}]
  %s3 = inlined_call_operand.vmem [shape: f32[32,128], index: 3, kind: input, shape index: {}]
  %s4 = inlined_call_operand.vmem [shape: f32[1,128], index: 4, kind: input, shape index: {}]
  %s5 = inlined_call_operand.vmem [shape: f32[1,128], index: 5, kind: input, shape index: {}]
  %s6 = inlined_call_operand.vmem [shape: s32[2], index: 6, kind: input, shape index: {}]
  %s7 = inlined_call_operand.hbm [shape: f32[2,128], index: 7, kind: output, shape index: {0}]
  %s8 = inlined_call_operand.hbm [shape: f32[1,1], index: 8, kind: output, shape index: {1}]
  %9 = xla_tuple %s7, %s8
  %s10 = sld [smem:[#allocation0]]
  $region50: #{bert_with_weight_ce_forward.7} parent=0
    _
  %s12 = ssub.s32 1, %s10
  %s13 = scalar_select 0, %s12, %s10
  $region1: #{bert_with_weight_ce_forward.7} parent=0
    #allocation2 [shape = 'u8[512]{0}', space=smem, size = 0x200, scoped, tag = 'input window, operand 6, single buffered']
    #allocation3 [shape = 's32[1]{0}', space=sflag, size = 0x4, scoped, tag = 'scoped memory for bert_with_weight_ce_forward.7']
    #allocation4 [shape = 's32[1]{0}', space=sflag, size = 0x4, scoped, tag = 'scoped memory for bert_with_weight_ce_forward.7']
    #allocation5 [shape = 'u8[1024]{0}', space=vmem, size = 0x400, scoped, tag = 'output window, operand 0, single buffered']
    #allocation6 [shape = 'u8[512]{0}', space=vmem, size = 0x400, scoped, tag = 'output window, operand 1, single buffered']
    #allocation7 [shape = 's32[1]{0}', space=sflag, size = 0x4, scoped, tag = 'scoped memory for bert_with_weight_ce_forward.7']
    %14 = vsyncpa [#allocation4], 0
    %15 = vsyncpa [#allocation3], 0
    %16 = vsyncpa [#allocation7], 0
    // Predicated region
    $region2: #{bert_with_weight_ce_forward.7} parent=1 // pred_check
      _
    $region3: #{bert_with_weight_ce_forward.7} parent=1 // pred_check_branch
      %18 = sbr.rel (0) target = $region5
    $region4: #{bert_with_weight_ce_forward.7} parent=1 // pred_region
      _
    $region5: #{bert_with_weight_ce_forward.7} parent=1 // pred_fallthru
      _
    // Predicated region
    $region6: #{bert_with_weight_ce_forward.7} parent=1 // pred_check
      _
    $region7: #{bert_with_weight_ce_forward.7} parent=1 // pred_check_branch
      %20 = sbr.rel (0) target = $region9
    $region8: #{bert_with_weight_ce_forward.7} parent=1 // pred_region
      _
    $region9: #{bert_with_weight_ce_forward.7} parent=1 // pred_fallthru
      _
    // Predicated region
    $region10: #{bert_with_weight_ce_forward.7} parent=1 // pred_check
      _
    $region11: #{bert_with_weight_ce_forward.7} parent=1 // pred_check_branch
      %22 = sbr.rel (0) target = $region13
    $region12: #{bert_with_weight_ce_forward.7} parent=1 // pred_region
      _
    $region13: #{bert_with_weight_ce_forward.7} parent=1 // pred_fallthru
      _
    // Predicated region
    $region14: #{bert_with_weight_ce_forward.7} parent=1 // pred_check
      _
    $region15: #{bert_with_weight_ce_forward.7} parent=1 // pred_check_branch
      %24 = sbr.rel (0) target = $region17
    $region16: #{bert_with_weight_ce_forward.7} parent=1 // pred_region
      _
    $region17: #{bert_with_weight_ce_forward.7} parent=1 // pred_fallthru
      _
    // Predicated region
    $region18: #{bert_with_weight_ce_forward.7} parent=1 // pred_check
      _
    $region19: #{bert_with_weight_ce_forward.7} parent=1 // pred_check_branch
      %26 = sbr.rel (0) target = $region21
    $region20: #{bert_with_weight_ce_forward.7} parent=1 // pred_region
      _
    $region21: #{bert_with_weight_ce_forward.7} parent=1 // pred_fallthru
      _
    // Predicated region
    $region22: #{bert_with_weight_ce_forward.7} parent=1 // pred_check
      _
    $region23: #{bert_with_weight_ce_forward.7} parent=1 // pred_check_branch
      %28 = sbr.rel (0) target = $region25
    $region24: #{bert_with_weight_ce_forward.7} parent=1 // pred_region
      _
    $region25: #{bert_with_weight_ce_forward.7} parent=1 // pred_fallthru
      _
    // Predicated region
    $region26: #{bert_with_weight_ce_forward.7} parent=1 // pred_check
      _
    $region27: #{bert_with_weight_ce_forward.7} parent=1 // pred_check_branch
      %30 = sbr.rel (0) target = $region29
    $region28: #{bert_with_weight_ce_forward.7} parent=1 // pred_region
      %s32 = ssub.s32 16, 16
      %33 = vsyncadd [#allocation4], %s32
      %s35 = sshll.u32 %s6, 4
      %s36 = int_to_ptr.vmem [resolvable:$true] %s35
      %38 = dma.vmem_to_smem %s36, 16, [#allocation2], [#allocation4]
    $region29: #{bert_with_weight_ce_forward.7} parent=1 // pred_fallthru
      _
    // Predicated region
    $region30: #{bert_with_weight_ce_forward.7} parent=1 // pred_check
      _
    $region31: #{bert_with_weight_ce_forward.7} parent=1 // pred_check_branch
      %40 = sbr.rel (0) target = $region33
    $region32: #{bert_with_weight_ce_forward.7} parent=1 // pred_region
      %41 = dma.done [#allocation4], 16
    $region33: #{bert_with_weight_ce_forward.7} parent=1 // pred_fallthru
      _
    %42 = sfence
    %v43 = vld [vmem:[%s0] sm:$0x3]
    %v44 = vld [vmem:[%s1] sm:$0xff]
    %v45 = vld [vmem:[%s1 + $0x8] sm:$0xff]
    %v46 = vld [vmem:[%s1 + $0x10] sm:$0xff]
    %v47 = vld [vmem:[%s1 + $0x18] sm:$0xff]
    %v48 = vld [vmem:[%s2] sm:$0x1]
    %v50 = vlaneseq
    %v51 = vshrl.u32 %v50, 7
    %v52 = vsub.s32 0, %v51
    %v53 = vrot.slane %v48, %v52
    %vm55 = vcmask 261120
    %v57 = vsel %vm55, %v43, 0
    %59 = vmatprep.subr.mxu0 0.0
    %60 = vmatpush1.msra.mxu0 0.0
    %61 = vmatprep.subr.mxu0 0.0
    %62 = vmatpush1.msra.mxu0 0.0
    %63 = vmatprep.subr.mxu0 0.0
    %64 = vmatpush1.msra.mxu0 0.0
    %65 = vmatprep.subr.mxu0 0.0
    %66 = vmatpush1.msra.mxu0 0.0
    %67 = vmatprep.subr.mxu0 0.0
    %68 = vmatpush1.msra.mxu0 0.0
    %69 = vmatprep.subr.mxu0 0.0
    %70 = vmatpush1.msra.mxu0 0.0
    %71 = vmatprep.subr.mxu0 0.0
    %72 = vmatpush1.msra.mxu0 0.0
    %73 = vmatprep.subr.mxu0 0.0
    %74 = vmatpush1.msra.mxu0 0.0
    %75 = vmatprep.subr.mxu0 0.0
    %76 = vmatpush1.msra.mxu0 0.0
    %77 = vmatprep.subr.mxu0 0.0
    %78 = vmatpush1.msra.mxu0 0.0
    %79 = vmatprep.subr.mxu0 0.0
    %80 = vmatpush1.msra.mxu0 0.0
    %81 = vmatprep.subr.mxu0 0.0
    %82 = vmatpush1.msra.mxu0 0.0
    %83 = vmatprep.subr.mxu0 0.0
    %84 = vmatpush1.msra.mxu0 %v47
    %85 = vmatprep.subr.mxu0 0.0
    %86 = vmatpush1.msra.mxu0 %v46
    %87 = vmatprep.subr.mxu0 0.0
    %88 = vmatpush1.msra.mxu0 %v45
    %89 = vmatprep.subr.mxu0 0.0
    %90 = vmatpush1.msra.mxu0 %v44
    %91 = vmatprep.subr.mxu0 0.0
    %92 = vmatpush2.msra.mxu0 0.0
    %93 = vmatprep.subr.mxu0 0.0
    %94 = vmatpush2.msra.mxu0 0.0
    %95 = vmatprep.subr.mxu0 0.0
    %96 = vmatpush2.msra.mxu0 0.0
    %97 = vmatprep.subr.mxu0 0.0
    %98 = vmatpush2.msra.mxu0 0.0
    %99 = vmatprep.subr.mxu0 0.0
    %100 = vmatpush2.msra.mxu0 0.0
    %101 = vmatprep.subr.mxu0 0.0
    %102 = vmatpush2.msra.mxu0 0.0
    %103 = vmatprep.subr.mxu0 0.0
    %104 = vmatpush2.msra.mxu0 0.0
    %105 = vmatprep.subr.mxu0 0.0
    %106 = vmatpush2.msra.mxu0 0.0
    %107 = vmatprep.subr.mxu0 0.0
    %108 = vmatpush2.msra.mxu0 0.0
    %109 = vmatprep.subr.mxu0 0.0
    %110 = vmatpush2.msra.mxu0 0.0
    %111 = vmatprep.subr.mxu0 0.0
    %112 = vmatpush2.msra.mxu0 0.0
    %113 = vmatprep.subr.mxu0 0.0
    %114 = vmatpush2.msra.mxu0 0.0
    %115 = vmatprep.subr.mxu0 0.0
    %116 = vmatpush2.msra.mxu0 0.0
    %117 = vmatprep.subr.mxu0 0.0
    %118 = vmatpush2.msra.mxu0 0.0
    %119 = vmatprep.subr.mxu0 0.0
    %120 = vmatpush2.msra.mxu0 0.0
    %121 = vmatprep.subr.mxu0 0.0
    %122 = vmatpush2.msra.mxu0 0.0
    %123 = vmatprep.mubr.f32.mxu0 0.0
    %124 = vmatmul.mubr.f32.gmra.mxu0 %v57
    %v125 = vpop.f32.mrf.mxu0
    %v126 = vadd.f32 %v53, %v125
    %v127 = vpop.f32.mrf.mxu0
    %128 = vdwg.mxu0
    %v129 = vtanh.pop %v126
    %v130 = vld [vmem:[%s3] sm:$0xff]
    %v131 = vld [vmem:[%s3 + $0x8] sm:$0xff]
    %v132 = vld [vmem:[%s3 + $0x10] sm:$0xff]
    %v133 = vld [vmem:[%s3 + $0x18] sm:$0xff]
    %v134 = vld [vmem:[%s4] sm:$0x1]
    %v136 = vlaneseq
    %v137 = vshrl.u32 %v136, 7
    %v138 = vsub.s32 0, %v137
    %v139 = vrot.slane %v134, %v138
    %v142 = vsel %vm55, %v129, 0
    %144 = vmatprep.subr.mxu0 0.0
    %145 = vmatpush1.msra.mxu0 0.0
    %146 = vmatprep.subr.mxu0 0.0
    %147 = vmatpush1.msra.mxu0 0.0
    %148 = vmatprep.subr.mxu0 0.0
    %149 = vmatpush1.msra.mxu0 0.0
    %150 = vmatprep.subr.mxu0 0.0
    %151 = vmatpush1.msra.mxu0 0.0
    %152 = vmatprep.subr.mxu0 0.0
    %153 = vmatpush1.msra.mxu0 0.0
    %154 = vmatprep.subr.mxu0 0.0
    %155 = vmatpush1.msra.mxu0 0.0
    %156 = vmatprep.subr.mxu0 0.0
    %157 = vmatpush1.msra.mxu0 0.0
    %158 = vmatprep.subr.mxu0 0.0
    %159 = vmatpush1.msra.mxu0 0.0
    %160 = vmatprep.subr.mxu0 0.0
    %161 = vmatpush1.msra.mxu0 0.0
    %162 = vmatprep.subr.mxu0 0.0
    %163 = vmatpush1.msra.mxu0 0.0
    %164 = vmatprep.subr.mxu0 0.0
    %165 = vmatpush1.msra.mxu0 0.0
    %166 = vmatprep.subr.mxu0 0.0
    %167 = vmatpush1.msra.mxu0 0.0
    %168 = vmatprep.subr.mxu0 0.0
    %169 = vmatpush1.msra.mxu0 %v133
    %170 = vmatprep.subr.mxu0 0.0
    %171 = vmatpush1.msra.mxu0 %v132
    %172 = vmatprep.subr.mxu0 0.0
    %173 = vmatpush1.msra.mxu0 %v131
    %174 = vmatprep.subr.mxu0 0.0
    %175 = vmatpush1.msra.mxu0 %v130
    %176 = vmatprep.subr.mxu0 0.0
    %177 = vmatpush2.msra.mxu0 0.0
    %178 = vmatprep.subr.mxu0 0.0
    %179 = vmatpush2.msra.mxu0 0.0
    %180 = vmatprep.subr.mxu0 0.0
    %181 = vmatpush2.msra.mxu0 0.0
    %182 = vmatprep.subr.mxu0 0.0
    %183 = vmatpush2.msra.mxu0 0.0
    %184 = vmatprep.subr.mxu0 0.0
    %185 = vmatpush2.msra.mxu0 0.0
    %186 = vmatprep.subr.mxu0 0.0
    %187 = vmatpush2.msra.mxu0 0.0
    %188 = vmatprep.subr.mxu0 0.0
    %189 = vmatpush2.msra.mxu0 0.0
    %190 = vmatprep.subr.mxu0 0.0
    %191 = vmatpush2.msra.mxu0 0.0
    %192 = vmatprep.subr.mxu0 0.0
    %193 = vmatpush2.msra.mxu0 0.0
    %194 = vmatprep.subr.mxu0 0.0
    %195 = vmatpush2.msra.mxu0 0.0
    %196 = vmatprep.subr.mxu0 0.0
    %197 = vmatpush2.msra.mxu0 0.0
    %198 = vmatprep.subr.mxu0 0.0
    %199 = vmatpush2.msra.mxu0 0.0
    %200 = vmatprep.subr.mxu0 0.0
    %201 = vmatpush2.msra.mxu0 0.0
    %202 = vmatprep.subr.mxu0 0.0
    %203 = vmatpush2.msra.mxu0 0.0
    %204 = vmatprep.subr.mxu0 0.0
    %205 = vmatpush2.msra.mxu0 0.0
    %206 = vmatprep.subr.mxu0 0.0
    %207 = vmatpush2.msra.mxu0 0.0
    %208 = vmatprep.mubr.f32.mxu0 0.0
    %209 = vmatmul.mubr.f32.gmra.mxu0 %v142
    %v210 = vpop.f32.mrf.mxu0
    %v211 = vadd.f32 %v139, %v210
    %v212 = vpop.f32.mrf.mxu0
    %213 = vdwg.mxu0
    %214 = vst [vmem:[#allocation5] sm:$0x3] %v211
    %vm215 = vcmask 1041408
    %v216 = vsel %vm215, %v211, -inf
    %217 = vmax.xlane.f32.xlu0 %v216
    %v218 = vpop.xlane.xlu0 %217
    %v219 = vsub.f32 %v211, %v218
    %v220 = vmul.f32 %v219, 1.442695
    %v221 = vpow.pop %v220
    %v222 = vsel %vm215, %v221, 0.0
    %223 = vadd.xlane.f32.xlu0 %v222
    %v224 = vpop.xlane.xlu0 %223
    %v225 = vlog2.pop %v224
    %v226 = vmul.f32 %v225, 0.6931472
    %v227 = vadd.f32 %v226, %v218
    %v228 = vlaneseq
    %v229 = vand.u32 %v228, 127
    %v230 = vld [vmem:[%s5] sm:$0x1]
    %s231 = sld [smem:[#allocation2]]
    %v232 = vstv %s231
    %vm233 = vcmp.eq.s32.totalorder %v229, %v232
    %v234 = vsel %vm233, 1, 0
    %v235 = vcvt.s32.f32 %v234
    %v236 = vmul.f32 %v235, %v211
    %vm237 = vcmask 1040384
    %v238 = vsel %vm237, %v236, 0.0
    %239 = vadd.xlane.f32.xlu0 %v238
    %v240 = vpop.xlane.xlu0 %239
    %v241 = vmul.f32 %v235, %v230
    %v242 = vsel %vm237, %v241, 0.0
    %243 = vadd.xlane.f32.xlu0 %v242
    %v244 = vpop.xlane.xlu0 %243
    %v245 = vsub.f32 %v227, %v240
    %v246 = vmul.f32 %v244, %v245
    %v247 = vadd.f32 %v246, 0.0
    %v248 = vadd.f32 %v244, 0.0
    %s249 = sld [smem:[#allocation2 + $0x1]]
    %v250 = vstv %s249
    %vm251 = vcmp.eq.s32.totalorder %v229, %v250
    %v252 = vsel %vm251, 1, 0
    %v253 = vcvt.s32.f32 %v252
    %v254 = vmul.f32 %v253, %v211
    %vm255 = vcmask 1041409
    %v256 = vsel %vm255, %v254, 0.0
    %257 = vadd.xlane.f32.xlu0 %v256
    %v258 = vpop.xlane.xlu0 %257
    %v259 = vmul.f32 %v253, %v230
    %v260 = vsel %vm237, %v259, 0.0
    %261 = vadd.xlane.f32.xlu0 %v260
    %v262 = vpop.xlane.xlu0 %261
    %v263 = vsub.f32 %v227, %v258
    %v265 = vrot.slane %v263, 1
    %v267 = vmul.f32 %v262, %v265
    %v268 = vadd.f32 %v247, %v267
    %v269 = vadd.f32 %v248, %v262
    %v270 = vrcp.pop %v269
    %v271 = vmul.f32 %v268, %v270
    %vm272 = vcmask 0
    %273 = vst.msk [vmem:[#allocation6] sm:$0x1] %vm272, %v271
    // Predicated region
    $region34: #{bert_with_weight_ce_forward.7} parent=1 // pred_check
      _
    $region35: #{bert_with_weight_ce_forward.7} parent=1 // pred_check_branch
      %275 = sbr.rel (0) target = $region37
    $region36: #{bert_with_weight_ce_forward.7} parent=1 // pred_region
      %s277 = ssub.s32 32, 32
      %278 = vsyncadd [#allocation3], %s277
      %s280 = sshll.u32 [#allocation5], 4
      %s281 = int_to_ptr.vmem [resolvable:$true] %s280
      %283 = dma.vmem_to_hbm [thread:$0]  %s281, 32, %s7, [#allocation3]
    $region37: #{bert_with_weight_ce_forward.7} parent=1 // pred_fallthru
      _
    // Predicated region
    $region38: #{bert_with_weight_ce_forward.7} parent=1 // pred_check
      _
    $region39: #{bert_with_weight_ce_forward.7} parent=1 // pred_check_branch
      %285 = sbr.rel (0) target = $region41
    $region40: #{bert_with_weight_ce_forward.7} parent=1 // pred_region
      %s287 = ssub.s32 16, 16
      %288 = vsyncadd [#allocation7], %s287
      %s290 = sshll.u32 [#allocation6], 4
      %s291 = int_to_ptr.vmem [resolvable:$true] %s290
      %293 = dma.vmem_to_hbm [thread:$0]  %s291, 16, %s8, [#allocation7]
    $region41: #{bert_with_weight_ce_forward.7} parent=1 // pred_fallthru
      _
    // Predicated region
    $region42: #{bert_with_weight_ce_forward.7} parent=1 // pred_check
      _
    $region43: #{bert_with_weight_ce_forward.7} parent=1 // pred_check_branch
      %295 = sbr.rel (0) target = $region45
    $region44: #{bert_with_weight_ce_forward.7} parent=1 // pred_region
      %296 = dma.done [#allocation3], 32
    $region45: #{bert_with_weight_ce_forward.7} parent=1 // pred_fallthru
      _
    // Predicated region
    $region46: #{bert_with_weight_ce_forward.7} parent=1 // pred_check
      _
    $region47: #{bert_with_weight_ce_forward.7} parent=1 // pred_check_branch
      %298 = sbr.rel (0) target = $region49
    $region48: #{bert_with_weight_ce_forward.7} parent=1 // pred_region
      %299 = dma.done [#allocation7], 16
    $region49: #{bert_with_weight_ce_forward.7} parent=1 // pred_fallthru
      _
    %300 = vsyncpa [#allocation3], 1
    %301 = vsyncpa [#allocation7], 1
    %302 = vsyncpa [#allocation4], 1

// kernel: bert_with_weight_ce_forward.5
$region0: #{bert_with_weight_ce_forward.5}
  #allocation0 [shape = 'u32[]', space=smem, size = 0x4, offset = 0x4, fixed_abs, tag = 'smem constant byte address 0x4 - core index']
  #allocation1 [shape = 'u32[144,128]{1,0:T(1,128)}', space=vmem, size = 0x12000, scoped, tag = 'internal scratch']
  %s0 = inlined_call_operand.vmem [shape: f32[16,32], index: 0, kind: input, shape index: {}]
  %s1 = inlined_call_operand.vmem [shape: f32[2,1,8], index: 1, kind: input, shape index: {}]
  %s2 = inlined_call_operand.vmem [shape: f32[6,32,16], index: 2, kind: input, shape index: {}]
  %s3 = inlined_call_operand.vmem [shape: f32[6,1,16], index: 3, kind: input, shape index: {}]
  %s4 = inlined_call_operand.vmem [shape: f32[2,16,32], index: 4, kind: input, shape index: {}]
  %s5 = inlined_call_operand.vmem [shape: f32[1,32], index: 5, kind: input, shape index: {}]
  %s6 = inlined_call_operand.vmem [shape: f32[1,32], index: 6, kind: input, shape index: {}]
  %s7 = inlined_call_operand.vmem [shape: f32[1,32], index: 7, kind: input, shape index: {}]
  %s8 = inlined_call_operand.vmem [shape: f32[32,64], index: 8, kind: input, shape index: {}]
  %s9 = inlined_call_operand.vmem [shape: f32[1,64], index: 9, kind: input, shape index: {}]
  %s10 = inlined_call_operand.vmem [shape: f32[64,32], index: 10, kind: input, shape index: {}]
  %s11 = inlined_call_operand.vmem [shape: f32[1,32], index: 11, kind: input, shape index: {}]
  %s12 = inlined_call_operand.vmem [shape: f32[1,32], index: 12, kind: input, shape index: {}]
  %s13 = inlined_call_operand.vmem [shape: f32[1,32], index: 13, kind: input, shape index: {}]
  %s14 = inlined_call_operand.vmem [shape: f32[16,32], index: 14, kind: output, shape index: {}]
  %s15 = sld [smem:[#allocation0]]
  $region89: #{bert_with_weight_ce_forward.5} parent=0
    _
  %s17 = ssub.s32 1, %s15
  %s18 = scalar_select 0, %s17, %s15
  loop: start=0, step=1, limit=4
  $region2: #{bert_with_weight_ce_forward.5} parent=0 // loop_pre_header
    _
  $region3: #{bert_with_weight_ce_forward.5} parent=0 // loop_header
    %s20 = sphi 0, %s24
    %p21 = scmp.ge.s32.totalorder %s20, 4
    %s30 = sphi 0, %s32
    %s33 = sphi 0, %s30
    %s34 = sphi 0, %s33
    %s50 = sphi 0, %s34
    %s56 = sphi 0, %s58
    %s59 = sphi 0, %s56
    %s60 = sphi 0, %s59
    %s76 = sphi 0, %s60
    %s80 = sphi 0, %s80
    %s82 = sphi 0, %s80
    %s83 = sphi 0, %s82
    %s97 = sphi 0, %s83
    %s101 = sphi 0, %s101
    %s103 = sphi 0, %s101
    %s104 = sphi 0, %s103
    %s118 = sphi 0, %s104
    %s122 = sphi 0, %s122
    %s124 = sphi 0, %s122
    %s125 = sphi 0, %s124
    %s139 = sphi 0, %s125
    %s143 = sphi 0, %s143
    %s145 = sphi 0, %s143
    %s146 = sphi 0, %s145
    %s160 = sphi 0, %s146
    %s164 = sphi 0, %s164
    %s166 = sphi 0, %s164
    %s167 = sphi 0, %s166
    %s181 = sphi 0, %s167
    %s185 = sphi 0, %s185
    %s187 = sphi 0, %s185
    %s188 = sphi 0, %s187
    %s202 = sphi 0, %s188
    %s206 = sphi 0, %s206
    %s208 = sphi 0, %s206
    %s209 = sphi 0, %s208
    %s223 = sphi 0, %s209
    %s227 = sphi 0, %s227
    %s229 = sphi 0, %s227
    %s230 = sphi 0, %s229
    %s244 = sphi 0, %s230
    %s248 = sphi 0, %s248
    %s250 = sphi 0, %s248
    %s251 = sphi 0, %s250
    %s265 = sphi 0, %s251
    %s269 = sphi 0, %s269
    %s271 = sphi 0, %s269
    %s272 = sphi 0, %s271
    %s286 = sphi 0, %s272
    %s290 = sphi 0, %s290
    %s292 = sphi 0, %s290
    %s293 = sphi 0, %s292
    %s307 = sphi 0, %s293
    %s311 = sphi 0, %s311
    %s313 = sphi 0, %s311
    %s314 = sphi 0, %s313
    %s328 = sphi 0, %s314
    %s334 = sphi 0, %s336
    %s337 = sphi 0, %s334
    %s338 = sphi 0, %s337
    %s354 = sphi 0, %s338
  $region4: #{bert_with_weight_ce_forward.5} parent=0 // loop_header_branch
    %23 = sbr.rel (%p21) target = $region8
  $region5: #{bert_with_weight_ce_forward.5} parent=0 // loop_body
    %s25 = ssub.s32 %s20, 1
    %s26 = ssub.s32 %s20, 2
    %s27 = sadd.s32 %s20, 1
    %s28 = ssub.s32 %s20, %s27
    %p29 = scmp.eq.s32.totalorder %s28, 0
    %s31 = sadd.s32 %s30, 1
    %s32 = scalar_select %p29, %s30, %s31
    %p35 = pneg %p29
    %p36 = scmp.eq.s32.totalorder %s20, 1
    %p37 = por %p35, %p36
    %p38 = scmp.ne.s32.totalorder %s30, %s33
    %p39 = scmp.eq.s32.totalorder %s20, 0
    %p40 = por %p38, %p39
    %p41 = scmp.ne.s32.totalorder %s30, %s33
    %p42 = scmp.eq.s32.totalorder %s25, 1
    %p43 = por %p41, %p42
    %p44 = scmp.ne.s32.totalorder %s33, %s34
    %p45 = scmp.eq.s32.totalorder %s25, 0
    %p46 = por %p44, %p45
    %p47 = scmp.ne.s32.totalorder %s33, %s34
    %p48 = scmp.eq.s32.totalorder %s26, 1
    %p49 = por %p47, %p48
    %p51 = scmp.ne.s32.totalorder %s34, %s50
    %p52 = scmp.eq.s32.totalorder %s26, 0
    %p53 = por %p51, %p52
    %s54 = ssub.s32 %s20, %s27
    %p55 = scmp.eq.s32.totalorder %s54, 0
    %s57 = sadd.s32 %s56, 1
    %s58 = scalar_select %p55, %s56, %s57
    %p61 = pneg %p55
    %p62 = scmp.eq.s32.totalorder %s20, 1
    %p63 = por %p61, %p62
    %p64 = scmp.ne.s32.totalorder %s56, %s59
    %p65 = scmp.eq.s32.totalorder %s20, 0
    %p66 = por %p64, %p65
    %p67 = scmp.ne.s32.totalorder %s56, %s59
    %p68 = scmp.eq.s32.totalorder %s25, 1
    %p69 = por %p67, %p68
    %p70 = scmp.ne.s32.totalorder %s59, %s60
    %p71 = scmp.eq.s32.totalorder %s25, 0
    %p72 = por %p70, %p71
    %p73 = scmp.ne.s32.totalorder %s59, %s60
    %p74 = scmp.eq.s32.totalorder %s26, 1
    %p75 = por %p73, %p74
    %p77 = scmp.ne.s32.totalorder %s60, %s76
    %p78 = scmp.eq.s32.totalorder %s26, 0
    %p79 = por %p77, %p78
    %s81 = sadd.s32 %s80, 1
    %p84 = scmp.eq.s32.totalorder %s20, 1
    %p85 = scmp.ne.s32.totalorder %s80, %s82
    %p86 = scmp.eq.s32.totalorder %s20, 0
    %p87 = por %p85, %p86
    %p88 = scmp.ne.s32.totalorder %s80, %s82
    %p89 = scmp.eq.s32.totalorder %s25, 1
    %p90 = por %p88, %p89
    %p91 = scmp.ne.s32.totalorder %s82, %s83
    %p92 = scmp.eq.s32.totalorder %s25, 0
    %p93 = por %p91, %p92
    %p94 = scmp.ne.s32.totalorder %s82, %s83
    %p95 = scmp.eq.s32.totalorder %s26, 1
    %p96 = por %p94, %p95
    %p98 = scmp.ne.s32.totalorder %s83, %s97
    %p99 = scmp.eq.s32.totalorder %s26, 0
    %p100 = por %p98, %p99
    %s102 = sadd.s32 %s101, 1
    %p105 = scmp.eq.s32.totalorder %s20, 1
    %p106 = scmp.ne.s32.totalorder %s101, %s103
    %p107 = scmp.eq.s32.totalorder %s20, 0
    %p108 = por %p106, %p107
    %p109 = scmp.ne.s32.totalorder %s101, %s103
    %p110 = scmp.eq.s32.totalorder %s25, 1
    %p111 = por %p109, %p110
    %p112 = scmp.ne.s32.totalorder %s103, %s104
    %p113 = scmp.eq.s32.totalorder %s25, 0
    %p114 = por %p112, %p113
    %p115 = scmp.ne.s32.totalorder %s103, %s104
    %p116 = scmp.eq.s32.totalorder %s26, 1
    %p117 = por %p115, %p116
    %p119 = scmp.ne.s32.totalorder %s104, %s118
    %p120 = scmp.eq.s32.totalorder %s26, 0
    %p121 = por %p119, %p120
    %s123 = sadd.s32 %s122, 1
    %p126 = scmp.eq.s32.totalorder %s20, 1
    %p127 = scmp.ne.s32.totalorder %s122, %s124
    %p128 = scmp.eq.s32.totalorder %s20, 0
    %p129 = por %p127, %p128
    %p130 = scmp.ne.s32.totalorder %s122, %s124
    %p131 = scmp.eq.s32.totalorder %s25, 1
    %p132 = por %p130, %p131
    %p133 = scmp.ne.s32.totalorder %s124, %s125
    %p134 = scmp.eq.s32.totalorder %s25, 0
    %p135 = por %p133, %p134
    %p136 = scmp.ne.s32.totalorder %s124, %s125
    %p137 = scmp.eq.s32.totalorder %s26, 1
    %p138 = por %p136, %p137
    %p140 = scmp.ne.s32.totalorder %s125, %s139
    %p141 = scmp.eq.s32.totalorder %s26, 0
    %p142 = por %p140, %p141
    %s144 = sadd.s32 %s143, 1
    %p147 = scmp.eq.s32.totalorder %s20, 1
    %p148 = scmp.ne.s32.totalorder %s143, %s145
    %p149 = scmp.eq.s32.totalorder %s20, 0
    %p150 = por %p148, %p149
    %p151 = scmp.ne.s32.totalorder %s143, %s145
    %p152 = scmp.eq.s32.totalorder %s25, 1
    %p153 = por %p151, %p152
    %p154 = scmp.ne.s32.totalorder %s145, %s146
    %p155 = scmp.eq.s32.totalorder %s25, 0
    %p156 = por %p154, %p155
    %p157 = scmp.ne.s32.totalorder %s145, %s146
    %p158 = scmp.eq.s32.totalorder %s26, 1
    %p159 = por %p157, %p158
    %p161 = scmp.ne.s32.totalorder %s146, %s160
    %p162 = scmp.eq.s32.totalorder %s26, 0
    %p163 = por %p161, %p162
    %s165 = sadd.s32 %s164, 1
    %p168 = scmp.eq.s32.totalorder %s20, 1
    %p169 = scmp.ne.s32.totalorder %s164, %s166
    %p170 = scmp.eq.s32.totalorder %s20, 0
    %p171 = por %p169, %p170
    %p172 = scmp.ne.s32.totalorder %s164, %s166
    %p173 = scmp.eq.s32.totalorder %s25, 1
    %p174 = por %p172, %p173
    %p175 = scmp.ne.s32.totalorder %s166, %s167
    %p176 = scmp.eq.s32.totalorder %s25, 0
    %p177 = por %p175, %p176
    %p178 = scmp.ne.s32.totalorder %s166, %s167
    %p179 = scmp.eq.s32.totalorder %s26, 1
    %p180 = por %p178, %p179
    %p182 = scmp.ne.s32.totalorder %s167, %s181
    %p183 = scmp.eq.s32.totalorder %s26, 0
    %p184 = por %p182, %p183
    %s186 = sadd.s32 %s185, 1
    %p189 = scmp.eq.s32.totalorder %s20, 1
    %p190 = scmp.ne.s32.totalorder %s185, %s187
    %p191 = scmp.eq.s32.totalorder %s20, 0
    %p192 = por %p190, %p191
    %p193 = scmp.ne.s32.totalorder %s185, %s187
    %p194 = scmp.eq.s32.totalorder %s25, 1
    %p195 = por %p193, %p194
    %p196 = scmp.ne.s32.totalorder %s187, %s188
    %p197 = scmp.eq.s32.totalorder %s25, 0
    %p198 = por %p196, %p197
    %p199 = scmp.ne.s32.totalorder %s187, %s188
    %p200 = scmp.eq.s32.totalorder %s26, 1
    %p201 = por %p199, %p200
    %p203 = scmp.ne.s32.totalorder %s188, %s202
    %p204 = scmp.eq.s32.totalorder %s26, 0
    %p205 = por %p203, %p204
    %s207 = sadd.s32 %s206, 1
    %p210 = scmp.eq.s32.totalorder %s20, 1
    %p211 = scmp.ne.s32.totalorder %s206, %s208
    %p212 = scmp.eq.s32.totalorder %s20, 0
    %p213 = por %p211, %p212
    %p214 = scmp.ne.s32.totalorder %s206, %s208
    %p215 = scmp.eq.s32.totalorder %s25, 1
    %p216 = por %p214, %p215
    %p217 = scmp.ne.s32.totalorder %s208, %s209
    %p218 = scmp.eq.s32.totalorder %s25, 0
    %p219 = por %p217, %p218
    %p220 = scmp.ne.s32.totalorder %s208, %s209
    %p221 = scmp.eq.s32.totalorder %s26, 1
    %p222 = por %p220, %p221
    %p224 = scmp.ne.s32.totalorder %s209, %s223
    %p225 = scmp.eq.s32.totalorder %s26, 0
    %p226 = por %p224, %p225
    %s228 = sadd.s32 %s227, 1
    %p231 = scmp.eq.s32.totalorder %s20, 1
    %p232 = scmp.ne.s32.totalorder %s227, %s229
    %p233 = scmp.eq.s32.totalorder %s20, 0
    %p234 = por %p232, %p233
    %p235 = scmp.ne.s32.totalorder %s227, %s229
    %p236 = scmp.eq.s32.totalorder %s25, 1
    %p237 = por %p235, %p236
    %p238 = scmp.ne.s32.totalorder %s229, %s230
    %p239 = scmp.eq.s32.totalorder %s25, 0
    %p240 = por %p238, %p239
    %p241 = scmp.ne.s32.totalorder %s229, %s230
    %p242 = scmp.eq.s32.totalorder %s26, 1
    %p243 = por %p241, %p242
    %p245 = scmp.ne.s32.totalorder %s230, %s244
    %p246 = scmp.eq.s32.totalorder %s26, 0
    %p247 = por %p245, %p246
    %s249 = sadd.s32 %s248, 1
    %p252 = scmp.eq.s32.totalorder %s20, 1
    %p253 = scmp.ne.s32.totalorder %s248, %s250
    %p254 = scmp.eq.s32.totalorder %s20, 0
    %p255 = por %p253, %p254
    %p256 = scmp.ne.s32.totalorder %s248, %s250
    %p257 = scmp.eq.s32.totalorder %s25, 1
    %p258 = por %p256, %p257
    %p259 = scmp.ne.s32.totalorder %s250, %s251
    %p260 = scmp.eq.s32.totalorder %s25, 0
    %p261 = por %p259, %p260
    %p262 = scmp.ne.s32.totalorder %s250, %s251
    %p263 = scmp.eq.s32.totalorder %s26, 1
    %p264 = por %p262, %p263
    %p266 = scmp.ne.s32.totalorder %s251, %s265
    %p267 = scmp.eq.s32.totalorder %s26, 0
    %p268 = por %p266, %p267
    %s270 = sadd.s32 %s269, 1
    %p273 = scmp.eq.s32.totalorder %s20, 1
    %p274 = scmp.ne.s32.totalorder %s269, %s271
    %p275 = scmp.eq.s32.totalorder %s20, 0
    %p276 = por %p274, %p275
    %p277 = scmp.ne.s32.totalorder %s269, %s271
    %p278 = scmp.eq.s32.totalorder %s25, 1
    %p279 = por %p277, %p278
    %p280 = scmp.ne.s32.totalorder %s271, %s272
    %p281 = scmp.eq.s32.totalorder %s25, 0
    %p282 = por %p280, %p281
    %p283 = scmp.ne.s32.totalorder %s271, %s272
    %p284 = scmp.eq.s32.totalorder %s26, 1
    %p285 = por %p283, %p284
    %p287 = scmp.ne.s32.totalorder %s272, %s286
    %p288 = scmp.eq.s32.totalorder %s26, 0
    %p289 = por %p287, %p288
    %s291 = sadd.s32 %s290, 1
    %p294 = scmp.eq.s32.totalorder %s20, 1
    %p295 = scmp.ne.s32.totalorder %s290, %s292
    %p296 = scmp.eq.s32.totalorder %s20, 0
    %p297 = por %p295, %p296
    %p298 = scmp.ne.s32.totalorder %s290, %s292
    %p299 = scmp.eq.s32.totalorder %s25, 1
    %p300 = por %p298, %p299
    %p301 = scmp.ne.s32.totalorder %s292, %s293
    %p302 = scmp.eq.s32.totalorder %s25, 0
    %p303 = por %p301, %p302
    %p304 = scmp.ne.s32.totalorder %s292, %s293
    %p305 = scmp.eq.s32.totalorder %s26, 1
    %p306 = por %p304, %p305
    %p308 = scmp.ne.s32.totalorder %s293, %s307
    %p309 = scmp.eq.s32.totalorder %s26, 0
    %p310 = por %p308, %p309
    %s312 = sadd.s32 %s311, 1
    %p315 = scmp.eq.s32.totalorder %s20, 1
    %p316 = scmp.ne.s32.totalorder %s311, %s313
    %p317 = scmp.eq.s32.totalorder %s20, 0
    %p318 = por %p316, %p317
    %p319 = scmp.ne.s32.totalorder %s311, %s313
    %p320 = scmp.eq.s32.totalorder %s25, 1
    %p321 = por %p319, %p320
    %p322 = scmp.ne.s32.totalorder %s313, %s314
    %p323 = scmp.eq.s32.totalorder %s25, 0
    %p324 = por %p322, %p323
    %p325 = scmp.ne.s32.totalorder %s313, %s314
    %p326 = scmp.eq.s32.totalorder %s26, 1
    %p327 = por %p325, %p326
    %p329 = scmp.ne.s32.totalorder %s314, %s328
    %p330 = scmp.eq.s32.totalorder %s26, 0
    %p331 = por %p329, %p330
    %s332 = ssub.s32 %s20, %s27
    %p333 = scmp.eq.s32.totalorder %s332, 0
    %s335 = sadd.s32 %s334, 1
    %s336 = scalar_select %p333, %s334, %s335
    %p339 = pneg %p333
    %p340 = scmp.eq.s32.totalorder %s20, 1
    %p341 = por %p339, %p340
    %p342 = scmp.ne.s32.totalorder %s334, %s337
    %p343 = scmp.eq.s32.totalorder %s20, 0
    %p344 = por %p342, %p343
    %p345 = scmp.ne.s32.totalorder %s334, %s337
    %p346 = scmp.eq.s32.totalorder %s25, 1
    %p347 = por %p345, %p346
    %p348 = scmp.ne.s32.totalorder %s337, %s338
    %p349 = scmp.eq.s32.totalorder %s25, 0
    %p350 = por %p348, %p349
    %p351 = scmp.ne.s32.totalorder %s337, %s338
    %p352 = scmp.eq.s32.totalorder %s26, 1
    %p353 = por %p351, %p352
    %p355 = scmp.ne.s32.totalorder %s338, %s354
    %p356 = scmp.eq.s32.totalorder %s26, 0
    %p357 = por %p355, %p356
    %p358 = scmp.le.s32.totalorder 1, %s20
    %p359 = scmp.lt.s32.totalorder %s20, 3
    %p360 = pnand %p358, %p359
    %p361 = pneg %p360
    // Predicated region
    $region9: #{bert_with_weight_ce_forward.5} parent=5 // pred_check
      _
    $region10: #{bert_with_weight_ce_forward.5} parent=5 // pred_check_branch
      %363 = sbr.rel (%p360) target = $region12
    $region11: #{bert_with_weight_ce_forward.5} parent=5 // pred_region
      %s364 = ssub.s32 %s20, 1
      // Predicated region
      $region13: #{bert_with_weight_ce_forward.5} parent=11 // pred_check
        %p365 = pneg %p93
      $region14: #{bert_with_weight_ce_forward.5} parent=11 // pred_check_branch
        %367 = sbr.rel (%p365) target = $region16
      $region15: #{bert_with_weight_ce_forward.5} parent=11 // pred_region
        _
      $region16: #{bert_with_weight_ce_forward.5} parent=11 // pred_fallthru
        _
      // Predicated region
      $region17: #{bert_with_weight_ce_forward.5} parent=11 // pred_check
        %p368 = pneg %p114
      $region18: #{bert_with_weight_ce_forward.5} parent=11 // pred_check_branch
        %370 = sbr.rel (%p368) target = $region20
      $region19: #{bert_with_weight_ce_forward.5} parent=11 // pred_region
        _
      $region20: #{bert_with_weight_ce_forward.5} parent=11 // pred_fallthru
        _
      // Predicated region
      $region21: #{bert_with_weight_ce_forward.5} parent=11 // pred_check
        %p371 = pneg %p135
      $region22: #{bert_with_weight_ce_forward.5} parent=11 // pred_check_branch
        %373 = sbr.rel (%p371) target = $region24
      $region23: #{bert_with_weight_ce_forward.5} parent=11 // pred_region
        _
      $region24: #{bert_with_weight_ce_forward.5} parent=11 // pred_fallthru
        _
      // Predicated region
      $region25: #{bert_with_weight_ce_forward.5} parent=11 // pred_check
        %p374 = pneg %p156
      $region26: #{bert_with_weight_ce_forward.5} parent=11 // pred_check_branch
        %376 = sbr.rel (%p374) target = $region28
      $region27: #{bert_with_weight_ce_forward.5} parent=11 // pred_region
        _
      $region28: #{bert_with_weight_ce_forward.5} parent=11 // pred_fallthru
        _
      // Predicated region
      $region29: #{bert_with_weight_ce_forward.5} parent=11 // pred_check
        %p377 = pneg %p177
      $region30: #{bert_with_weight_ce_forward.5} parent=11 // pred_check_branch
        %379 = sbr.rel (%p377) target = $region32
      $region31: #{bert_with_weight_ce_forward.5} parent=11 // pred_region
        _
      $region32: #{bert_with_weight_ce_forward.5} parent=11 // pred_fallthru
        _
      // Predicated region
      $region33: #{bert_with_weight_ce_forward.5} parent=11 // pred_check
        %p380 = pneg %p198
      $region34: #{bert_with_weight_ce_forward.5} parent=11 // pred_check_branch
        %382 = sbr.rel (%p380) target = $region36
      $region35: #{bert_with_weight_ce_forward.5} parent=11 // pred_region
        _
      $region36: #{bert_with_weight_ce_forward.5} parent=11 // pred_fallthru
        _
      // Predicated region
      $region37: #{bert_with_weight_ce_forward.5} parent=11 // pred_check
        %p383 = pneg %p219
      $region38: #{bert_with_weight_ce_forward.5} parent=11 // pred_check_branch
        %385 = sbr.rel (%p383) target = $region40
      $region39: #{bert_with_weight_ce_forward.5} parent=11 // pred_region
        _
      $region40: #{bert_with_weight_ce_forward.5} parent=11 // pred_fallthru
        _
      // Predicated region
      $region41: #{bert_with_weight_ce_forward.5} parent=11 // pred_check
        %p386 = pneg %p240
      $region42: #{bert_with_weight_ce_forward.5} parent=11 // pred_check_branch
        %388 = sbr.rel (%p386) target = $region44
      $region43: #{bert_with_weight_ce_forward.5} parent=11 // pred_region
        _
      $region44: #{bert_with_weight_ce_forward.5} parent=11 // pred_fallthru
        _
      // Predicated region
      $region45: #{bert_with_weight_ce_forward.5} parent=11 // pred_check
        %p389 = pneg %p261
      $region46: #{bert_with_weight_ce_forward.5} parent=11 // pred_check_branch
        %391 = sbr.rel (%p389) target = $region48
      $region47: #{bert_with_weight_ce_forward.5} parent=11 // pred_region
        _
      $region48: #{bert_with_weight_ce_forward.5} parent=11 // pred_fallthru
        _
      // Predicated region
      $region49: #{bert_with_weight_ce_forward.5} parent=11 // pred_check
        %p392 = pneg %p282
      $region50: #{bert_with_weight_ce_forward.5} parent=11 // pred_check_branch
        %394 = sbr.rel (%p392) target = $region52
      $region51: #{bert_with_weight_ce_forward.5} parent=11 // pred_region
        _
      $region52: #{bert_with_weight_ce_forward.5} parent=11 // pred_fallthru
        _
      // Predicated region
      $region53: #{bert_with_weight_ce_forward.5} parent=11 // pred_check
        %p395 = pneg %p303
      $region54: #{bert_with_weight_ce_forward.5} parent=11 // pred_check_branch
        %397 = sbr.rel (%p395) target = $region56
      $region55: #{bert_with_weight_ce_forward.5} parent=11 // pred_region
        _
      $region56: #{bert_with_weight_ce_forward.5} parent=11 // pred_fallthru
        _
      // Predicated region
      $region57: #{bert_with_weight_ce_forward.5} parent=11 // pred_check
        %p398 = pneg %p324
      $region58: #{bert_with_weight_ce_forward.5} parent=11 // pred_check_branch
        %400 = sbr.rel (%p398) target = $region60
      $region59: #{bert_with_weight_ce_forward.5} parent=11 // pred_region
        _
      $region60: #{bert_with_weight_ce_forward.5} parent=11 // pred_fallthru
        _
    $region12: #{bert_with_weight_ce_forward.5} parent=5 // pred_fallthru
      _
    %p401 = scmp.lt.s32.totalorder %s20, 2
    // Predicated region
    $region61: #{bert_with_weight_ce_forward.5} parent=5 // pred_check
      %p402 = pneg %p401
    $region62: #{bert_with_weight_ce_forward.5} parent=5 // pred_check_branch
      %404 = sbr.rel (%p402) target = $region64
    $region63: #{bert_with_weight_ce_forward.5} parent=5 // pred_region
      // Predicated region
      $region65: #{bert_with_weight_ce_forward.5} parent=63 // pred_check
        %p405 = pneg %p40
      $region66: #{bert_with_weight_ce_forward.5} parent=63 // pred_check_branch
        %407 = sbr.rel (%p405) target = $region68
      $region67: #{bert_with_weight_ce_forward.5} parent=63 // pred_region
        %p408 = scmp.lt.s32.totalorder %s20, 1
        %s409 = scalar_select %p408, %s20, 1
        %s410 = smul.addr %s409, 8
        %s411 = scalar_lea.vmem %s0, %s410
      $region68: #{bert_with_weight_ce_forward.5} parent=63 // pred_fallthru
        _
      // Predicated region
      $region69: #{bert_with_weight_ce_forward.5} parent=63 // pred_check
        %p412 = pneg %p66
      $region70: #{bert_with_weight_ce_forward.5} parent=63 // pred_check_branch
        %414 = sbr.rel (%p412) target = $region72
      $region71: #{bert_with_weight_ce_forward.5} parent=63 // pred_region
        %p415 = scmp.lt.s32.totalorder %s20, 1
        %s416 = scalar_select %p415, %s20, 1
        %s417 = scalar_lea.vmem %s1, %s416
      $region72: #{bert_with_weight_ce_forward.5} parent=63 // pred_fallthru
        _
    $region64: #{bert_with_weight_ce_forward.5} parent=5 // pred_fallthru
      _
    %p418 = scmp.le.s32.totalorder 1, %s20
    %p419 = scmp.lt.s32.totalorder %s20, 3
    %p420 = pnand %p418, %p419
    %p421 = pneg %p420
    // Predicated region
    $region73: #{bert_with_weight_ce_forward.5} parent=5 // pred_check
      _
    $region74: #{bert_with_weight_ce_forward.5} parent=5 // pred_check_branch
      %423 = sbr.rel (%p420) target = $region76
    $region75: #{bert_with_weight_ce_forward.5} parent=5 // pred_region
      %s424 = ssub.s32 %s20, 1
      %p425 = scmp.lt.s32.totalorder %s25, 1
      %s426 = scalar_select %p425, %s25, 1
      %s427 = smul.addr %s426, 8
      %s428 = scalar_lea.vmem %s0, %s427
      %p429 = pneg %p46
      %p430 = pneg %p43
      %p431 = scmp.lt.s32.totalorder %s25, 1
      %s432 = scalar_select %p431, %s25, 1
      %s433 = scalar_lea.vmem %s1, %s432
      %p434 = pneg %p72
      %p435 = pneg %p69
      %p436 = pneg %p93
      %p437 = pneg %p90
      %p438 = pneg %p114
      %p439 = pneg %p111
      %p440 = pneg %p135
      %p441 = pneg %p132
      %p442 = pneg %p156
      %p443 = pneg %p153
      %p444 = pneg %p177
      %p445 = pneg %p174
      %p446 = pneg %p198
      %p447 = pneg %p195
      %p448 = pneg %p219
      %p449 = pneg %p216
      %p450 = pneg %p240
      %p451 = pneg %p237
      %p452 = pneg %p261
      %p453 = pneg %p258
      %p454 = pneg %p282
      %p455 = pneg %p279
      %p456 = pneg %p303
      %p457 = pneg %p300
      %p458 = pneg %p324
      %p459 = pneg %p321
      %p460 = pneg %p350
      %p461 = pneg %p347
      %p462 = scmp.lt.s32.totalorder %s25, 1
      %s463 = scalar_select %p462, %s25, 1
      %s464 = smul.addr %s463, 8
      %s465 = scalar_lea.vmem %s14, %s464
      %p466 = scmp.lt.s32.totalorder %s25, 1
      %s467 = scalar_select %p466, %s25, 1
      %s468 = smul.addr %s467, 8
      %s469 = scalar_lea.vmem %s0, %s468
      %p470 = scmp.lt.s32.totalorder %s25, 1
      %s471 = scalar_select %p470, %s25, 1
      %s472 = scalar_lea.vmem %s1, %s471
      %p473 = scmp.lt.s32.totalorder %s25, 1
      %s474 = scalar_select %p473, %s25, 1
      %s475 = smul.addr %s474, 8
      %s476 = scalar_lea.vmem %s14, %s475
      %v477 = vld [vmem:[%s469] sm:$0xff]
      %v478 = vld [vmem:[%s472] sm:$0x1]
      %v479 = vld [vmem:[%s2] sm:$0xff]
      %v480 = vld [vmem:[%s2 + $0x8] sm:$0xff]
      %v481 = vld [vmem:[%s2 + $0x10] sm:$0xff]
      %v482 = vld [vmem:[%s2 + $0x18] sm:$0xff]
      %v483 = vld [vmem:[%s3] sm:$0x1]
      %v485 = vlaneseq
      %v486 = vshrl.u32 %v485, 7
      %v487 = vsub.s32 0, %v486
      %v488 = vrot.slane %v483, %v487
      %vm490 = vcmask 261120
      %v492 = vsel %vm490, %v477, 0
      %494 = vmatprep.subr.mxu0 0.0
      %495 = vmatpush1.msra.mxu0 0.0
      %496 = vmatprep.subr.mxu0 0.0
      %497 = vmatpush1.msra.mxu0 0.0
      %498 = vmatprep.subr.mxu0 0.0
      %499 = vmatpush1.msra.mxu0 0.0
      %500 = vmatprep.subr.mxu0 0.0
      %501 = vmatpush1.msra.mxu0 0.0
      %502 = vmatprep.subr.mxu0 0.0
      %503 = vmatpush1.msra.mxu0 0.0
      %504 = vmatprep.subr.mxu0 0.0
      %505 = vmatpush1.msra.mxu0 0.0
      %506 = vmatprep.subr.mxu0 0.0
      %507 = vmatpush1.msra.mxu0 0.0
      %508 = vmatprep.subr.mxu0 0.0
      %509 = vmatpush1.msra.mxu0 0.0
      %510 = vmatprep.subr.mxu0 0.0
      %511 = vmatpush1.msra.mxu0 0.0
      %512 = vmatprep.subr.mxu0 0.0
      %513 = vmatpush1.msra.mxu0 0.0
      %514 = vmatprep.subr.mxu0 0.0
      %515 = vmatpush1.msra.mxu0 0.0
      %516 = vmatprep.subr.mxu0 0.0
      %517 = vmatpush1.msra.mxu0 0.0
      %518 = vmatprep.subr.mxu0 0.0
      %519 = vmatpush1.msra.mxu0 %v482
      %520 = vmatprep.subr.mxu0 0.0
      %521 = vmatpush1.msra.mxu0 %v481
      %522 = vmatprep.subr.mxu0 0.0
      %523 = vmatpush1.msra.mxu0 %v480
      %524 = vmatprep.subr.mxu0 0.0
      %525 = vmatpush1.msra.mxu0 %v479
      %526 = vmatprep.subr.mxu0 0.0
      %527 = vmatpush2.msra.mxu0 0.0
      %528 = vmatprep.subr.mxu0 0.0
      %529 = vmatpush2.msra.mxu0 0.0
      %530 = vmatprep.subr.mxu0 0.0
      %531 = vmatpush2.msra.mxu0 0.0
      %532 = vmatprep.subr.mxu0 0.0
      %533 = vmatpush2.msra.mxu0 0.0
      %534 = vmatprep.subr.mxu0 0.0
      %535 = vmatpush2.msra.mxu0 0.0
      %536 = vmatprep.subr.mxu0 0.0
      %537 = vmatpush2.msra.mxu0 0.0
      %538 = vmatprep.subr.mxu0 0.0
      %539 = vmatpush2.msra.mxu0 0.0
      %540 = vmatprep.subr.mxu0 0.0
      %541 = vmatpush2.msra.mxu0 0.0
      %542 = vmatprep.subr.mxu0 0.0
      %543 = vmatpush2.msra.mxu0 0.0
      %544 = vmatprep.subr.mxu0 0.0
      %545 = vmatpush2.msra.mxu0 0.0
      %546 = vmatprep.subr.mxu0 0.0
      %547 = vmatpush2.msra.mxu0 0.0
      %548 = vmatprep.subr.mxu0 0.0
      %549 = vmatpush2.msra.mxu0 0.0
      %550 = vmatprep.subr.mxu0 0.0
      %551 = vmatpush2.msra.mxu0 0.0
      %552 = vmatprep.subr.mxu0 0.0
      %553 = vmatpush2.msra.mxu0 0.0
      %554 = vmatprep.subr.mxu0 0.0
      %555 = vmatpush2.msra.mxu0 0.0
      %556 = vmatprep.subr.mxu0 0.0
      %557 = vmatpush2.msra.mxu0 0.0
      %558 = vmatprep.mubr.f32.mxu0 0.0
      %559 = vmatmul.mubr.f32.gmra.mxu0 %v492
      %v560 = vpop.f32.mrf.mxu0
      %v561 = vadd.f32 %v488, %v560
      %v562 = vpop.f32.mrf.mxu0
      %563 = vdwg.mxu0
      %s564 = scalar_lea.vmem %s2, 64
      %v565 = vld [vmem:[%s564] sm:$0xff]
      %v566 = vld [vmem:[%s564 + $0x8] sm:$0xff]
      %v567 = vld [vmem:[%s564 + $0x10] sm:$0xff]
      %v568 = vld [vmem:[%s564 + $0x18] sm:$0xff]
      %s569 = scalar_lea.vmem %s3, 2
      %v570 = vld [vmem:[%s569] sm:$0x1]
      %v572 = vlaneseq
      %v573 = vshrl.u32 %v572, 7
      %v574 = vsub.s32 0, %v573
      %v575 = vrot.slane %v570, %v574
      %577 = vmatprep.subr.mxu0 0.0
      %578 = vmatpush1.msra.mxu0 0.0
      %579 = vmatprep.subr.mxu0 0.0
      %580 = vmatpush1.msra.mxu0 0.0
      %581 = vmatprep.subr.mxu0 0.0
      %582 = vmatpush1.msra.mxu0 0.0
      %583 = vmatprep.subr.mxu0 0.0
      %584 = vmatpush1.msra.mxu0 0.0
      %585 = vmatprep.subr.mxu0 0.0
      %586 = vmatpush1.msra.mxu0 0.0
      %587 = vmatprep.subr.mxu0 0.0
      %588 = vmatpush1.msra.mxu0 0.0
      %589 = vmatprep.subr.mxu0 0.0
      %590 = vmatpush1.msra.mxu0 0.0
      %591 = vmatprep.subr.mxu0 0.0
      %592 = vmatpush1.msra.mxu0 0.0
      %593 = vmatprep.subr.mxu0 0.0
      %594 = vmatpush1.msra.mxu0 0.0
      %595 = vmatprep.subr.mxu0 0.0
      %596 = vmatpush1.msra.mxu0 0.0
      %597 = vmatprep.subr.mxu0 0.0
      %598 = vmatpush1.msra.mxu0 0.0
      %599 = vmatprep.subr.mxu0 0.0
      %600 = vmatpush1.msra.mxu0 0.0
      %601 = vmatprep.subr.mxu0 0.0
      %602 = vmatpush1.msra.mxu0 %v568
      %603 = vmatprep.subr.mxu0 0.0
      %604 = vmatpush1.msra.mxu0 %v567
      %605 = vmatprep.subr.mxu0 0.0
      %606 = vmatpush1.msra.mxu0 %v566
      %607 = vmatprep.subr.mxu0 0.0
      %608 = vmatpush1.msra.mxu0 %v565
      %609 = vmatprep.subr.mxu0 0.0
      %610 = vmatpush2.msra.mxu0 0.0
      %611 = vmatprep.subr.mxu0 0.0
      %612 = vmatpush2.msra.mxu0 0.0
      %613 = vmatprep.subr.mxu0 0.0
      %614 = vmatpush2.msra.mxu0 0.0
      %615 = vmatprep.subr.mxu0 0.0
      %616 = vmatpush2.msra.mxu0 0.0
      %617 = vmatprep.subr.mxu0 0.0
      %618 = vmatpush2.msra.mxu0 0.0
      %619 = vmatprep.subr.mxu0 0.0
      %620 = vmatpush2.msra.mxu0 0.0
      %621 = vmatprep.subr.mxu0 0.0
      %622 = vmatpush2.msra.mxu0 0.0
      %623 = vmatprep.subr.mxu0 0.0
      %624 = vmatpush2.msra.mxu0 0.0
      %625 = vmatprep.subr.mxu0 0.0
      %626 = vmatpush2.msra.mxu0 0.0
      %627 = vmatprep.subr.mxu0 0.0
      %628 = vmatpush2.msra.mxu0 0.0
      %629 = vmatprep.subr.mxu0 0.0
      %630 = vmatpush2.msra.mxu0 0.0
      %631 = vmatprep.subr.mxu0 0.0
      %632 = vmatpush2.msra.mxu0 0.0
      %633 = vmatprep.subr.mxu0 0.0
      %634 = vmatpush2.msra.mxu0 0.0
      %635 = vmatprep.subr.mxu0 0.0
      %636 = vmatpush2.msra.mxu0 0.0
      %637 = vmatprep.subr.mxu0 0.0
      %638 = vmatpush2.msra.mxu0 0.0
      %639 = vmatprep.subr.mxu0 0.0
      %640 = vmatpush2.msra.mxu0 0.0
      %641 = vmatprep.mubr.f32.mxu0 0.0
      %642 = vmatmul.mubr.f32.gmra.mxu0 %v492
      %v643 = vpop.f32.mrf.mxu0
      %v644 = vadd.f32 %v575, %v643
      %v645 = vpop.f32.mrf.mxu0
      %646 = vdwg.mxu0
      %s647 = scalar_lea.vmem %s2, 128
      %v648 = vld [vmem:[%s647] sm:$0xff]
      %v649 = vld [vmem:[%s647 + $0x8] sm:$0xff]
      %v650 = vld [vmem:[%s647 + $0x10] sm:$0xff]
      %v651 = vld [vmem:[%s647 + $0x18] sm:$0xff]
      %s652 = scalar_lea.vmem %s3, 4
      %v653 = vld [vmem:[%s652] sm:$0x1]
      %v655 = vlaneseq
      %v656 = vshrl.u32 %v655, 7
      %v657 = vsub.s32 0, %v656
      %v658 = vrot.slane %v653, %v657
      %660 = vmatprep.subr.mxu0 0.0
      %661 = vmatpush1.msra.mxu0 0.0
      %662 = vmatprep.subr.mxu0 0.0
      %663 = vmatpush1.msra.mxu0 0.0
      %664 = vmatprep.subr.mxu0 0.0
      %665 = vmatpush1.msra.mxu0 0.0
      %666 = vmatprep.subr.mxu0 0.0
      %667 = vmatpush1.msra.mxu0 0.0
      %668 = vmatprep.subr.mxu0 0.0
      %669 = vmatpush1.msra.mxu0 0.0
      %670 = vmatprep.subr.mxu0 0.0
      %671 = vmatpush1.msra.mxu0 0.0
      %672 = vmatprep.subr.mxu0 0.0
      %673 = vmatpush1.msra.mxu0 0.0
      %674 = vmatprep.subr.mxu0 0.0
      %675 = vmatpush1.msra.mxu0 0.0
      %676 = vmatprep.subr.mxu0 0.0
      %677 = vmatpush1.msra.mxu0 0.0
      %678 = vmatprep.subr.mxu0 0.0
      %679 = vmatpush1.msra.mxu0 0.0
      %680 = vmatprep.subr.mxu0 0.0
      %681 = vmatpush1.msra.mxu0 0.0
      %682 = vmatprep.subr.mxu0 0.0
      %683 = vmatpush1.msra.mxu0 0.0
      %684 = vmatprep.subr.mxu0 0.0
      %685 = vmatpush1.msra.mxu0 %v651
      %686 = vmatprep.subr.mxu0 0.0
      %687 = vmatpush1.msra.mxu0 %v650
      %688 = vmatprep.subr.mxu0 0.0
      %689 = vmatpush1.msra.mxu0 %v649
      %690 = vmatprep.subr.mxu0 0.0
      %691 = vmatpush1.msra.mxu0 %v648
      %692 = vmatprep.subr.mxu0 0.0
      %693 = vmatpush2.msra.mxu0 0.0
      %694 = vmatprep.subr.mxu0 0.0
      %695 = vmatpush2.msra.mxu0 0.0
      %696 = vmatprep.subr.mxu0 0.0
      %697 = vmatpush2.msra.mxu0 0.0
      %698 = vmatprep.subr.mxu0 0.0
      %699 = vmatpush2.msra.mxu0 0.0
      %700 = vmatprep.subr.mxu0 0.0
      %701 = vmatpush2.msra.mxu0 0.0
      %702 = vmatprep.subr.mxu0 0.0
      %703 = vmatpush2.msra.mxu0 0.0
      %704 = vmatprep.subr.mxu0 0.0
      %705 = vmatpush2.msra.mxu0 0.0
      %706 = vmatprep.subr.mxu0 0.0
      %707 = vmatpush2.msra.mxu0 0.0
      %708 = vmatprep.subr.mxu0 0.0
      %709 = vmatpush2.msra.mxu0 0.0
      %710 = vmatprep.subr.mxu0 0.0
      %711 = vmatpush2.msra.mxu0 0.0
      %712 = vmatprep.subr.mxu0 0.0
      %713 = vmatpush2.msra.mxu0 0.0
      %714 = vmatprep.subr.mxu0 0.0
      %715 = vmatpush2.msra.mxu0 0.0
      %716 = vmatprep.subr.mxu0 0.0
      %717 = vmatpush2.msra.mxu0 0.0
      %718 = vmatprep.subr.mxu0 0.0
      %719 = vmatpush2.msra.mxu0 0.0
      %720 = vmatprep.subr.mxu0 0.0
      %721 = vmatpush2.msra.mxu0 0.0
      %722 = vmatprep.subr.mxu0 0.0
      %723 = vmatpush2.msra.mxu0 0.0
      %724 = vmatprep.mubr.f32.mxu0 0.0
      %725 = vmatmul.mubr.f32.gmra.mxu0 %v492
      %v726 = vpop.f32.mrf.mxu0
      %v727 = vadd.f32 %v658, %v726
      %v728 = vpop.f32.mrf.mxu0
      %729 = vdwg.mxu0
      %vm730 = vcmask 130048
      %v732 = vsel %vm730, %v561, 0
      %v735 = vsel %vm730, %v644, 0
      %737 = vmatprep.subr.mxu0 0.0
      %738 = vmatpush1.xpose.msra.mxu0 0.0
      %739 = vmatprep.subr.mxu0 0.0
      %740 = vmatpush1.xpose.msra.mxu0 0.0
      %741 = vmatprep.subr.mxu0 0.0
      %742 = vmatpush1.xpose.msra.mxu0 0.0
      %743 = vmatprep.subr.mxu0 0.0
      %744 = vmatpush1.xpose.msra.mxu0 0.0
      %745 = vmatprep.subr.mxu0 0.0
      %746 = vmatpush1.xpose.msra.mxu0 0.0
      %747 = vmatprep.subr.mxu0 0.0
      %748 = vmatpush1.xpose.msra.mxu0 0.0
      %749 = vmatprep.subr.mxu0 0.0
      %750 = vmatpush1.xpose.msra.mxu0 0.0
      %751 = vmatprep.subr.mxu0 0.0
      %752 = vmatpush1.xpose.msra.mxu0 0.0
      %753 = vmatprep.subr.mxu0 0.0
      %754 = vmatpush1.xpose.msra.mxu0 0.0
      %755 = vmatprep.subr.mxu0 0.0
      %756 = vmatpush1.xpose.msra.mxu0 0.0
      %757 = vmatprep.subr.mxu0 0.0
      %758 = vmatpush1.xpose.msra.mxu0 0.0
      %759 = vmatprep.subr.mxu0 0.0
      %760 = vmatpush1.xpose.msra.mxu0 0.0
      %761 = vmatprep.subr.mxu0 0.0
      %762 = vmatpush1.xpose.msra.mxu0 0.0
      %763 = vmatprep.subr.mxu0 0.0
      %764 = vmatpush1.xpose.msra.mxu0 0.0
      %765 = vmatprep.subr.mxu0 0.0
      %766 = vmatpush1.xpose.msra.mxu0 0.0
      %767 = vmatprep.subr.mxu0 0.0
      %768 = vmatpush1.xpose.msra.mxu0 %v735
      %769 = vmatprep.subr.mxu0 0.0
      %770 = vmatpush2.xpose.msra.mxu0 0.0
      %771 = vmatprep.subr.mxu0 0.0
      %772 = vmatpush2.xpose.msra.mxu0 0.0
      %773 = vmatprep.subr.mxu0 0.0
      %774 = vmatpush2.xpose.msra.mxu0 0.0
      %775 = vmatprep.subr.mxu0 0.0
      %776 = vmatpush2.xpose.msra.mxu0 0.0
      %777 = vmatprep.subr.mxu0 0.0
      %778 = vmatpush2.xpose.msra.mxu0 0.0
      %779 = vmatprep.subr.mxu0 0.0
      %780 = vmatpush2.xpose.msra.mxu0 0.0
      %781 = vmatprep.subr.mxu0 0.0
      %782 = vmatpush2.xpose.msra.mxu0 0.0
      %783 = vmatprep.subr.mxu0 0.0
      %784 = vmatpush2.xpose.msra.mxu0 0.0
      %785 = vmatprep.subr.mxu0 0.0
      %786 = vmatpush2.xpose.msra.mxu0 0.0
      %787 = vmatprep.subr.mxu0 0.0
      %788 = vmatpush2.xpose.msra.mxu0 0.0
      %789 = vmatprep.subr.mxu0 0.0
      %790 = vmatpush2.xpose.msra.mxu0 0.0
      %791 = vmatprep.subr.mxu0 0.0
      %792 = vmatpush2.xpose.msra.mxu0 0.0
      %793 = vmatprep.subr.mxu0 0.0
      %794 = vmatpush2.xpose.msra.mxu0 0.0
      %795 = vmatprep.subr.mxu0 0.0
      %796 = vmatpush2.xpose.msra.mxu0 0.0
      %797 = vmatprep.subr.mxu0 0.0
      %798 = vmatpush2.xpose.msra.mxu0 0.0
      %799 = vmatprep.subr.mxu0 0.0
      %800 = vmatpush2.xpose.msra.mxu0 0.0
      %801 = vmatprep.mubr.f32.mxu0 0.0
      %802 = vmatmul.mubr.f32.gmra.mxu0 %v732
      %v803 = vpop.f32.mrf.mxu0
      %v804 = vadd.f32 0.0, %v803
      %v805 = vpop.f32.mrf.mxu0
      %806 = vdwg.mxu0
      %v807 = vmul.f32 %v804, 0.25
      %v809 = vlaneseq
      %v810 = vshrl.u32 %v809, 7
      %v811 = vsub.s32 0, %v810
      %v812 = vrot.slane %v478, %v811
      %v814 = vadd.f32 %v807, %v812
      %vm815 = vcmask 64512
      %v816 = vsel %vm815, %v814, -inf
      %817 = vmax.xlane.f32.xlu0 %v816
      %v818 = vpop.xlane.xlu0 %817
      %v819 = vsub.f32 %v814, %v818
      %v820 = vmul.f32 %v819, 1.442695
      %v821 = vpow.pop %v820
      %v822 = vsel %vm815, %v821, 0.0
      %823 = vadd.xlane.f32.xlu0 %v822
      %v824 = vpop.xlane.xlu0 %823
      %v825 = vrcp.pop %v824
      %v826 = vmul.f32 %v821, %v825
      %v828 = vsel %vm815, %v826, 0
      %830 = vmatprep.subr.mxu0 0.0
      %831 = vmatpush1.msra.mxu0 0.0
      %832 = vmatprep.subr.mxu0 0.0
      %833 = vmatpush1.msra.mxu0 0.0
      %834 = vmatprep.subr.mxu0 0.0
      %835 = vmatpush1.msra.mxu0 0.0
      %836 = vmatprep.subr.mxu0 0.0
      %837 = vmatpush1.msra.mxu0 0.0
      %838 = vmatprep.subr.mxu0 0.0
      %839 = vmatpush1.msra.mxu0 0.0
      %840 = vmatprep.subr.mxu0 0.0
      %841 = vmatpush1.msra.mxu0 0.0
      %842 = vmatprep.subr.mxu0 0.0
      %843 = vmatpush1.msra.mxu0 0.0
      %844 = vmatprep.subr.mxu0 0.0
      %845 = vmatpush1.msra.mxu0 0.0
      %846 = vmatprep.subr.mxu0 0.0
      %847 = vmatpush1.msra.mxu0 0.0
      %848 = vmatprep.subr.mxu0 0.0
      %849 = vmatpush1.msra.mxu0 0.0
      %850 = vmatprep.subr.mxu0 0.0
      %851 = vmatpush1.msra.mxu0 0.0
      %852 = vmatprep.subr.mxu0 0.0
      %853 = vmatpush1.msra.mxu0 0.0
      %854 = vmatprep.subr.mxu0 0.0
      %855 = vmatpush1.msra.mxu0 0.0
      %856 = vmatprep.subr.mxu0 0.0
      %857 = vmatpush1.msra.mxu0 0.0
      %858 = vmatprep.subr.mxu0 0.0
      %859 = vmatpush1.msra.mxu0 0.0
      %860 = vmatprep.subr.mxu0 0.0
      %861 = vmatpush1.msra.mxu0 %v727
      %862 = vmatprep.subr.mxu0 0.0
      %863 = vmatpush2.msra.mxu0 0.0
      %864 = vmatprep.subr.mxu0 0.0
      %865 = vmatpush2.msra.mxu0 0.0
      %866 = vmatprep.subr.mxu0 0.0
      %867 = vmatpush2.msra.mxu0 0.0
      %868 = vmatprep.subr.mxu0 0.0
      %869 = vmatpush2.msra.mxu0 0.0
      %870 = vmatprep.subr.mxu0 0.0
      %871 = vmatpush2.msra.mxu0 0.0
      %872 = vmatprep.subr.mxu0 0.0
      %873 = vmatpush2.msra.mxu0 0.0
      %874 = vmatprep.subr.mxu0 0.0
      %875 = vmatpush2.msra.mxu0 0.0
      %876 = vmatprep.subr.mxu0 0.0
      %877 = vmatpush2.msra.mxu0 0.0
      %878 = vmatprep.subr.mxu0 0.0
      %879 = vmatpush2.msra.mxu0 0.0
      %880 = vmatprep.subr.mxu0 0.0
      %881 = vmatpush2.msra.mxu0 0.0
      %882 = vmatprep.subr.mxu0 0.0
      %883 = vmatpush2.msra.mxu0 0.0
      %884 = vmatprep.subr.mxu0 0.0
      %885 = vmatpush2.msra.mxu0 0.0
      %886 = vmatprep.subr.mxu0 0.0
      %887 = vmatpush2.msra.mxu0 0.0
      %888 = vmatprep.subr.mxu0 0.0
      %889 = vmatpush2.msra.mxu0 0.0
      %890 = vmatprep.subr.mxu0 0.0
      %891 = vmatpush2.msra.mxu0 0.0
      %892 = vmatprep.subr.mxu0 0.0
      %893 = vmatpush2.msra.mxu0 0.0
      %894 = vmatprep.mubr.f32.mxu0 0.0
      %895 = vmatmul.mubr.f32.gmra.mxu0 %v828
      %v896 = vpop.f32.mrf.mxu0
      %v897 = vadd.f32 0.0, %v896
      %v898 = vpop.f32.mrf.mxu0
      %899 = vdwg.mxu0
      %v900 = vld [vmem:[%s4] sm:$0xff]
      %v901 = vld [vmem:[%s4 + $0x8] sm:$0xff]
      %s902 = scalar_lea.vmem %s2, 32
      %v903 = vld [vmem:[%s902] sm:$0xff]
      %v904 = vld [vmem:[%s902 + $0x8] sm:$0xff]
      %v905 = vld [vmem:[%s902 + $0x10] sm:$0xff]
      %v906 = vld [vmem:[%s902 + $0x18] sm:$0xff]
      %s907 = scalar_lea.vmem %s3, 1
      %v908 = vld [vmem:[%s907] sm:$0x1]
      %v910 = vlaneseq
      %v911 = vshrl.u32 %v910, 7
      %v912 = vsub.s32 0, %v911
      %v913 = vrot.slane %v908, %v912
      %915 = vmatprep.subr.mxu0 0.0
      %916 = vmatpush1.msra.mxu0 0.0
      %917 = vmatprep.subr.mxu0 0.0
      %918 = vmatpush1.msra.mxu0 0.0
      %919 = vmatprep.subr.mxu0 0.0
      %920 = vmatpush1.msra.mxu0 0.0
      %921 = vmatprep.subr.mxu0 0.0
      %922 = vmatpush1.msra.mxu0 0.0
      %923 = vmatprep.subr.mxu0 0.0
      %924 = vmatpush1.msra.mxu0 0.0
      %925 = vmatprep.subr.mxu0 0.0
      %926 = vmatpush1.msra.mxu0 0.0
      %927 = vmatprep.subr.mxu0 0.0
      %928 = vmatpush1.msra.mxu0 0.0
      %929 = vmatprep.subr.mxu0 0.0
      %930 = vmatpush1.msra.mxu0 0.0
      %931 = vmatprep.subr.mxu0 0.0
      %932 = vmatpush1.msra.mxu0 0.0
      %933 = vmatprep.subr.mxu0 0.0
      %934 = vmatpush1.msra.mxu0 0.0
      %935 = vmatprep.subr.mxu0 0.0
      %936 = vmatpush1.msra.mxu0 0.0
      %937 = vmatprep.subr.mxu0 0.0
      %938 = vmatpush1.msra.mxu0 0.0
      %939 = vmatprep.subr.mxu0 0.0
      %940 = vmatpush1.msra.mxu0 %v906
      %941 = vmatprep.subr.mxu0 0.0
      %942 = vmatpush1.msra.mxu0 %v905
      %943 = vmatprep.subr.mxu0 0.0
      %944 = vmatpush1.msra.mxu0 %v904
      %945 = vmatprep.subr.mxu0 0.0
      %946 = vmatpush1.msra.mxu0 %v903
      %947 = vmatprep.subr.mxu0 0.0
      %948 = vmatpush2.msra.mxu0 0.0
      %949 = vmatprep.subr.mxu0 0.0
      %950 = vmatpush2.msra.mxu0 0.0
      %951 = vmatprep.subr.mxu0 0.0
      %952 = vmatpush2.msra.mxu0 0.0
      %953 = vmatprep.subr.mxu0 0.0
      %954 = vmatpush2.msra.mxu0 0.0
      %955 = vmatprep.subr.mxu0 0.0
      %956 = vmatpush2.msra.mxu0 0.0
      %957 = vmatprep.subr.mxu0 0.0
      %958 = vmatpush2.msra.mxu0 0.0
      %959 = vmatprep.subr.mxu0 0.0
      %960 = vmatpush2.msra.mxu0 0.0
      %961 = vmatprep.subr.mxu0 0.0
      %962 = vmatpush2.msra.mxu0 0.0
      %963 = vmatprep.subr.mxu0 0.0
      %964 = vmatpush2.msra.mxu0 0.0
      %965 = vmatprep.subr.mxu0 0.0
      %966 = vmatpush2.msra.mxu0 0.0
      %967 = vmatprep.subr.mxu0 0.0
      %968 = vmatpush2.msra.mxu0 0.0
      %969 = vmatprep.subr.mxu0 0.0
      %970 = vmatpush2.msra.mxu0 0.0
      %971 = vmatprep.subr.mxu0 0.0
      %972 = vmatpush2.msra.mxu0 0.0
      %973 = vmatprep.subr.mxu0 0.0
      %974 = vmatpush2.msra.mxu0 0.0
      %975 = vmatprep.subr.mxu0 0.0
      %976 = vmatpush2.msra.mxu0 0.0
      %977 = vmatprep.subr.mxu0 0.0
      %978 = vmatpush2.msra.mxu0 0.0
      %979 = vmatprep.mubr.f32.mxu0 0.0
      %980 = vmatmul.mubr.f32.gmra.mxu0 %v492
      %v981 = vpop.f32.mrf.mxu0
      %v982 = vadd.f32 %v913, %v981
      %v983 = vpop.f32.mrf.mxu0
      %984 = vdwg.mxu0
      %s985 = scalar_lea.vmem %s2, 96
      %v986 = vld [vmem:[%s985] sm:$0xff]
      %v987 = vld [vmem:[%s985 + $0x8] sm:$0xff]
      %v988 = vld [vmem:[%s985 + $0x10] sm:$0xff]
      %v989 = vld [vmem:[%s985 + $0x18] sm:$0xff]
      %s990 = scalar_lea.vmem %s3, 3
      %v991 = vld [vmem:[%s990] sm:$0x1]
      %v993 = vlaneseq
      %v994 = vshrl.u32 %v993, 7
      %v995 = vsub.s32 0, %v994
      %v996 = vrot.slane %v991, %v995
      %998 = vmatprep.subr.mxu0 0.0
      %999 = vmatpush1.msra.mxu0 0.0
      %1000 = vmatprep.subr.mxu0 0.0
      %1001 = vmatpush1.msra.mxu0 0.0
      %1002 = vmatprep.subr.mxu0 0.0
      %1003 = vmatpush1.msra.mxu0 0.0
      %1004 = vmatprep.subr.mxu0 0.0
      %1005 = vmatpush1.msra.mxu0 0.0
      %1006 = vmatprep.subr.mxu0 0.0
      %1007 = vmatpush1.msra.mxu0 0.0
      %1008 = vmatprep.subr.mxu0 0.0
      %1009 = vmatpush1.msra.mxu0 0.0
      %1010 = vmatprep.subr.mxu0 0.0
      %1011 = vmatpush1.msra.mxu0 0.0
      %1012 = vmatprep.subr.mxu0 0.0
      %1013 = vmatpush1.msra.mxu0 0.0
      %1014 = vmatprep.subr.mxu0 0.0
      %1015 = vmatpush1.msra.mxu0 0.0
      %1016 = vmatprep.subr.mxu0 0.0
      %1017 = vmatpush1.msra.mxu0 0.0
      %1018 = vmatprep.subr.mxu0 0.0
      %1019 = vmatpush1.msra.mxu0 0.0
      %1020 = vmatprep.subr.mxu0 0.0
      %1021 = vmatpush1.msra.mxu0 0.0
      %1022 = vmatprep.subr.mxu0 0.0
      %1023 = vmatpush1.msra.mxu0 %v989
      %1024 = vmatprep.subr.mxu0 0.0
      %1025 = vmatpush1.msra.mxu0 %v988
      %1026 = vmatprep.subr.mxu0 0.0
      %1027 = vmatpush1.msra.mxu0 %v987
      %1028 = vmatprep.subr.mxu0 0.0
      %1029 = vmatpush1.msra.mxu0 %v986
      %1030 = vmatprep.subr.mxu0 0.0
      %1031 = vmatpush2.msra.mxu0 0.0
      %1032 = vmatprep.subr.mxu0 0.0
      %1033 = vmatpush2.msra.mxu0 0.0
      %1034 = vmatprep.subr.mxu0 0.0
      %1035 = vmatpush2.msra.mxu0 0.0
      %1036 = vmatprep.subr.mxu0 0.0
      %1037 = vmatpush2.msra.mxu0 0.0
      %1038 = vmatprep.subr.mxu0 0.0
      %1039 = vmatpush2.msra.mxu0 0.0
      %1040 = vmatprep.subr.mxu0 0.0
      %1041 = vmatpush2.msra.mxu0 0.0
      %1042 = vmatprep.subr.mxu0 0.0
      %1043 = vmatpush2.msra.mxu0 0.0
      %1044 = vmatprep.subr.mxu0 0.0
      %1045 = vmatpush2.msra.mxu0 0.0
      %1046 = vmatprep.subr.mxu0 0.0
      %1047 = vmatpush2.msra.mxu0 0.0
      %1048 = vmatprep.subr.mxu0 0.0
      %1049 = vmatpush2.msra.mxu0 0.0
      %1050 = vmatprep.subr.mxu0 0.0
      %1051 = vmatpush2.msra.mxu0 0.0
      %1052 = vmatprep.subr.mxu0 0.0
      %1053 = vmatpush2.msra.mxu0 0.0
      %1054 = vmatprep.subr.mxu0 0.0
      %1055 = vmatpush2.msra.mxu0 0.0
      %1056 = vmatprep.subr.mxu0 0.0
      %1057 = vmatpush2.msra.mxu0 0.0
      %1058 = vmatprep.subr.mxu0 0.0
      %1059 = vmatpush2.msra.mxu0 0.0
      %1060 = vmatprep.subr.mxu0 0.0
      %1061 = vmatpush2.msra.mxu0 0.0
      %1062 = vmatprep.mubr.f32.mxu0 0.0
      %1063 = vmatmul.mubr.f32.gmra.mxu0 %v492
      %v1064 = vpop.f32.mrf.mxu0
      %v1065 = vadd.f32 %v996, %v1064
      %v1066 = vpop.f32.mrf.mxu0
      %1067 = vdwg.mxu0
      %s1068 = scalar_lea.vmem %s2, 160
      %v1069 = vld [vmem:[%s1068] sm:$0xff]
      %v1070 = vld [vmem:[%s1068 + $0x8] sm:$0xff]
      %v1071 = vld [vmem:[%s1068 + $0x10] sm:$0xff]
      %v1072 = vld [vmem:[%s1068 + $0x18] sm:$0xff]
      %s1073 = scalar_lea.vmem %s3, 5
      %v1074 = vld [vmem:[%s1073] sm:$0x1]
      %v1076 = vlaneseq
      %v1077 = vshrl.u32 %v1076, 7
      %v1078 = vsub.s32 0, %v1077
      %v1079 = vrot.slane %v1074, %v1078
      %1081 = vmatprep.subr.mxu0 0.0
      %1082 = vmatpush1.msra.mxu0 0.0
      %1083 = vmatprep.subr.mxu0 0.0
      %1084 = vmatpush1.msra.mxu0 0.0
      %1085 = vmatprep.subr.mxu0 0.0
      %1086 = vmatpush1.msra.mxu0 0.0
      %1087 = vmatprep.subr.mxu0 0.0
      %1088 = vmatpush1.msra.mxu0 0.0
      %1089 = vmatprep.subr.mxu0 0.0
      %1090 = vmatpush1.msra.mxu0 0.0
      %1091 = vmatprep.subr.mxu0 0.0
      %1092 = vmatpush1.msra.mxu0 0.0
      %1093 = vmatprep.subr.mxu0 0.0
      %1094 = vmatpush1.msra.mxu0 0.0
      %1095 = vmatprep.subr.mxu0 0.0
      %1096 = vmatpush1.msra.mxu0 0.0
      %1097 = vmatprep.subr.mxu0 0.0
      %1098 = vmatpush1.msra.mxu0 0.0
      %1099 = vmatprep.subr.mxu0 0.0
      %1100 = vmatpush1.msra.mxu0 0.0
      %1101 = vmatprep.subr.mxu0 0.0
      %1102 = vmatpush1.msra.mxu0 0.0
      %1103 = vmatprep.subr.mxu0 0.0
      %1104 = vmatpush1.msra.mxu0 0.0
      %1105 = vmatprep.subr.mxu0 0.0
      %1106 = vmatpush1.msra.mxu0 %v1072
      %1107 = vmatprep.subr.mxu0 0.0
      %1108 = vmatpush1.msra.mxu0 %v1071
      %1109 = vmatprep.subr.mxu0 0.0
      %1110 = vmatpush1.msra.mxu0 %v1070
      %1111 = vmatprep.subr.mxu0 0.0
      %1112 = vmatpush1.msra.mxu0 %v1069
      %1113 = vmatprep.subr.mxu0 0.0
      %1114 = vmatpush2.msra.mxu0 0.0
      %1115 = vmatprep.subr.mxu0 0.0
      %1116 = vmatpush2.msra.mxu0 0.0
      %1117 = vmatprep.subr.mxu0 0.0
      %1118 = vmatpush2.msra.mxu0 0.0
      %1119 = vmatprep.subr.mxu0 0.0
      %1120 = vmatpush2.msra.mxu0 0.0
      %1121 = vmatprep.subr.mxu0 0.0
      %1122 = vmatpush2.msra.mxu0 0.0
      %1123 = vmatprep.subr.mxu0 0.0
      %1124 = vmatpush2.msra.mxu0 0.0
      %1125 = vmatprep.subr.mxu0 0.0
      %1126 = vmatpush2.msra.mxu0 0.0
      %1127 = vmatprep.subr.mxu0 0.0
      %1128 = vmatpush2.msra.mxu0 0.0
      %1129 = vmatprep.subr.mxu0 0.0
      %1130 = vmatpush2.msra.mxu0 0.0
      %1131 = vmatprep.subr.mxu0 0.0
      %1132 = vmatpush2.msra.mxu0 0.0
      %1133 = vmatprep.subr.mxu0 0.0
      %1134 = vmatpush2.msra.mxu0 0.0
      %1135 = vmatprep.subr.mxu0 0.0
      %1136 = vmatpush2.msra.mxu0 0.0
      %1137 = vmatprep.subr.mxu0 0.0
      %1138 = vmatpush2.msra.mxu0 0.0
      %1139 = vmatprep.subr.mxu0 0.0
      %1140 = vmatpush2.msra.mxu0 0.0
      %1141 = vmatprep.subr.mxu0 0.0
      %1142 = vmatpush2.msra.mxu0 0.0
      %1143 = vmatprep.subr.mxu0 0.0
      %1144 = vmatpush2.msra.mxu0 0.0
      %1145 = vmatprep.mubr.f32.mxu0 0.0
      %1146 = vmatmul.mubr.f32.gmra.mxu0 %v492
      %v1147 = vpop.f32.mrf.mxu0
      %v1148 = vadd.f32 %v1079, %v1147
      %v1149 = vpop.f32.mrf.mxu0
      %1150 = vdwg.mxu0
      %v1152 = vsel %vm730, %v982, 0
      %v1155 = vsel %vm730, %v1065, 0
      %1157 = vmatprep.subr.mxu0 0.0
      %1158 = vmatpush1.xpose.msra.mxu0 0.0
      %1159 = vmatprep.subr.mxu0 0.0
      %1160 = vmatpush1.xpose.msra.mxu0 0.0
      %1161 = vmatprep.subr.mxu0 0.0
      %1162 = vmatpush1.xpose.msra.mxu0 0.0
      %1163 = vmatprep.subr.mxu0 0.0
      %1164 = vmatpush1.xpose.msra.mxu0 0.0
      %1165 = vmatprep.subr.mxu0 0.0
      %1166 = vmatpush1.xpose.msra.mxu0 0.0
      %1167 = vmatprep.subr.mxu0 0.0
      %1168 = vmatpush1.xpose.msra.mxu0 0.0
      %1169 = vmatprep.subr.mxu0 0.0
      %1170 = vmatpush1.xpose.msra.mxu0 0.0
      %1171 = vmatprep.subr.mxu0 0.0
      %1172 = vmatpush1.xpose.msra.mxu0 0.0
      %1173 = vmatprep.subr.mxu0 0.0
      %1174 = vmatpush1.xpose.msra.mxu0 0.0
      %1175 = vmatprep.subr.mxu0 0.0
      %1176 = vmatpush1.xpose.msra.mxu0 0.0
      %1177 = vmatprep.subr.mxu0 0.0
      %1178 = vmatpush1.xpose.msra.mxu0 0.0
      %1179 = vmatprep.subr.mxu0 0.0
      %1180 = vmatpush1.xpose.msra.mxu0 0.0
      %1181 = vmatprep.subr.mxu0 0.0
      %1182 = vmatpush1.xpose.msra.mxu0 0.0
      %1183 = vmatprep.subr.mxu0 0.0
      %1184 = vmatpush1.xpose.msra.mxu0 0.0
      %1185 = vmatprep.subr.mxu0 0.0
      %1186 = vmatpush1.xpose.msra.mxu0 0.0
      %1187 = vmatprep.subr.mxu0 0.0
      %1188 = vmatpush1.xpose.msra.mxu0 %v1155
      %1189 = vmatprep.subr.mxu0 0.0
      %1190 = vmatpush2.xpose.msra.mxu0 0.0
      %1191 = vmatprep.subr.mxu0 0.0
      %1192 = vmatpush2.xpose.msra.mxu0 0.0
      %1193 = vmatprep.subr.mxu0 0.0
      %1194 = vmatpush2.xpose.msra.mxu0 0.0
      %1195 = vmatprep.subr.mxu0 0.0
      %1196 = vmatpush2.xpose.msra.mxu0 0.0
      %1197 = vmatprep.subr.mxu0 0.0
      %1198 = vmatpush2.xpose.msra.mxu0 0.0
      %1199 = vmatprep.subr.mxu0 0.0
      %1200 = vmatpush2.xpose.msra.mxu0 0.0
      %1201 = vmatprep.subr.mxu0 0.0
      %1202 = vmatpush2.xpose.msra.mxu0 0.0
      %1203 = vmatprep.subr.mxu0 0.0
      %1204 = vmatpush2.xpose.msra.mxu0 0.0
      %1205 = vmatprep.subr.mxu0 0.0
      %1206 = vmatpush2.xpose.msra.mxu0 0.0
      %1207 = vmatprep.subr.mxu0 0.0
      %1208 = vmatpush2.xpose.msra.mxu0 0.0
      %1209 = vmatprep.subr.mxu0 0.0
      %1210 = vmatpush2.xpose.msra.mxu0 0.0
      %1211 = vmatprep.subr.mxu0 0.0
      %1212 = vmatpush2.xpose.msra.mxu0 0.0
      %1213 = vmatprep.subr.mxu0 0.0
      %1214 = vmatpush2.xpose.msra.mxu0 0.0
      %1215 = vmatprep.subr.mxu0 0.0
      %1216 = vmatpush2.xpose.msra.mxu0 0.0
      %1217 = vmatprep.subr.mxu0 0.0
      %1218 = vmatpush2.xpose.msra.mxu0 0.0
      %1219 = vmatprep.subr.mxu0 0.0
      %1220 = vmatpush2.xpose.msra.mxu0 0.0
      %1221 = vmatprep.mubr.f32.mxu0 0.0
      %1222 = vmatmul.mubr.f32.gmra.mxu0 %v1152
      %v1223 = vpop.f32.mrf.mxu0
      %v1224 = vadd.f32 0.0, %v1223
      %v1225 = vpop.f32.mrf.mxu0
      %1226 = vdwg.mxu0
      %v1227 = vmul.f32 %v1224, 0.25
      %v1228 = vadd.f32 %v1227, %v812
      %v1229 = vsel %vm815, %v1228, -inf
      %1230 = vmax.xlane.f32.xlu0 %v1229
      %v1231 = vpop.xlane.xlu0 %1230
      %v1232 = vsub.f32 %v1228, %v1231
      %v1233 = vmul.f32 %v1232, 1.442695
      %v1234 = vpow.pop %v1233
      %v1235 = vsel %vm815, %v1234, 0.0
      %1236 = vadd.xlane.f32.xlu0 %v1235
      %v1237 = vpop.xlane.xlu0 %1236
      %v1238 = vrcp.pop %v1237
      %v1239 = vmul.f32 %v1234, %v1238
      %v1241 = vsel %vm815, %v1239, 0
      %1243 = vmatprep.subr.mxu0 0.0
      %1244 = vmatpush1.msra.mxu0 0.0
      %1245 = vmatprep.subr.mxu0 0.0
      %1246 = vmatpush1.msra.mxu0 0.0
      %1247 = vmatprep.subr.mxu0 0.0
      %1248 = vmatpush1.msra.mxu0 0.0
      %1249 = vmatprep.subr.mxu0 0.0
      %1250 = vmatpush1.msra.mxu0 0.0
      %1251 = vmatprep.subr.mxu0 0.0
      %1252 = vmatpush1.msra.mxu0 0.0
      %1253 = vmatprep.subr.mxu0 0.0
      %1254 = vmatpush1.msra.mxu0 0.0
      %1255 = vmatprep.subr.mxu0 0.0
      %1256 = vmatpush1.msra.mxu0 0.0
      %1257 = vmatprep.subr.mxu0 0.0
      %1258 = vmatpush1.msra.mxu0 0.0
      %1259 = vmatprep.subr.mxu0 0.0
      %1260 = vmatpush1.msra.mxu0 0.0
      %1261 = vmatprep.subr.mxu0 0.0
      %1262 = vmatpush1.msra.mxu0 0.0
      %1263 = vmatprep.subr.mxu0 0.0
      %1264 = vmatpush1.msra.mxu0 0.0
      %1265 = vmatprep.subr.mxu0 0.0
      %1266 = vmatpush1.msra.mxu0 0.0
      %1267 = vmatprep.subr.mxu0 0.0
      %1268 = vmatpush1.msra.mxu0 0.0
      %1269 = vmatprep.subr.mxu0 0.0
      %1270 = vmatpush1.msra.mxu0 0.0
      %1271 = vmatprep.subr.mxu0 0.0
      %1272 = vmatpush1.msra.mxu0 0.0
      %1273 = vmatprep.subr.mxu0 0.0
      %1274 = vmatpush1.msra.mxu0 %v1148
      %1275 = vmatprep.subr.mxu0 0.0
      %1276 = vmatpush2.msra.mxu0 0.0
      %1277 = vmatprep.subr.mxu0 0.0
      %1278 = vmatpush2.msra.mxu0 0.0
      %1279 = vmatprep.subr.mxu0 0.0
      %1280 = vmatpush2.msra.mxu0 0.0
      %1281 = vmatprep.subr.mxu0 0.0
      %1282 = vmatpush2.msra.mxu0 0.0
      %1283 = vmatprep.subr.mxu0 0.0
      %1284 = vmatpush2.msra.mxu0 0.0
      %1285 = vmatprep.subr.mxu0 0.0
      %1286 = vmatpush2.msra.mxu0 0.0
      %1287 = vmatprep.subr.mxu0 0.0
      %1288 = vmatpush2.msra.mxu0 0.0
      %1289 = vmatprep.subr.mxu0 0.0
      %1290 = vmatpush2.msra.mxu0 0.0
      %1291 = vmatprep.subr.mxu0 0.0
      %1292 = vmatpush2.msra.mxu0 0.0
      %1293 = vmatprep.subr.mxu0 0.0
      %1294 = vmatpush2.msra.mxu0 0.0
      %1295 = vmatprep.subr.mxu0 0.0
      %1296 = vmatpush2.msra.mxu0 0.0
      %1297 = vmatprep.subr.mxu0 0.0
      %1298 = vmatpush2.msra.mxu0 0.0
      %1299 = vmatprep.subr.mxu0 0.0
      %1300 = vmatpush2.msra.mxu0 0.0
      %1301 = vmatprep.subr.mxu0 0.0
      %1302 = vmatpush2.msra.mxu0 0.0
      %1303 = vmatprep.subr.mxu0 0.0
      %1304 = vmatpush2.msra.mxu0 0.0
      %1305 = vmatprep.subr.mxu0 0.0
      %1306 = vmatpush2.msra.mxu0 0.0
      %1307 = vmatprep.mubr.f32.mxu0 0.0
      %1308 = vmatmul.mubr.f32.gmra.mxu0 %v1241
      %v1309 = vpop.f32.mrf.mxu0
      %v1310 = vadd.f32 0.0, %v1309
      %v1311 = vpop.f32.mrf.mxu0
      %1312 = vdwg.mxu0
      %s1313 = scalar_lea.vmem %s4, 16
      %v1314 = vld [vmem:[%s1313] sm:$0xff]
      %v1315 = vld [vmem:[%s1313 + $0x8] sm:$0xff]
      %v1317 = vsel %vm730, %v1310, 0
      %1319 = vmatprep.subr.mxu0 0.0
      %1320 = vmatpush1.msra.mxu0 0.0
      %1321 = vmatprep.subr.mxu0 0.0
      %1322 = vmatpush1.msra.mxu0 0.0
      %1323 = vmatprep.subr.mxu0 0.0
      %1324 = vmatpush1.msra.mxu0 0.0
      %1325 = vmatprep.subr.mxu0 0.0
      %1326 = vmatpush1.msra.mxu0 0.0
      %1327 = vmatprep.subr.mxu0 0.0
      %1328 = vmatpush1.msra.mxu0 0.0
      %1329 = vmatprep.subr.mxu0 0.0
      %1330 = vmatpush1.msra.mxu0 0.0
      %1331 = vmatprep.subr.mxu0 0.0
      %1332 = vmatpush1.msra.mxu0 0.0
      %1333 = vmatprep.subr.mxu0 0.0
      %1334 = vmatpush1.msra.mxu0 0.0
      %1335 = vmatprep.subr.mxu0 0.0
      %1336 = vmatpush1.msra.mxu0 0.0
      %1337 = vmatprep.subr.mxu0 0.0
      %1338 = vmatpush1.msra.mxu0 0.0
      %1339 = vmatprep.subr.mxu0 0.0
      %1340 = vmatpush1.msra.mxu0 0.0
      %1341 = vmatprep.subr.mxu0 0.0
      %1342 = vmatpush1.msra.mxu0 0.0
      %1343 = vmatprep.subr.mxu0 0.0
      %1344 = vmatpush1.msra.mxu0 0.0
      %1345 = vmatprep.subr.mxu0 0.0
      %1346 = vmatpush1.msra.mxu0 0.0
      %1347 = vmatprep.subr.mxu0 0.0
      %1348 = vmatpush1.msra.mxu0 %v1315
      %1349 = vmatprep.subr.mxu0 0.0
      %1350 = vmatpush1.msra.mxu0 %v1314
      %1351 = vmatprep.subr.mxu0 0.0
      %1352 = vmatpush2.msra.mxu0 0.0
      %1353 = vmatprep.subr.mxu0 0.0
      %1354 = vmatpush2.msra.mxu0 0.0
      %1355 = vmatprep.subr.mxu0 0.0
      %1356 = vmatpush2.msra.mxu0 0.0
      %1357 = vmatprep.subr.mxu0 0.0
      %1358 = vmatpush2.msra.mxu0 0.0
      %1359 = vmatprep.subr.mxu0 0.0
      %1360 = vmatpush2.msra.mxu0 0.0
      %1361 = vmatprep.subr.mxu0 0.0
      %1362 = vmatpush2.msra.mxu0 0.0
      %1363 = vmatprep.subr.mxu0 0.0
      %1364 = vmatpush2.msra.mxu0 0.0
      %1365 = vmatprep.subr.mxu0 0.0
      %1366 = vmatpush2.msra.mxu0 0.0
      %1367 = vmatprep.subr.mxu0 0.0
      %1368 = vmatpush2.msra.mxu0 0.0
      %1369 = vmatprep.subr.mxu0 0.0
      %1370 = vmatpush2.msra.mxu0 0.0
      %1371 = vmatprep.subr.mxu0 0.0
      %1372 = vmatpush2.msra.mxu0 0.0
      %1373 = vmatprep.subr.mxu0 0.0
      %1374 = vmatpush2.msra.mxu0 0.0
      %1375 = vmatprep.subr.mxu0 0.0
      %1376 = vmatpush2.msra.mxu0 0.0
      %1377 = vmatprep.subr.mxu0 0.0
      %1378 = vmatpush2.msra.mxu0 0.0
      %1379 = vmatprep.subr.mxu0 0.0
      %1380 = vmatpush2.msra.mxu0 0.0
      %1381 = vmatprep.subr.mxu0 0.0
      %1382 = vmatpush2.msra.mxu0 0.0
      %1383 = vmatprep.mubr.f32.mxu0 0.0
      %1384 = vmatmul.mubr.f32.gmra.mxu0 %v1317
      %v1385 = vpop.f32.mrf.mxu0
      %v1386 = vadd.f32 0.0, %v1385
      %v1387 = vpop.f32.mrf.mxu0
      %1388 = vdwg.mxu0
      %v1390 = vsel %vm730, %v897, 0
      %1392 = vmatprep.subr.mxu0 0.0
      %1393 = vmatpush1.msra.mxu0 0.0
      %1394 = vmatprep.subr.mxu0 0.0
      %1395 = vmatpush1.msra.mxu0 0.0
      %1396 = vmatprep.subr.mxu0 0.0
      %1397 = vmatpush1.msra.mxu0 0.0
      %1398 = vmatprep.subr.mxu0 0.0
      %1399 = vmatpush1.msra.mxu0 0.0
      %1400 = vmatprep.subr.mxu0 0.0
      %1401 = vmatpush1.msra.mxu0 0.0
      %1402 = vmatprep.subr.mxu0 0.0
      %1403 = vmatpush1.msra.mxu0 0.0
      %1404 = vmatprep.subr.mxu0 0.0
      %1405 = vmatpush1.msra.mxu0 0.0
      %1406 = vmatprep.subr.mxu0 0.0
      %1407 = vmatpush1.msra.mxu0 0.0
      %1408 = vmatprep.subr.mxu0 0.0
      %1409 = vmatpush1.msra.mxu0 0.0
      %1410 = vmatprep.subr.mxu0 0.0
      %1411 = vmatpush1.msra.mxu0 0.0
      %1412 = vmatprep.subr.mxu0 0.0
      %1413 = vmatpush1.msra.mxu0 0.0
      %1414 = vmatprep.subr.mxu0 0.0
      %1415 = vmatpush1.msra.mxu0 0.0
      %1416 = vmatprep.subr.mxu0 0.0
      %1417 = vmatpush1.msra.mxu0 0.0
      %1418 = vmatprep.subr.mxu0 0.0
      %1419 = vmatpush1.msra.mxu0 0.0
      %1420 = vmatprep.subr.mxu0 0.0
      %1421 = vmatpush1.msra.mxu0 %v901
      %1422 = vmatprep.subr.mxu0 0.0
      %1423 = vmatpush1.msra.mxu0 %v900
      %1424 = vmatprep.subr.mxu0 0.0
      %1425 = vmatpush2.msra.mxu0 0.0
      %1426 = vmatprep.subr.mxu0 0.0
      %1427 = vmatpush2.msra.mxu0 0.0
      %1428 = vmatprep.subr.mxu0 0.0
      %1429 = vmatpush2.msra.mxu0 0.0
      %1430 = vmatprep.subr.mxu0 0.0
      %1431 = vmatpush2.msra.mxu0 0.0
      %1432 = vmatprep.subr.mxu0 0.0
      %1433 = vmatpush2.msra.mxu0 0.0
      %1434 = vmatprep.subr.mxu0 0.0
      %1435 = vmatpush2.msra.mxu0 0.0
      %1436 = vmatprep.subr.mxu0 0.0
      %1437 = vmatpush2.msra.mxu0 0.0
      %1438 = vmatprep.subr.mxu0 0.0
      %1439 = vmatpush2.msra.mxu0 0.0
      %1440 = vmatprep.subr.mxu0 0.0
      %1441 = vmatpush2.msra.mxu0 0.0
      %1442 = vmatprep.subr.mxu0 0.0
      %1443 = vmatpush2.msra.mxu0 0.0
      %1444 = vmatprep.subr.mxu0 0.0
      %1445 = vmatpush2.msra.mxu0 0.0
      %1446 = vmatprep.subr.mxu0 0.0
      %1447 = vmatpush2.msra.mxu0 0.0
      %1448 = vmatprep.subr.mxu0 0.0
      %1449 = vmatpush2.msra.mxu0 0.0
      %1450 = vmatprep.subr.mxu0 0.0
      %1451 = vmatpush2.msra.mxu0 0.0
      %1452 = vmatprep.subr.mxu0 0.0
      %1453 = vmatpush2.msra.mxu0 0.0
      %1454 = vmatprep.subr.mxu0 0.0
      %1455 = vmatpush2.msra.mxu0 0.0
      %1456 = vmatprep.mubr.f32.mxu0 0.0
      %1457 = vmatmul.mubr.f32.gmra.mxu0 %v1390
      %v1458 = vpop.f32.mrf.mxu0
      %v1459 = vadd.f32 %v1386, %v1458
      %v1460 = vpop.f32.mrf.mxu0
      %1461 = vdwg.mxu0
      %v1462 = vld [vmem:[%s5] sm:$0x1]
      %v1464 = vlaneseq
      %v1465 = vshrl.u32 %v1464, 7
      %v1466 = vsub.s32 0, %v1465
      %v1467 = vrot.slane %v1462, %v1466
      %v1469 = vadd.f32 %v1459, %v1467
      %v1470 = vadd.f32 %v477, %v1469
      %v1471 = vld [vmem:[%s6] sm:$0x1]
      %v1472 = vld [vmem:[%s7] sm:$0x1]
      %v1473 = vsel %vm490, %v1470, 0.0
      %1474 = vadd.xlane.f32.xlu0 %v1473
      %v1475 = vpop.xlane.xlu0 %1474
      %v1476 = vrcp.pop 32.0
      %v1477 = vmul.f32 %v1475, %v1476
      %v1478 = vsub.f32 %v1470, %v1477
      %v1479 = vmul.f32 %v1478, %v1478
      %v1480 = vsel %vm490, %v1479, 0.0
      %1481 = vadd.xlane.f32.xlu0 %v1480
      %v1482 = vpop.xlane.xlu0 %1481
      %v1483 = vmul.f32 %v1482, %v1476
      %v1484 = vadd.f32 %v1483, 1e-12
      %v1485 = vrsqrt.pop %v1484
      %v1486 = vmul.f32 %v1478, %v1485
      %v1488 = vlaneseq
      %v1489 = vshrl.u32 %v1488, 7
      %v1490 = vsub.s32 0, %v1489
      %v1491 = vrot.slane %v1471, %v1490
      %v1493 = vmul.f32 %v1486, %v1491
      %v1495 = vlaneseq
      %v1496 = vshrl.u32 %v1495, 7
      %v1497 = vsub.s32 0, %v1496
      %v1498 = vrot.slane %v1472, %v1497
      %v1500 = vadd.f32 %v1493, %v1498
      %v1501 = vld [vmem:[%s8] sm:$0xff]
      %v1502 = vld [vmem:[%s8 + $0x8] sm:$0xff]
      %v1503 = vld [vmem:[%s8 + $0x10] sm:$0xff]
      %v1504 = vld [vmem:[%s8 + $0x18] sm:$0xff]
      %v1505 = vld [vmem:[%s9] sm:$0x1]
      %v1507 = vlaneseq
      %v1508 = vshrl.u32 %v1507, 7
      %v1509 = vsub.s32 0, %v1508
      %v1510 = vrot.slane %v1505, %v1509
      %v1513 = vsel %vm490, %v1500, 0
      %1515 = vmatprep.subr.mxu0 0.0
      %1516 = vmatpush1.msra.mxu0 0.0
      %1517 = vmatprep.subr.mxu0 0.0
      %1518 = vmatpush1.msra.mxu0 0.0
      %1519 = vmatprep.subr.mxu0 0.0
      %1520 = vmatpush1.msra.mxu0 0.0
      %1521 = vmatprep.subr.mxu0 0.0
      %1522 = vmatpush1.msra.mxu0 0.0
      %1523 = vmatprep.subr.mxu0 0.0
      %1524 = vmatpush1.msra.mxu0 0.0
      %1525 = vmatprep.subr.mxu0 0.0
      %1526 = vmatpush1.msra.mxu0 0.0
      %1527 = vmatprep.subr.mxu0 0.0
      %1528 = vmatpush1.msra.mxu0 0.0
      %1529 = vmatprep.subr.mxu0 0.0
      %1530 = vmatpush1.msra.mxu0 0.0
      %1531 = vmatprep.subr.mxu0 0.0
      %1532 = vmatpush1.msra.mxu0 0.0
      %1533 = vmatprep.subr.mxu0 0.0
      %1534 = vmatpush1.msra.mxu0 0.0
      %1535 = vmatprep.subr.mxu0 0.0
      %1536 = vmatpush1.msra.mxu0 0.0
      %1537 = vmatprep.subr.mxu0 0.0
      %1538 = vmatpush1.msra.mxu0 0.0
      %1539 = vmatprep.subr.mxu0 0.0
      %1540 = vmatpush1.msra.mxu0 %v1504
      %1541 = vmatprep.subr.mxu0 0.0
      %1542 = vmatpush1.msra.mxu0 %v1503
      %1543 = vmatprep.subr.mxu0 0.0
      %1544 = vmatpush1.msra.mxu0 %v1502
      %1545 = vmatprep.subr.mxu0 0.0
      %1546 = vmatpush1.msra.mxu0 %v1501
      %1547 = vmatprep.subr.mxu0 0.0
      %1548 = vmatpush2.msra.mxu0 0.0
      %1549 = vmatprep.subr.mxu0 0.0
      %1550 = vmatpush2.msra.mxu0 0.0
      %1551 = vmatprep.subr.mxu0 0.0
      %1552 = vmatpush2.msra.mxu0 0.0
      %1553 = vmatprep.subr.mxu0 0.0
      %1554 = vmatpush2.msra.mxu0 0.0
      %1555 = vmatprep.subr.mxu0 0.0
      %1556 = vmatpush2.msra.mxu0 0.0
      %1557 = vmatprep.subr.mxu0 0.0
      %1558 = vmatpush2.msra.mxu0 0.0
      %1559 = vmatprep.subr.mxu0 0.0
      %1560 = vmatpush2.msra.mxu0 0.0
      %1561 = vmatprep.subr.mxu0 0.0
      %1562 = vmatpush2.msra.mxu0 0.0
      %1563 = vmatprep.subr.mxu0 0.0
      %1564 = vmatpush2.msra.mxu0 0.0
      %1565 = vmatprep.subr.mxu0 0.0
      %1566 = vmatpush2.msra.mxu0 0.0
      %1567 = vmatprep.subr.mxu0 0.0
      %1568 = vmatpush2.msra.mxu0 0.0
      %1569 = vmatprep.subr.mxu0 0.0
      %1570 = vmatpush2.msra.mxu0 0.0
      %1571 = vmatprep.subr.mxu0 0.0
      %1572 = vmatpush2.msra.mxu0 0.0
      %1573 = vmatprep.subr.mxu0 0.0
      %1574 = vmatpush2.msra.mxu0 0.0
      %1575 = vmatprep.subr.mxu0 0.0
      %1576 = vmatpush2.msra.mxu0 0.0
      %1577 = vmatprep.subr.mxu0 0.0
      %1578 = vmatpush2.msra.mxu0 0.0
      %1579 = vmatprep.mubr.f32.mxu0 0.0
      %1580 = vmatmul.mubr.f32.gmra.mxu0 %v1513
      %v1581 = vpop.f32.mrf.mxu0
      %v1582 = vadd.f32 %v1510, %v1581
      %v1583 = vpop.f32.mrf.mxu0
      %1584 = vdwg.mxu0
      %v1585 = vmul.f32 %v1582, 0.5
      %v1586 = vmul.f32 %v1582, 0.70710677
      %v1587 = verf.f32.pop %v1586
      %v1588 = vadd.f32 %v1587, 1.0
      %v1589 = vmul.f32 %v1585, %v1588
      %v1590 = vld [vmem:[%s10] sm:$0xff]
      %v1591 = vld [vmem:[%s10 + $0x8] sm:$0xff]
      %v1592 = vld [vmem:[%s10 + $0x10] sm:$0xff]
      %v1593 = vld [vmem:[%s10 + $0x18] sm:$0xff]
      %v1594 = vld [vmem:[%s10 + $0x20] sm:$0xff]
      %v1595 = vld [vmem:[%s10 + $0x28] sm:$0xff]
      %v1596 = vld [vmem:[%s10 + $0x30] sm:$0xff]
      %v1597 = vld [vmem:[%s10 + $0x38] sm:$0xff]
      %v1598 = vld [vmem:[%s11] sm:$0x1]
      %v1600 = vlaneseq
      %v1601 = vshrl.u32 %v1600, 7
      %v1602 = vsub.s32 0, %v1601
      %v1603 = vrot.slane %v1598, %v1602
      %vm1605 = vcmask 523264
      %v1607 = vsel %vm1605, %v1589, 0
      %1609 = vmatprep.subr.mxu0 0.0
      %1610 = vmatpush1.msra.mxu0 0.0
      %1611 = vmatprep.subr.mxu0 0.0
      %1612 = vmatpush1.msra.mxu0 0.0
      %1613 = vmatprep.subr.mxu0 0.0
      %1614 = vmatpush1.msra.mxu0 0.0
      %1615 = vmatprep.subr.mxu0 0.0
      %1616 = vmatpush1.msra.mxu0 0.0
      %1617 = vmatprep.subr.mxu0 0.0
      %1618 = vmatpush1.msra.mxu0 0.0
      %1619 = vmatprep.subr.mxu0 0.0
      %1620 = vmatpush1.msra.mxu0 0.0
      %1621 = vmatprep.subr.mxu0 0.0
      %1622 = vmatpush1.msra.mxu0 0.0
      %1623 = vmatprep.subr.mxu0 0.0
      %1624 = vmatpush1.msra.mxu0 0.0
      %1625 = vmatprep.subr.mxu0 0.0
      %1626 = vmatpush1.msra.mxu0 %v1597
      %1627 = vmatprep.subr.mxu0 0.0
      %1628 = vmatpush1.msra.mxu0 %v1596
      %1629 = vmatprep.subr.mxu0 0.0
      %1630 = vmatpush1.msra.mxu0 %v1595
      %1631 = vmatprep.subr.mxu0 0.0
      %1632 = vmatpush1.msra.mxu0 %v1594
      %1633 = vmatprep.subr.mxu0 0.0
      %1634 = vmatpush1.msra.mxu0 %v1593
      %1635 = vmatprep.subr.mxu0 0.0
      %1636 = vmatpush1.msra.mxu0 %v1592
      %1637 = vmatprep.subr.mxu0 0.0
      %1638 = vmatpush1.msra.mxu0 %v1591
      %1639 = vmatprep.subr.mxu0 0.0
      %1640 = vmatpush1.msra.mxu0 %v1590
      %1641 = vmatprep.subr.mxu0 0.0
      %1642 = vmatpush2.msra.mxu0 0.0
      %1643 = vmatprep.subr.mxu0 0.0
      %1644 = vmatpush2.msra.mxu0 0.0
      %1645 = vmatprep.subr.mxu0 0.0
      %1646 = vmatpush2.msra.mxu0 0.0
      %1647 = vmatprep.subr.mxu0 0.0
      %1648 = vmatpush2.msra.mxu0 0.0
      %1649 = vmatprep.subr.mxu0 0.0
      %1650 = vmatpush2.msra.mxu0 0.0
      %1651 = vmatprep.subr.mxu0 0.0
      %1652 = vmatpush2.msra.mxu0 0.0
      %1653 = vmatprep.subr.mxu0 0.0
      %1654 = vmatpush2.msra.mxu0 0.0
      %1655 = vmatprep.subr.mxu0 0.0
      %1656 = vmatpush2.msra.mxu0 0.0
      %1657 = vmatprep.subr.mxu0 0.0
      %1658 = vmatpush2.msra.mxu0 0.0
      %1659 = vmatprep.subr.mxu0 0.0
      %1660 = vmatpush2.msra.mxu0 0.0
      %1661 = vmatprep.subr.mxu0 0.0
      %1662 = vmatpush2.msra.mxu0 0.0
      %1663 = vmatprep.subr.mxu0 0.0
      %1664 = vmatpush2.msra.mxu0 0.0
      %1665 = vmatprep.subr.mxu0 0.0
      %1666 = vmatpush2.msra.mxu0 0.0
      %1667 = vmatprep.subr.mxu0 0.0
      %1668 = vmatpush2.msra.mxu0 0.0
      %1669 = vmatprep.subr.mxu0 0.0
      %1670 = vmatpush2.msra.mxu0 0.0
      %1671 = vmatprep.subr.mxu0 0.0
      %1672 = vmatpush2.msra.mxu0 0.0
      %1673 = vmatprep.mubr.f32.mxu0 0.0
      %1674 = vmatmul.mubr.f32.gmra.mxu0 %v1607
      %v1675 = vpop.f32.mrf.mxu0
      %v1676 = vadd.f32 %v1603, %v1675
      %v1677 = vpop.f32.mrf.mxu0
      %1678 = vdwg.mxu0
      %v1679 = vadd.f32 %v1500, %v1676
      %v1680 = vld [vmem:[%s12] sm:$0x1]
      %v1681 = vld [vmem:[%s13] sm:$0x1]
      %v1682 = vsel %vm490, %v1679, 0.0
      %1683 = vadd.xlane.f32.xlu0 %v1682
      %v1684 = vpop.xlane.xlu0 %1683
      %v1685 = vmul.f32 %v1684, %v1476
      %v1686 = vsub.f32 %v1679, %v1685
      %v1687 = vmul.f32 %v1686, %v1686
      %v1688 = vsel %vm490, %v1687, 0.0
      %1689 = vadd.xlane.f32.xlu0 %v1688
      %v1690 = vpop.xlane.xlu0 %1689
      %v1691 = vmul.f32 %v1690, %v1476
      %v1692 = vadd.f32 %v1691, 1e-12
      %v1693 = vrsqrt.pop %v1692
      %v1694 = vmul.f32 %v1686, %v1693
      %v1696 = vlaneseq
      %v1697 = vshrl.u32 %v1696, 7
      %v1698 = vsub.s32 0, %v1697
      %v1699 = vrot.slane %v1680, %v1698
      %v1701 = vmul.f32 %v1694, %v1699
      %v1703 = vlaneseq
      %v1704 = vshrl.u32 %v1703, 7
      %v1705 = vsub.s32 0, %v1704
      %v1706 = vrot.slane %v1681, %v1705
      %v1708 = vadd.f32 %v1701, %v1706
      %1709 = vst.msk [vmem:[%s476] sm:$0xff] %vm490, %v1708
      %p1710 = scmp.lt.s32.totalorder %s25, 1
      %s1711 = scalar_select %p1710, %s25, 1
      %s1712 = smul.addr %s1711, 8
      %s1713 = scalar_lea.vmem %s14, %s1712
      // Predicated region
      $region77: #{bert_with_weight_ce_forward.5} parent=75 // pred_check
        %p1714 = pneg %p347
      $region78: #{bert_with_weight_ce_forward.5} parent=75 // pred_check_branch
        %1716 = sbr.rel (%p1714) target = $region80
      $region79: #{bert_with_weight_ce_forward.5} parent=75 // pred_region
        _
      $region80: #{bert_with_weight_ce_forward.5} parent=75 // pred_fallthru
        _
    $region76: #{bert_with_weight_ce_forward.5} parent=5 // pred_fallthru
      _
    %p1717 = scmp.le.s32.totalorder 2, %s20
    // Predicated region
    $region81: #{bert_with_weight_ce_forward.5} parent=5 // pred_check
      %p1718 = pneg %p1717
    $region82: #{bert_with_weight_ce_forward.5} parent=5 // pred_check_branch
      %1720 = sbr.rel (%p1718) target = $region84
    $region83: #{bert_with_weight_ce_forward.5} parent=5 // pred_region
      %s1721 = ssub.s32 %s20, 2
      // Predicated region
      $region85: #{bert_with_weight_ce_forward.5} parent=83 // pred_check
        %p1722 = pneg %p353
      $region86: #{bert_with_weight_ce_forward.5} parent=83 // pred_check_branch
        %1724 = sbr.rel (%p1722) target = $region88
      $region87: #{bert_with_weight_ce_forward.5} parent=83 // pred_region
        %p1725 = scmp.lt.s32.totalorder %s26, 1
        %s1726 = scalar_select %p1725, %s26, 1
        %s1727 = smul.addr %s1726, 8
        %s1728 = scalar_lea.vmem %s14, %s1727
      $region88: #{bert_with_weight_ce_forward.5} parent=83 // pred_fallthru
        _
    $region84: #{bert_with_weight_ce_forward.5} parent=5 // pred_fallthru
      _
  $region6: #{bert_with_weight_ce_forward.5} parent=0 // loop_footer
    %s24 = sadd.s32 1, %s20
  $region7: #{bert_with_weight_ce_forward.5} parent=0 // loop_footer_branch
    %19 = sbr.rel target = $region3
  $region8: #{bert_with_weight_ce_forward.5} parent=0 // loop_exit
    _

</llo_original>
